<compile_context>
chip_gen: v7x
topology: tpu7x:2x2x1
jax: 0.10.0
libtpu: 0.0.40
codegen_flags: <defaults>
</compile_context>

<pallas_src>
import functools

import numpy as np
import jax
import jax.numpy as jnp
from jax.experimental import pallas as pl
from jax.experimental.pallas import tpu as pltpu


# ---------------------------------------------------------------------------
# Static geometry helpers (host-side numpy; become constant kernel operands).
# ---------------------------------------------------------------------------

def _round_up(x, m):
    return (x + m - 1) // m * m


def _conv_geom(h, w):
    """Padded-flat geometry for a 3x3 / pad-1 conv on an (h, w) image."""
    wp = w + 2
    l = h * wp - 2          # number of stride-1 output columns (top-left taps)
    return wp, l


def _out_hw(h, w, stride):
    return (h - 1) // stride + 1, (w - 1) // stride + 1


def _make_mask(h, w, stride):
    """(1, L) f32: 1.0 at the top-left column index of every stride-s output."""
    wp, l = _conv_geom(h, w)
    ho, wo = _out_hw(h, w, stride)
    m = np.zeros((1, l), np.float32)
    for oi in range(ho):
        for oj in range(wo):
            m[0, stride * oi * wp + stride * oj] = 1.0
    return m


def _sel_to_padded(h, w, stride):
    """(L, (Ho+2)*(Wo+2)) 0/1 scatter: conv columns -> next layer's zero-padded
    flat layout (stride compaction + re-zero-pad fused into one matmul)."""
    wp, l = _conv_geom(h, w)
    ho, wo = _out_hw(h, w, stride)
    wpo = wo + 2
    s = np.zeros((l, (ho + 2) * wpo), np.float32)
    for oi in range(ho):
        for oj in range(wo):
            s[stride * oi * wp + stride * oj, (oi + 1) * wpo + (oj + 1)] = 1.0
    return s


def _sel_to_compact(h, w, stride):
    """(L, round_up(Ho*Wo, 128)) 0/1 scatter: conv columns -> lane-dense
    compact output slab (zeros in the lane padding)."""
    wp, l = _conv_geom(h, w)
    ho, wo = _out_hw(h, w, stride)
    d = _round_up(ho * wo, 128)
    s = np.zeros((l, d), np.float32)
    for oi in range(ho):
        for oj in range(wo):
            s[stride * oi * wp + stride * oj, oi * wo + oj] = 1.0
    return s


def _sel_upsample_to_padded(h, w, ho, wo):
    """(L, (Ho+2)*(Wo+2)) 0/1 scatter: stride-1 conv at (h, w) -> nearest
    resize to (ho, wo) -> zero-padded flat layout.  This fuses the conv
    compaction with F.interpolate(mode='nearest') into one matmul."""
    wp, l = _conv_geom(h, w)
    wpo = wo + 2
    s = np.zeros((l, (ho + 2) * wpo), np.float32)
    for bi in range(ho):
        for bj in range(wo):
            si = (bi * h) // ho     # PyTorch nearest: floor(dst * in / out)
            sj = (bj * w) // wo
            s[si * wp + sj, (bi + 1) * wpo + (bj + 1)] = 1.0
    return s


# ---------------------------------------------------------------------------
# Execution plan for the fused kernel.
# ---------------------------------------------------------------------------

def _build_plan(in_channels, channels, block_strides, h0, w0):
    nlev = len(channels)
    assert len(block_strides) == nlev - 1

    res = [(h0, w0)]
    for s in block_strides:
        res.append(_out_hw(res[-1][0], res[-1][1], s))

    const_arrays = []
    const_index = {}

    def _const(key, builder):
        if key not in const_index:
            const_index[key] = len(const_arrays)
            const_arrays.append(builder())
        return const_index[key]

    def mask_idx(hh, ww, s):
        return _const(("mask", hh, ww, s), lambda: _make_mask(hh, ww, s))

    def pad_idx(hh, ww, s):
        return _const(("pad", hh, ww, s), lambda: _sel_to_padded(hh, ww, s))

    def out_idx(hh, ww):
        return _const(("out", hh, ww), lambda: _sel_to_compact(hh, ww, 1))

    def up_idx(hh, ww, ho, wo):
        return _const(("up", hh, ww, ho, wo),
                      lambda: _sel_upsample_to_padded(hh, ww, ho, wo))

    has_pre = in_channels != channels[0]
    cin0 = _round_up(in_channels, 8) if has_pre else in_channels

    steps = []

    def add_step(param, cin, cout, hh, ww, stride, src, scatters):
        wp, l = _conv_geom(hh, ww)
        ho, wo = _out_hw(hh, ww, stride)
        steps.append(dict(param=param, cin=cin, cout=cout,
                          wp=wp, l=l, stride=stride,
                          inv_count=1.0 / float(cout * ho * wo),
                          mask=mask_idx(hh, ww, stride),
                          src=src, scatters=scatters))

    # ---- downward pass ----
    if has_pre:
        add_step("pre", cin0, channels[0], h0, w0, 1, "x",
                 [("env", pad_idx(h0, w0, 1), ("down", 0))])
    for i, s in enumerate(block_strides):
        hh, ww = res[i]
        cin = channels[i] if (has_pre or i > 0) else cin0
        add_step(("first", i), cin, channels[i + 1], hh, ww, s, ("down", i),
                 [("env", pad_idx(hh, ww, s), ("down", i + 1))])

    # ---- upward pass ----
    hh, ww = res[nlev - 1]
    scat = [("out", out_idx(hh, ww), nlev - 1)]
    if nlev > 1:
        scat.append(("env", pad_idx(hh, ww, 1), "d"))
    add_step(("second", nlev - 1), channels[nlev - 1], channels[nlev - 1],
             hh, ww, 1, ("down", nlev - 1), scat)

    for lvl in range(nlev - 2, -1, -1):
        hh, ww = res[lvl + 1]
        ho, wo = res[lvl]
        add_step(("up", lvl), channels[lvl + 1], channels[lvl], hh, ww, 1, "d",
                 [("env", up_idx(hh, ww, ho, wo), "u")])
        scat = [("out", out_idx(ho, wo), lvl)]
        if lvl > 0:
            scat.append(("env", pad_idx(ho, wo, 1), "d"))
        add_step(("second", lvl), channels[lvl], channels[lvl], ho, wo, 1,
                 ("sum", ("down", lvl), "u"), scat)

    out_geoms = [(channels[lvl], res[lvl][0], res[lvl][1],
                  _round_up(res[lvl][0] * res[lvl][1], 128))
                 for lvl in range(nlev)]
    return steps, const_arrays, out_geoms, cin0, has_pre


def _lookup_param(params, key):
    if key == "pre":
        return params["pre"]
    name, idx = key
    return params[name][idx]


def _weight_mat(wgt, cin_used):
    """(3,3,Cin,Cout) f32 -> (Cout, 9*cin_used) bf16, tap-major rows."""
    cin = wgt.shape[2]
    if cin_used > cin:
        wgt = jnp.pad(wgt, ((0, 0), (0, 0), (0, cin_used - cin), (0, 0)))
    cout = wgt.shape[3]
    return jnp.transpose(wgt.reshape(9 * cin_used, cout)).astype(jnp.bfloat16)


def _full_spec(shape):
    nd = len(shape)
    return pl.BlockSpec(tuple(shape), lambda i, _nd=nd: (0,) * _nd)


# ---------------------------------------------------------------------------
# Fused forward builder.
# ---------------------------------------------------------------------------

def make_unet_forward(in_channels, channels, block_strides, h0, w0,
                      eps=1e-5, neg_slope=0.01):
    steps, const_arrays, out_geoms, cin0, has_pre = _build_plan(
        in_channels, channels, block_strides, h0, w0)
    const_jnp = tuple(jnp.asarray(c) for c in const_arrays)
    n_steps, n_const, nlev = len(steps), len(const_arrays), len(channels)
    hpwp0 = (h0 + 2) * (w0 + 2)

    # -------------------- the single fused kernel --------------------
    def kernel(*refs):
        x_ref = refs[0]
        wrefs = refs[1:1 + 2 * n_steps]
        crefs = refs[1 + 2 * n_steps:1 + 2 * n_steps + n_const]
        orefs = refs[1 + 2 * n_steps + n_const:]

        env = {}
        xin = x_ref[0].astype(jnp.float32)          # (cin0, HpWp) zero-padded
        if has_pre:
            env["x"] = xin
        else:
            env[("down", 0)] = xin

        def conv_gn_lrelu(act, w, g, m, wp, l, inv_count):
            # act: (Cin, HpWp) f32 zero-bordered padded-flat activation.
            taps = []
            for dy in range(3):
                for dx in range(3):
                    off = dy * wp + dx
                    taps.append(act[:, off:off + l])
            patches = jnp.concatenate(taps, axis=0).astype(jnp.bfloat16)
            acc = jnp.dot(w, patches, preferred_element_type=jnp.float32)
            acc = acc + g[:, 0:1]                   # conv bias
            # GroupNorm(num_groups=1): masked (valid-column) centered stats.
            mean = jnp.sum(acc * m, keepdims=True) * inv_count
            cent = (acc - mean) * m
            var = jnp.sum(cent * cent, keepdims=True) * inv_count
            y = (acc - mean) * jax.lax.rsqrt(var + eps)
            y = y * g[:, 1:2] + g[:, 2:3]           # per-channel affine
            return jnp.where(y >= 0, y, neg_slope * y)

        for si, st in enumerate(steps):
            w = wrefs[2 * si][...]
            g = wrefs[2 * si + 1][...]
            m = crefs[st["mask"]][...]
            src = st["src"]
            if isinstance(src, tuple) and src[0] == "sum":
                act = env[src[1]] + env[src[2]]     # skip connection add
            else:
                act = env[src]
            y = conv_gn_lrelu(act, w, g, m, st["wp"], st["l"], st["inv_count"])
            # Pad / stride-compact / resize / output-pack: one matmul each.
            for kind, cidx, dest in st["scatters"]:
                v = jnp.dot(y, crefs[cidx][...],
                            preferred_element_type=jnp.float32)
                if kind == "out":
                    orefs[dest][0] = v
                else:
                    env[dest] = v

    # -------------------- host-side wrappers --------------------
    def prepare(params):
        """One-time weight preprocessing into kernel-ready operands."""
        ops = []
        for st in steps:
            p = _lookup_param(params, st["param"])
            ops.append(_weight_mat(p["w"], st["cin"]))
            ops.append(jnp.stack([p["b"], p["gamma"], p["beta"]], axis=1))
        return tuple(ops) + const_jnp

    def forward(x, ops_tail):
        n = x.shape[0]
        xp = jnp.pad(x.astype(jnp.float32),
                     ((0, 0), (0, cin0 - in_channels), (1, 1), (1, 1)))
        xflat = xp.reshape(n, cin0, hpwp0).astype(jnp.bfloat16)

        in_specs = [pl.BlockSpec((1, cin0, hpwp0), lambda i: (i, 0, 0))]
        in_specs += [_full_spec(op.shape) for op in ops_tail]

        out_shape = tuple(jax.ShapeDtypeStruct((n, cout, dpad), jnp.float32)
                          for cout, _, _, dpad in out_geoms)
        out_specs = tuple(pl.BlockSpec((1, cout, dpad), lambda i: (i, 0, 0))
                          for cout, _, _, dpad in out_geoms)

        outs = pl.pallas_call(
            kernel,
            out_shape=out_shape,
            grid=(n,),
            in_specs=in_specs,
            out_specs=out_specs,
            compiler_params=pltpu.CompilerParams(
                dimension_semantics=("parallel",)),
        )(xflat, *ops_tail)

        return [o[:, :, :ho * wo].reshape(n, cout, ho, wo)
                for (cout, ho, wo, _), o in zip(out_geoms, outs)]

    return prepare, forward


# ---------------------------------------------------------------------------
# Pure-JAX reference (mirrors the PyTorch module).
# ---------------------------------------------------------------------------

def conv_layer_ref(x, p, stride=1, eps=1e-5, neg_slope=0.01):
    w, b, gamma, beta = p["w"], p["b"], p["gamma"], p["beta"]
    y = jax.lax.conv_general_dilated(
        x.astype(jnp.bfloat16), w.astype(jnp.bfloat16),
        window_strides=(stride, stride), padding=((1, 1), (1, 1)),
        dimension_numbers=("NCHW", "HWIO", "NCHW"),
        preferred_element_type=jnp.float32)
    y = y + b[None, :, None, None]
    mean = jnp.mean(y, axis=(1, 2, 3), keepdims=True)
    var = jnp.mean((y - mean) ** 2, axis=(1, 2, 3), keepdims=True)
    y = (y - mean) * jax.lax.rsqrt(var + eps)
    y = y * gamma[None, :, None, None] + beta[None, :, None, None]
    return jnp.where(y >= 0, y, neg_slope * y)


def _nearest_resize_nchw(x, hout, wout):
    _, _, hh, ww = x.shape
    hi = (jnp.arange(hout) * hh) // hout
    wi = (jnp.arange(wout) * ww) // wout
    return x[:, :, hi][:, :, :, wi]


def unet_forward_ref(x, params, block_strides):
    x = x.astype(jnp.float32)
    if params["pre"] is not None:
        x = conv_layer_ref(x, params["pre"], stride=1)
    first_blobs = [x]
    for p, s in zip(params["first"], block_strides):
        x = conv_layer_ref(x, p, stride=s)
        first_blobs.append(x)
    x = conv_layer_ref(first_blobs[-1], params["second"][-1], stride=1)
    second_blobs = [x]
    for lvl in range(len(first_blobs) - 2, -1, -1):
        up = conv_layer_ref(x, params["up"][lvl], stride=1)
        th, tw = first_blobs[lvl].shape[2], first_blobs[lvl].shape[3]
        up = _nearest_resize_nchw(up, th, tw)   # F.interpolate default 'nearest'
        x = conv_layer_ref(first_blobs[lvl] + up, params["second"][lvl], stride=1)
        second_blobs.insert(0, x)
    return second_blobs


# ---------------------------------------------------------------------------
# Parameter init.
# ---------------------------------------------------------------------------

def _init_conv_params(key, cin, cout):
    kw, kb, kg, kbe = jax.random.split(key, 4)
    return {
        "w": 0.1 * jax.random.normal(kw, (3, 3, cin, cout), jnp.float32),
        "b": 0.1 * jax.random.normal(kb, (cout,), jnp.float32),
        "gamma": 1.0 + 0.1 * jax.random.normal(kg, (cout,), jnp.float32),
        "beta": 0.1 * jax.random.normal(kbe, (cout,), jnp.float32),
    }


def init_unet_params(key, in_channels, channels):
    keys = iter(jax.random.split(key, 4 * len(channels)))
    params = {}
    params["pre"] = (_init_conv_params(next(keys), in_channels, channels[0])
                     if in_channels != channels[0] else None)
    params["first"] = [_init_conv_params(next(keys), c1, c2)
                       for c1, c2 in zip(channels[:-1], channels[1:])]
    params["second"] = [_init_conv_params(next(keys), c, c) for c in channels]
    params["up"] = [_init_conv_params(next(keys), c2, c1)
                    for c1, c2 in zip(channels[:-1], channels[1:])]
    return params


if __name__ == "__main__":
    in_channels = 4
    channels = (8, 16, 32)        # unet_spec.channels
    block_strides = (2, 2)        # from unet_spec.strides = (1, 2, 4)
    H = W = 16

    key = jax.random.PRNGKey(0)
    kp, kx = jax.random.split(key)
    params = init_unet_params(kp, in_channels, channels)
    x = jax.random.normal(kx, (2, in_channels, H, W), jnp.float32)   # NCHW

    prepare, forward = make_unet_forward(in_channels, channels,
                                         block_strides, H, W)
    prepped = prepare(params)                      # one-time weight packing
    fwd = jax.jit(forward)
    ref = jax.jit(functools.partial(unet_forward_ref,
                                    block_strides=block_strides))

    outs = jax.block_until_ready(fwd(x, prepped))
    refs_o = jax.block_until_ready(ref(x, params))

    expected = [(2, 8, 16, 16), (2, 16, 8, 8), (2, 32, 4, 4)]
    got = [tuple(o.shape) for o in outs]
    assert got == expected, f"unexpected output shapes: {got}"
    assert all(bool(jnp.all(jnp.isfinite(o))) for o in outs)
    max_diff = max(float(jnp.max(jnp.abs(o - r)))
                   for o, r in zip(outs, refs_o))
    assert max_diff < 5e-2, f"mismatch vs reference: {max_diff}"
    print("KERNEL_OK")
</pallas_src>

<mosaic_0001>
module attributes {stable_mosaic.version = 11 : i64} {
  func.func @kernel(%arg0: i32, %arg1: memref<1x8x324xbf16, #tpu.memory_space<vmem>>, %arg2: memref<8x72xbf16, #tpu.memory_space<vmem>>, %arg3: memref<8x3xf32, #tpu.memory_space<vmem>>, %arg4: memref<16x72xbf16, #tpu.memory_space<vmem>>, %arg5: memref<16x3xf32, #tpu.memory_space<vmem>>, %arg6: memref<32x144xbf16, #tpu.memory_space<vmem>>, %arg7: memref<32x3xf32, #tpu.memory_space<vmem>>, %arg8: memref<32x288xbf16, #tpu.memory_space<vmem>>, %arg9: memref<32x3xf32, #tpu.memory_space<vmem>>, %arg10: memref<16x288xbf16, #tpu.memory_space<vmem>>, %arg11: memref<16x3xf32, #tpu.memory_space<vmem>>, %arg12: memref<16x144xbf16, #tpu.memory_space<vmem>>, %arg13: memref<16x3xf32, #tpu.memory_space<vmem>>, %arg14: memref<8x144xbf16, #tpu.memory_space<vmem>>, %arg15: memref<8x3xf32, #tpu.memory_space<vmem>>, %arg16: memref<8x72xbf16, #tpu.memory_space<vmem>>, %arg17: memref<8x3xf32, #tpu.memory_space<vmem>>, %arg18: memref<286x324xf32, #tpu.memory_space<vmem>>, %arg19: memref<1x286xf32, #tpu.memory_space<vmem>>, %arg20: memref<286x100xf32, #tpu.memory_space<vmem>>, %arg21: memref<1x286xf32, #tpu.memory_space<vmem>>, %arg22: memref<78x36xf32, #tpu.memory_space<vmem>>, %arg23: memref<1x78xf32, #tpu.memory_space<vmem>>, %arg24: memref<22x128xf32, #tpu.memory_space<vmem>>, %arg25: memref<22x36xf32, #tpu.memory_space<vmem>>, %arg26: memref<1x22xf32, #tpu.memory_space<vmem>>, %arg27: memref<22x100xf32, #tpu.memory_space<vmem>>, %arg28: memref<78x128xf32, #tpu.memory_space<vmem>>, %arg29: memref<78x100xf32, #tpu.memory_space<vmem>>, %arg30: memref<1x78xf32, #tpu.memory_space<vmem>>, %arg31: memref<78x324xf32, #tpu.memory_space<vmem>>, %arg32: memref<286x256xf32, #tpu.memory_space<vmem>>, %arg33: memref<1x8x256xf32, #tpu.memory_space<vmem>>, %arg34: memref<1x16x128xf32, #tpu.memory_space<vmem>>, %arg35: memref<1x32x128xf32, #tpu.memory_space<vmem>>) attributes {dimension_semantics = [#tpu.dimension_semantics<parallel>], iteration_bounds = array<i64: 2>, scalar_prefetch = 0 : i64, scratch_operands = 0 : i64, tpu.core_type = #tpu.core_type<tc>, window_params = [{transform_indices = @transform_0, window_bounds = array<i64: 1, 8, 324>}, {pipeline_mode = #tpu.pipeline_mode<synchronous>, transform_indices = @transform_1, window_bounds = array<i64: 8, 72>}, {pipeline_mode = #tpu.pipeline_mode<synchronous>, transform_indices = @transform_2, window_bounds = array<i64: 8, 3>}, {pipeline_mode = #tpu.pipeline_mode<synchronous>, transform_indices = @transform_3, window_bounds = array<i64: 16, 72>}, {pipeline_mode = #tpu.pipeline_mode<synchronous>, transform_indices = @transform_4, window_bounds = array<i64: 16, 3>}, {pipeline_mode = #tpu.pipeline_mode<synchronous>, transform_indices = @transform_5, window_bounds = array<i64: 32, 144>}, {pipeline_mode = #tpu.pipeline_mode<synchronous>, transform_indices = @transform_6, window_bounds = array<i64: 32, 3>}, {pipeline_mode = #tpu.pipeline_mode<synchronous>, transform_indices = @transform_7, window_bounds = array<i64: 32, 288>}, {pipeline_mode = #tpu.pipeline_mode<synchronous>, transform_indices = @transform_8, window_bounds = array<i64: 32, 3>}, {pipeline_mode = #tpu.pipeline_mode<synchronous>, transform_indices = @transform_9, window_bounds = array<i64: 16, 288>}, {pipeline_mode = #tpu.pipeline_mode<synchronous>, transform_indices = @transform_10, window_bounds = array<i64: 16, 3>}, {pipeline_mode = #tpu.pipeline_mode<synchronous>, transform_indices = @transform_11, window_bounds = array<i64: 16, 144>}, {pipeline_mode = #tpu.pipeline_mode<synchronous>, transform_indices = @transform_12, window_bounds = array<i64: 16, 3>}, {pipeline_mode = #tpu.pipeline_mode<synchronous>, transform_indices = @transform_13, window_bounds = array<i64: 8, 144>}, {pipeline_mode = #tpu.pipeline_mode<synchronous>, transform_indices = @transform_14, window_bounds = array<i64: 8, 3>}, {pipeline_mode = #tpu.pipeline_mode<synchronous>, transform_indices = @transform_15, window_bounds = array<i64: 8, 72>}, {pipeline_mode = #tpu.pipeline_mode<synchronous>, transform_indices = @transform_16, window_bounds = array<i64: 8, 3>}, {pipeline_mode = #tpu.pipeline_mode<synchronous>, transform_indices = @transform_17, window_bounds = array<i64: 286, 324>}, {pipeline_mode = #tpu.pipeline_mode<synchronous>, transform_indices = @transform_18, window_bounds = array<i64: 1, 286>}, {pipeline_mode = #tpu.pipeline_mode<synchronous>, transform_indices = @transform_19, window_bounds = array<i64: 286, 100>}, {pipeline_mode = #tpu.pipeline_mode<synchronous>, transform_indices = @transform_20, window_bounds = array<i64: 1, 286>}, {pipeline_mode = #tpu.pipeline_mode<synchronous>, transform_indices = @transform_21, window_bounds = array<i64: 78, 36>}, {pipeline_mode = #tpu.pipeline_mode<synchronous>, transform_indices = @transform_22, window_bounds = array<i64: 1, 78>}, {pipeline_mode = #tpu.pipeline_mode<synchronous>, transform_indices = @transform_23, window_bounds = array<i64: 22, 128>}, {pipeline_mode = #tpu.pipeline_mode<synchronous>, transform_indices = @transform_24, window_bounds = array<i64: 22, 36>}, {pipeline_mode = #tpu.pipeline_mode<synchronous>, transform_indices = @transform_25, window_bounds = array<i64: 1, 22>}, {pipeline_mode = #tpu.pipeline_mode<synchronous>, transform_indices = @transform_26, window_bounds = array<i64: 22, 100>}, {pipeline_mode = #tpu.pipeline_mode<synchronous>, transform_indices = @transform_27, window_bounds = array<i64: 78, 128>}, {pipeline_mode = #tpu.pipeline_mode<synchronous>, transform_indices = @transform_28, window_bounds = array<i64: 78, 100>}, {pipeline_mode = #tpu.pipeline_mode<synchronous>, transform_indices = @transform_29, window_bounds = array<i64: 1, 78>}, {pipeline_mode = #tpu.pipeline_mode<synchronous>, transform_indices = @transform_30, window_bounds = array<i64: 78, 324>}, {pipeline_mode = #tpu.pipeline_mode<synchronous>, transform_indices = @transform_31, window_bounds = array<i64: 286, 256>}, {transform_indices = @transform_32, window_bounds = array<i64: 1, 8, 256>}, {transform_indices = @transform_33, window_bounds = array<i64: 1, 16, 128>}, {transform_indices = @transform_34, window_bounds = array<i64: 1, 32, 128>}]} {
    %c0 = arith.constant 0 : index
    %c0_0 = arith.constant 0 : index
    %c0_1 = arith.constant 0 : index
    %0 = vector.load %arg1[%c0, %c0_0, %c0_1] : memref<1x8x324xbf16, #tpu.memory_space<vmem>>, vector<1x8x324xbf16>
    %1 = vector.shape_cast %0 : vector<1x8x324xbf16> to vector<8x324xbf16>
    %2 = arith.extf %1 : vector<8x324xbf16> to vector<8x324xf32>
    %c0_2 = arith.constant 0 : index
    %c0_3 = arith.constant 0 : index
    %3 = vector.load %arg2[%c0_2, %c0_3] : memref<8x72xbf16, #tpu.memory_space<vmem>>, vector<8x72xbf16>
    %c0_4 = arith.constant 0 : index
    %c0_5 = arith.constant 0 : index
    %4 = vector.load %arg3[%c0_4, %c0_5] : memref<8x3xf32, #tpu.memory_space<vmem>>, vector<8x3xf32>
    %c0_6 = arith.constant 0 : index
    %c0_7 = arith.constant 0 : index
    %5 = vector.load %arg19[%c0_6, %c0_7] : memref<1x286xf32, #tpu.memory_space<vmem>>, vector<1x286xf32>
    %6 = vector.extract_strided_slice %2 {offsets = [0, 0], sizes = [8, 286], strides = [1, 1]} : vector<8x324xf32> to vector<8x286xf32>
    %7 = vector.extract_strided_slice %2 {offsets = [0, 1], sizes = [8, 286], strides = [1, 1]} : vector<8x324xf32> to vector<8x286xf32>
    %8 = vector.extract_strided_slice %2 {offsets = [0, 2], sizes = [8, 286], strides = [1, 1]} : vector<8x324xf32> to vector<8x286xf32>
    %9 = vector.extract_strided_slice %2 {offsets = [0, 18], sizes = [8, 286], strides = [1, 1]} : vector<8x324xf32> to vector<8x286xf32>
    %10 = vector.extract_strided_slice %2 {offsets = [0, 19], sizes = [8, 286], strides = [1, 1]} : vector<8x324xf32> to vector<8x286xf32>
    %11 = vector.extract_strided_slice %2 {offsets = [0, 20], sizes = [8, 286], strides = [1, 1]} : vector<8x324xf32> to vector<8x286xf32>
    %12 = vector.extract_strided_slice %2 {offsets = [0, 36], sizes = [8, 286], strides = [1, 1]} : vector<8x324xf32> to vector<8x286xf32>
    %13 = vector.extract_strided_slice %2 {offsets = [0, 37], sizes = [8, 286], strides = [1, 1]} : vector<8x324xf32> to vector<8x286xf32>
    %14 = vector.extract_strided_slice %2 {offsets = [0, 38], sizes = [8, 286], strides = [1, 1]} : vector<8x324xf32> to vector<8x286xf32>
    %15 = tpu.concatenate %6, %7, %8, %9, %10, %11, %12, %13, %14 in 0 : vector<8x286xf32>, vector<8x286xf32>, vector<8x286xf32>, vector<8x286xf32>, vector<8x286xf32>, vector<8x286xf32>, vector<8x286xf32>, vector<8x286xf32>, vector<8x286xf32> -> vector<72x286xf32>
    %16 = arith.truncf %15 : vector<72x286xf32> to vector<72x286xbf16>
    %cst = arith.constant dense<0.000000e+00> : vector<8x286xf32>
    %17 = tpu.matmul %3, %16, %cst {dimension_numbers = #tpu.dot_dimension_numbers<[1], [0], [0], [1], [0, 0, 1, 1], [], []>} : vector<8x72xbf16>, vector<72x286xbf16>, vector<8x286xf32> -> vector<8x286xf32>
    %18 = vector.extract_strided_slice %4 {offsets = [0, 0], sizes = [8, 1], strides = [1, 1]} : vector<8x3xf32> to vector<8x1xf32>
    %19 = vector.broadcast %18 : vector<8x1xf32> to vector<8x286xf32>
    %20 = arith.addf %17, %19 : vector<8x286xf32>
    %21 = vector.broadcast %5 : vector<1x286xf32> to vector<8x286xf32>
    %22 = arith.mulf %20, %21 : vector<8x286xf32>
    %23 = vector.shape_cast %22 : vector<8x286xf32> to vector<1x8x286xf32>
    %cst_8 = arith.constant dense<0.000000e+00> : vector<1xf32>
    %24 = vector.multi_reduction <add>, %23, %cst_8 [1, 2] : vector<1x8x286xf32> to vector<1xf32>
    %25 = vector.shape_cast %24 : vector<1xf32> to vector<1x1x1xf32>
    %26 = vector.extract %25[0, 0, 0] : f32 from vector<1x1x1xf32>
    %27 = vector.broadcast %26 : f32 to vector<1x1xf32>
    %cst_9 = arith.constant 4.8828125E-4 : f32
    %28 = vector.broadcast %cst_9 : f32 to vector<1x1xf32>
    %29 = arith.mulf %27, %28 : vector<1x1xf32>
    %30 = vector.broadcast %29 : vector<1x1xf32> to vector<8x286xf32>
    %31 = arith.subf %20, %30 : vector<8x286xf32>
    %32 = vector.broadcast %5 : vector<1x286xf32> to vector<8x286xf32>
    %33 = arith.mulf %31, %32 : vector<8x286xf32>
    %34 = arith.mulf %33, %33 : vector<8x286xf32>
    %35 = vector.shape_cast %34 : vector<8x286xf32> to vector<1x8x286xf32>
    %cst_10 = arith.constant dense<0.000000e+00> : vector<1xf32>
    %36 = vector.multi_reduction <add>, %35, %cst_10 [1, 2] : vector<1x8x286xf32> to vector<1xf32>
    %37 = vector.shape_cast %36 : vector<1xf32> to vector<1x1x1xf32>
    %38 = vector.extract %37[0, 0, 0] : f32 from vector<1x1x1xf32>
    %39 = vector.broadcast %38 : f32 to vector<1x1xf32>
    %cst_11 = arith.constant 4.8828125E-4 : f32
    %40 = vector.broadcast %cst_11 : f32 to vector<1x1xf32>
    %41 = arith.mulf %39, %40 : vector<1x1xf32>
    %42 = vector.broadcast %29 : vector<1x1xf32> to vector<8x286xf32>
    %43 = arith.subf %20, %42 : vector<8x286xf32>
    %cst_12 = arith.constant 9.99999974E-6 : f32
    %44 = vector.broadcast %cst_12 : f32 to vector<1x1xf32>
    %45 = arith.addf %41, %44 : vector<1x1xf32>
    %46 = math.rsqrt %45 : vector<1x1xf32>
    %47 = vector.broadcast %46 : vector<1x1xf32> to vector<8x286xf32>
    %48 = arith.mulf %43, %47 : vector<8x286xf32>
    %49 = vector.extract_strided_slice %4 {offsets = [0, 1], sizes = [8, 1], strides = [1, 1]} : vector<8x3xf32> to vector<8x1xf32>
    %50 = vector.broadcast %49 : vector<8x1xf32> to vector<8x286xf32>
    %51 = arith.mulf %48, %50 : vector<8x286xf32>
    %52 = vector.extract_strided_slice %4 {offsets = [0, 2], sizes = [8, 1], strides = [1, 1]} : vector<8x3xf32> to vector<8x1xf32>
    %53 = vector.broadcast %52 : vector<8x1xf32> to vector<8x286xf32>
    %54 = arith.addf %51, %53 : vector<8x286xf32>
    %cst_13 = arith.constant 0.000000e+00 : f32
    %55 = vector.broadcast %cst_13 : f32 to vector<8x286xf32>
    %56 = arith.cmpf oge, %54, %55 : vector<8x286xf32>
    %cst_14 = arith.constant 0.00999999977 : f32
    %57 = vector.broadcast %cst_14 : f32 to vector<8x286xf32>
    %58 = arith.mulf %57, %54 : vector<8x286xf32>
    %59 = arith.select %56, %54, %58 : vector<8x286xi1>, vector<8x286xf32>
    %c0_15 = arith.constant 0 : index
    %c0_16 = arith.constant 0 : index
    %60 = vector.load %arg18[%c0_15, %c0_16] : memref<286x324xf32, #tpu.memory_space<vmem>>, vector<286x324xf32>
    %cst_17 = arith.constant dense<0.000000e+00> : vector<8x324xf32>
    %61 = tpu.matmul %59, %60, %cst_17 {dimension_numbers = #tpu.dot_dimension_numbers<[1], [0], [0], [1], [0, 0, 1, 1], [], []>} : vector<8x286xf32>, vector<286x324xf32>, vector<8x324xf32> -> vector<8x324xf32>
    %c0_18 = arith.constant 0 : index
    %c0_19 = arith.constant 0 : index
    %62 = vector.load %arg4[%c0_18, %c0_19] : memref<16x72xbf16, #tpu.memory_space<vmem>>, vector<16x72xbf16>
    %c0_20 = arith.constant 0 : index
    %c0_21 = arith.constant 0 : index
    %63 = vector.load %arg5[%c0_20, %c0_21] : memref<16x3xf32, #tpu.memory_space<vmem>>, vector<16x3xf32>
    %c0_22 = arith.constant 0 : index
    %c0_23 = arith.constant 0 : index
    %64 = vector.load %arg21[%c0_22, %c0_23] : memref<1x286xf32, #tpu.memory_space<vmem>>, vector<1x286xf32>
    %65 = vector.extract_strided_slice %61 {offsets = [0, 0], sizes = [8, 286], strides = [1, 1]} : vector<8x324xf32> to vector<8x286xf32>
    %66 = vector.extract_strided_slice %61 {offsets = [0, 1], sizes = [8, 286], strides = [1, 1]} : vector<8x324xf32> to vector<8x286xf32>
    %67 = vector.extract_strided_slice %61 {offsets = [0, 2], sizes = [8, 286], strides = [1, 1]} : vector<8x324xf32> to vector<8x286xf32>
    %68 = vector.extract_strided_slice %61 {offsets = [0, 18], sizes = [8, 286], strides = [1, 1]} : vector<8x324xf32> to vector<8x286xf32>
    %69 = vector.extract_strided_slice %61 {offsets = [0, 19], sizes = [8, 286], strides = [1, 1]} : vector<8x324xf32> to vector<8x286xf32>
    %70 = vector.extract_strided_slice %61 {offsets = [0, 20], sizes = [8, 286], strides = [1, 1]} : vector<8x324xf32> to vector<8x286xf32>
    %71 = vector.extract_strided_slice %61 {offsets = [0, 36], sizes = [8, 286], strides = [1, 1]} : vector<8x324xf32> to vector<8x286xf32>
    %72 = vector.extract_strided_slice %61 {offsets = [0, 37], sizes = [8, 286], strides = [1, 1]} : vector<8x324xf32> to vector<8x286xf32>
    %73 = vector.extract_strided_slice %61 {offsets = [0, 38], sizes = [8, 286], strides = [1, 1]} : vector<8x324xf32> to vector<8x286xf32>
    %74 = tpu.concatenate %65, %66, %67, %68, %69, %70, %71, %72, %73 in 0 : vector<8x286xf32>, vector<8x286xf32>, vector<8x286xf32>, vector<8x286xf32>, vector<8x286xf32>, vector<8x286xf32>, vector<8x286xf32>, vector<8x286xf32>, vector<8x286xf32> -> vector<72x286xf32>
    %75 = arith.truncf %74 : vector<72x286xf32> to vector<72x286xbf16>
    %cst_24 = arith.constant dense<0.000000e+00> : vector<16x286xf32>
    %76 = tpu.matmul %62, %75, %cst_24 {dimension_numbers = #tpu.dot_dimension_numbers<[1], [0], [0], [1], [0, 0, 1, 1], [], []>} : vector<16x72xbf16>, vector<72x286xbf16>, vector<16x286xf32> -> vector<16x286xf32>
    %77 = vector.extract_strided_slice %63 {offsets = [0, 0], sizes = [16, 1], strides = [1, 1]} : vector<16x3xf32> to vector<16x1xf32>
    %78 = vector.broadcast %77 : vector<16x1xf32> to vector<16x286xf32>
    %79 = arith.addf %76, %78 : vector<16x286xf32>
    %80 = vector.broadcast %64 : vector<1x286xf32> to vector<16x286xf32>
    %81 = arith.mulf %79, %80 : vector<16x286xf32>
    %82 = vector.shape_cast %81 : vector<16x286xf32> to vector<1x16x286xf32>
    %cst_25 = arith.constant dense<0.000000e+00> : vector<1xf32>
    %83 = vector.multi_reduction <add>, %82, %cst_25 [1, 2] : vector<1x16x286xf32> to vector<1xf32>
    %84 = vector.shape_cast %83 : vector<1xf32> to vector<1x1x1xf32>
    %85 = vector.extract %84[0, 0, 0] : f32 from vector<1x1x1xf32>
    %86 = vector.broadcast %85 : f32 to vector<1x1xf32>
    %cst_26 = arith.constant 9.765625E-4 : f32
    %87 = vector.broadcast %cst_26 : f32 to vector<1x1xf32>
    %88 = arith.mulf %86, %87 : vector<1x1xf32>
    %89 = vector.broadcast %88 : vector<1x1xf32> to vector<16x286xf32>
    %90 = arith.subf %79, %89 : vector<16x286xf32>
    %91 = vector.broadcast %64 : vector<1x286xf32> to vector<16x286xf32>
    %92 = arith.mulf %90, %91 : vector<16x286xf32>
    %93 = arith.mulf %92, %92 : vector<16x286xf32>
    %94 = vector.shape_cast %93 : vector<16x286xf32> to vector<1x16x286xf32>
    %cst_27 = arith.constant dense<0.000000e+00> : vector<1xf32>
    %95 = vector.multi_reduction <add>, %94, %cst_27 [1, 2] : vector<1x16x286xf32> to vector<1xf32>
    %96 = vector.shape_cast %95 : vector<1xf32> to vector<1x1x1xf32>
    %97 = vector.extract %96[0, 0, 0] : f32 from vector<1x1x1xf32>
    %98 = vector.broadcast %97 : f32 to vector<1x1xf32>
    %cst_28 = arith.constant 9.765625E-4 : f32
    %99 = vector.broadcast %cst_28 : f32 to vector<1x1xf32>
    %100 = arith.mulf %98, %99 : vector<1x1xf32>
    %101 = vector.broadcast %88 : vector<1x1xf32> to vector<16x286xf32>
    %102 = arith.subf %79, %101 : vector<16x286xf32>
    %cst_29 = arith.constant 9.99999974E-6 : f32
    %103 = vector.broadcast %cst_29 : f32 to vector<1x1xf32>
    %104 = arith.addf %100, %103 : vector<1x1xf32>
    %105 = math.rsqrt %104 : vector<1x1xf32>
    %106 = vector.broadcast %105 : vector<1x1xf32> to vector<16x286xf32>
    %107 = arith.mulf %102, %106 : vector<16x286xf32>
    %108 = vector.extract_strided_slice %63 {offsets = [0, 1], sizes = [16, 1], strides = [1, 1]} : vector<16x3xf32> to vector<16x1xf32>
    %109 = vector.broadcast %108 : vector<16x1xf32> to vector<16x286xf32>
    %110 = arith.mulf %107, %109 : vector<16x286xf32>
    %111 = vector.extract_strided_slice %63 {offsets = [0, 2], sizes = [16, 1], strides = [1, 1]} : vector<16x3xf32> to vector<16x1xf32>
    %112 = vector.broadcast %111 : vector<16x1xf32> to vector<16x286xf32>
    %113 = arith.addf %110, %112 : vector<16x286xf32>
    %cst_30 = arith.constant 0.000000e+00 : f32
    %114 = vector.broadcast %cst_30 : f32 to vector<16x286xf32>
    %115 = arith.cmpf oge, %113, %114 : vector<16x286xf32>
    %cst_31 = arith.constant 0.00999999977 : f32
    %116 = vector.broadcast %cst_31 : f32 to vector<16x286xf32>
    %117 = arith.mulf %116, %113 : vector<16x286xf32>
    %118 = arith.select %115, %113, %117 : vector<16x286xi1>, vector<16x286xf32>
    %c0_32 = arith.constant 0 : index
    %c0_33 = arith.constant 0 : index
    %119 = vector.load %arg20[%c0_32, %c0_33] : memref<286x100xf32, #tpu.memory_space<vmem>>, vector<286x100xf32>
    %cst_34 = arith.constant dense<0.000000e+00> : vector<16x100xf32>
    %120 = tpu.matmul %118, %119, %cst_34 {dimension_numbers = #tpu.dot_dimension_numbers<[1], [0], [0], [1], [0, 0, 1, 1], [], []>} : vector<16x286xf32>, vector<286x100xf32>, vector<16x100xf32> -> vector<16x100xf32>
    %c0_35 = arith.constant 0 : index
    %c0_36 = arith.constant 0 : index
    %121 = vector.load %arg6[%c0_35, %c0_36] : memref<32x144xbf16, #tpu.memory_space<vmem>>, vector<32x144xbf16>
    %c0_37 = arith.constant 0 : index
    %c0_38 = arith.constant 0 : index
    %122 = vector.load %arg7[%c0_37, %c0_38] : memref<32x3xf32, #tpu.memory_space<vmem>>, vector<32x3xf32>
    %c0_39 = arith.constant 0 : index
    %c0_40 = arith.constant 0 : index
    %123 = vector.load %arg23[%c0_39, %c0_40] : memref<1x78xf32, #tpu.memory_space<vmem>>, vector<1x78xf32>
    %124 = vector.extract_strided_slice %120 {offsets = [0, 0], sizes = [16, 78], strides = [1, 1]} : vector<16x100xf32> to vector<16x78xf32>
    %125 = vector.extract_strided_slice %120 {offsets = [0, 1], sizes = [16, 78], strides = [1, 1]} : vector<16x100xf32> to vector<16x78xf32>
    %126 = vector.extract_strided_slice %120 {offsets = [0, 2], sizes = [16, 78], strides = [1, 1]} : vector<16x100xf32> to vector<16x78xf32>
    %127 = vector.extract_strided_slice %120 {offsets = [0, 10], sizes = [16, 78], strides = [1, 1]} : vector<16x100xf32> to vector<16x78xf32>
    %128 = vector.extract_strided_slice %120 {offsets = [0, 11], sizes = [16, 78], strides = [1, 1]} : vector<16x100xf32> to vector<16x78xf32>
    %129 = vector.extract_strided_slice %120 {offsets = [0, 12], sizes = [16, 78], strides = [1, 1]} : vector<16x100xf32> to vector<16x78xf32>
    %130 = vector.extract_strided_slice %120 {offsets = [0, 20], sizes = [16, 78], strides = [1, 1]} : vector<16x100xf32> to vector<16x78xf32>
    %131 = vector.extract_strided_slice %120 {offsets = [0, 21], sizes = [16, 78], strides = [1, 1]} : vector<16x100xf32> to vector<16x78xf32>
    %132 = vector.extract_strided_slice %120 {offsets = [0, 22], sizes = [16, 78], strides = [1, 1]} : vector<16x100xf32> to vector<16x78xf32>
    %133 = tpu.concatenate %124, %125, %126, %127, %128, %129, %130, %131, %132 in 0 : vector<16x78xf32>, vector<16x78xf32>, vector<16x78xf32>, vector<16x78xf32>, vector<16x78xf32>, vector<16x78xf32>, vector<16x78xf32>, vector<16x78xf32>, vector<16x78xf32> -> vector<144x78xf32>
    %134 = arith.truncf %133 : vector<144x78xf32> to vector<144x78xbf16>
    %cst_41 = arith.constant dense<0.000000e+00> : vector<32x78xf32>
    %135 = tpu.matmul %121, %134, %cst_41 {dimension_numbers = #tpu.dot_dimension_numbers<[1], [0], [0], [1], [0, 0, 1, 1], [], []>} : vector<32x144xbf16>, vector<144x78xbf16>, vector<32x78xf32> -> vector<32x78xf32>
    %136 = vector.extract_strided_slice %122 {offsets = [0, 0], sizes = [32, 1], strides = [1, 1]} : vector<32x3xf32> to vector<32x1xf32>
    %137 = vector.broadcast %136 : vector<32x1xf32> to vector<32x78xf32>
    %138 = arith.addf %135, %137 : vector<32x78xf32>
    %139 = vector.broadcast %123 : vector<1x78xf32> to vector<32x78xf32>
    %140 = arith.mulf %138, %139 : vector<32x78xf32>
    %141 = vector.shape_cast %140 : vector<32x78xf32> to vector<1x32x78xf32>
    %cst_42 = arith.constant dense<0.000000e+00> : vector<1xf32>
    %142 = vector.multi_reduction <add>, %141, %cst_42 [1, 2] : vector<1x32x78xf32> to vector<1xf32>
    %143 = vector.shape_cast %142 : vector<1xf32> to vector<1x1x1xf32>
    %144 = vector.extract %143[0, 0, 0] : f32 from vector<1x1x1xf32>
    %145 = vector.broadcast %144 : f32 to vector<1x1xf32>
    %cst_43 = arith.constant 0.001953125 : f32
    %146 = vector.broadcast %cst_43 : f32 to vector<1x1xf32>
    %147 = arith.mulf %145, %146 : vector<1x1xf32>
    %148 = vector.broadcast %147 : vector<1x1xf32> to vector<32x78xf32>
    %149 = arith.subf %138, %148 : vector<32x78xf32>
    %150 = vector.broadcast %123 : vector<1x78xf32> to vector<32x78xf32>
    %151 = arith.mulf %149, %150 : vector<32x78xf32>
    %152 = arith.mulf %151, %151 : vector<32x78xf32>
    %153 = vector.shape_cast %152 : vector<32x78xf32> to vector<1x32x78xf32>
    %cst_44 = arith.constant dense<0.000000e+00> : vector<1xf32>
    %154 = vector.multi_reduction <add>, %153, %cst_44 [1, 2] : vector<1x32x78xf32> to vector<1xf32>
    %155 = vector.shape_cast %154 : vector<1xf32> to vector<1x1x1xf32>
    %156 = vector.extract %155[0, 0, 0] : f32 from vector<1x1x1xf32>
    %157 = vector.broadcast %156 : f32 to vector<1x1xf32>
    %cst_45 = arith.constant 0.001953125 : f32
    %158 = vector.broadcast %cst_45 : f32 to vector<1x1xf32>
    %159 = arith.mulf %157, %158 : vector<1x1xf32>
    %160 = vector.broadcast %147 : vector<1x1xf32> to vector<32x78xf32>
    %161 = arith.subf %138, %160 : vector<32x78xf32>
    %cst_46 = arith.constant 9.99999974E-6 : f32
    %162 = vector.broadcast %cst_46 : f32 to vector<1x1xf32>
    %163 = arith.addf %159, %162 : vector<1x1xf32>
    %164 = math.rsqrt %163 : vector<1x1xf32>
    %165 = vector.broadcast %164 : vector<1x1xf32> to vector<32x78xf32>
    %166 = arith.mulf %161, %165 : vector<32x78xf32>
    %167 = vector.extract_strided_slice %122 {offsets = [0, 1], sizes = [32, 1], strides = [1, 1]} : vector<32x3xf32> to vector<32x1xf32>
    %168 = vector.broadcast %167 : vector<32x1xf32> to vector<32x78xf32>
    %169 = arith.mulf %166, %168 : vector<32x78xf32>
    %170 = vector.extract_strided_slice %122 {offsets = [0, 2], sizes = [32, 1], strides = [1, 1]} : vector<32x3xf32> to vector<32x1xf32>
    %171 = vector.broadcast %170 : vector<32x1xf32> to vector<32x78xf32>
    %172 = arith.addf %169, %171 : vector<32x78xf32>
    %cst_47 = arith.constant 0.000000e+00 : f32
    %173 = vector.broadcast %cst_47 : f32 to vector<32x78xf32>
    %174 = arith.cmpf oge, %172, %173 : vector<32x78xf32>
    %cst_48 = arith.constant 0.00999999977 : f32
    %175 = vector.broadcast %cst_48 : f32 to vector<32x78xf32>
    %176 = arith.mulf %175, %172 : vector<32x78xf32>
    %177 = arith.select %174, %172, %176 : vector<32x78xi1>, vector<32x78xf32>
    %c0_49 = arith.constant 0 : index
    %c0_50 = arith.constant 0 : index
    %178 = vector.load %arg22[%c0_49, %c0_50] : memref<78x36xf32, #tpu.memory_space<vmem>>, vector<78x36xf32>
    %cst_51 = arith.constant dense<0.000000e+00> : vector<32x36xf32>
    %179 = tpu.matmul %177, %178, %cst_51 {dimension_numbers = #tpu.dot_dimension_numbers<[1], [0], [0], [1], [0, 0, 1, 1], [], []>} : vector<32x78xf32>, vector<78x36xf32>, vector<32x36xf32> -> vector<32x36xf32>
    %c0_52 = arith.constant 0 : index
    %c0_53 = arith.constant 0 : index
    %180 = vector.load %arg8[%c0_52, %c0_53] : memref<32x288xbf16, #tpu.memory_space<vmem>>, vector<32x288xbf16>
    %c0_54 = arith.constant 0 : index
    %c0_55 = arith.constant 0 : index
    %181 = vector.load %arg9[%c0_54, %c0_55] : memref<32x3xf32, #tpu.memory_space<vmem>>, vector<32x3xf32>
    %c0_56 = arith.constant 0 : index
    %c0_57 = arith.constant 0 : index
    %182 = vector.load %arg26[%c0_56, %c0_57] : memref<1x22xf32, #tpu.memory_space<vmem>>, vector<1x22xf32>
    %183 = vector.extract_strided_slice %179 {offsets = [0, 0], sizes = [32, 22], strides = [1, 1]} : vector<32x36xf32> to vector<32x22xf32>
    %184 = vector.extract_strided_slice %179 {offsets = [0, 1], sizes = [32, 22], strides = [1, 1]} : vector<32x36xf32> to vector<32x22xf32>
    %185 = vector.extract_strided_slice %179 {offsets = [0, 2], sizes = [32, 22], strides = [1, 1]} : vector<32x36xf32> to vector<32x22xf32>
    %186 = vector.extract_strided_slice %179 {offsets = [0, 6], sizes = [32, 22], strides = [1, 1]} : vector<32x36xf32> to vector<32x22xf32>
    %187 = vector.extract_strided_slice %179 {offsets = [0, 7], sizes = [32, 22], strides = [1, 1]} : vector<32x36xf32> to vector<32x22xf32>
    %188 = vector.extract_strided_slice %179 {offsets = [0, 8], sizes = [32, 22], strides = [1, 1]} : vector<32x36xf32> to vector<32x22xf32>
    %189 = vector.extract_strided_slice %179 {offsets = [0, 12], sizes = [32, 22], strides = [1, 1]} : vector<32x36xf32> to vector<32x22xf32>
    %190 = vector.extract_strided_slice %179 {offsets = [0, 13], sizes = [32, 22], strides = [1, 1]} : vector<32x36xf32> to vector<32x22xf32>
    %191 = vector.extract_strided_slice %179 {offsets = [0, 14], sizes = [32, 22], strides = [1, 1]} : vector<32x36xf32> to vector<32x22xf32>
    %192 = tpu.concatenate %183, %184, %185, %186, %187, %188, %189, %190, %191 in 0 : vector<32x22xf32>, vector<32x22xf32>, vector<32x22xf32>, vector<32x22xf32>, vector<32x22xf32>, vector<32x22xf32>, vector<32x22xf32>, vector<32x22xf32>, vector<32x22xf32> -> vector<288x22xf32>
    %193 = arith.truncf %192 : vector<288x22xf32> to vector<288x22xbf16>
    %cst_58 = arith.constant dense<0.000000e+00> : vector<32x22xf32>
    %194 = tpu.matmul %180, %193, %cst_58 {dimension_numbers = #tpu.dot_dimension_numbers<[1], [0], [0], [1], [0, 0, 1, 1], [], []>} : vector<32x288xbf16>, vector<288x22xbf16>, vector<32x22xf32> -> vector<32x22xf32>
    %195 = vector.extract_strided_slice %181 {offsets = [0, 0], sizes = [32, 1], strides = [1, 1]} : vector<32x3xf32> to vector<32x1xf32>
    %196 = vector.broadcast %195 : vector<32x1xf32> to vector<32x22xf32>
    %197 = arith.addf %194, %196 : vector<32x22xf32>
    %198 = vector.broadcast %182 : vector<1x22xf32> to vector<32x22xf32>
    %199 = arith.mulf %197, %198 : vector<32x22xf32>
    %200 = vector.shape_cast %199 : vector<32x22xf32> to vector<1x32x22xf32>
    %cst_59 = arith.constant dense<0.000000e+00> : vector<1xf32>
    %201 = vector.multi_reduction <add>, %200, %cst_59 [1, 2] : vector<1x32x22xf32> to vector<1xf32>
    %202 = vector.shape_cast %201 : vector<1xf32> to vector<1x1x1xf32>
    %203 = vector.extract %202[0, 0, 0] : f32 from vector<1x1x1xf32>
    %204 = vector.broadcast %203 : f32 to vector<1x1xf32>
    %cst_60 = arith.constant 0.001953125 : f32
    %205 = vector.broadcast %cst_60 : f32 to vector<1x1xf32>
    %206 = arith.mulf %204, %205 : vector<1x1xf32>
    %207 = vector.broadcast %206 : vector<1x1xf32> to vector<32x22xf32>
    %208 = arith.subf %197, %207 : vector<32x22xf32>
    %209 = vector.broadcast %182 : vector<1x22xf32> to vector<32x22xf32>
    %210 = arith.mulf %208, %209 : vector<32x22xf32>
    %211 = arith.mulf %210, %210 : vector<32x22xf32>
    %212 = vector.shape_cast %211 : vector<32x22xf32> to vector<1x32x22xf32>
    %cst_61 = arith.constant dense<0.000000e+00> : vector<1xf32>
    %213 = vector.multi_reduction <add>, %212, %cst_61 [1, 2] : vector<1x32x22xf32> to vector<1xf32>
    %214 = vector.shape_cast %213 : vector<1xf32> to vector<1x1x1xf32>
    %215 = vector.extract %214[0, 0, 0] : f32 from vector<1x1x1xf32>
    %216 = vector.broadcast %215 : f32 to vector<1x1xf32>
    %cst_62 = arith.constant 0.001953125 : f32
    %217 = vector.broadcast %cst_62 : f32 to vector<1x1xf32>
    %218 = arith.mulf %216, %217 : vector<1x1xf32>
    %219 = vector.broadcast %206 : vector<1x1xf32> to vector<32x22xf32>
    %220 = arith.subf %197, %219 : vector<32x22xf32>
    %cst_63 = arith.constant 9.99999974E-6 : f32
    %221 = vector.broadcast %cst_63 : f32 to vector<1x1xf32>
    %222 = arith.addf %218, %221 : vector<1x1xf32>
    %223 = math.rsqrt %222 : vector<1x1xf32>
    %224 = vector.broadcast %223 : vector<1x1xf32> to vector<32x22xf32>
    %225 = arith.mulf %220, %224 : vector<32x22xf32>
    %226 = vector.extract_strided_slice %181 {offsets = [0, 1], sizes = [32, 1], strides = [1, 1]} : vector<32x3xf32> to vector<32x1xf32>
    %227 = vector.broadcast %226 : vector<32x1xf32> to vector<32x22xf32>
    %228 = arith.mulf %225, %227 : vector<32x22xf32>
    %229 = vector.extract_strided_slice %181 {offsets = [0, 2], sizes = [32, 1], strides = [1, 1]} : vector<32x3xf32> to vector<32x1xf32>
    %230 = vector.broadcast %229 : vector<32x1xf32> to vector<32x22xf32>
    %231 = arith.addf %228, %230 : vector<32x22xf32>
    %cst_64 = arith.constant 0.000000e+00 : f32
    %232 = vector.broadcast %cst_64 : f32 to vector<32x22xf32>
    %233 = arith.cmpf oge, %231, %232 : vector<32x22xf32>
    %cst_65 = arith.constant 0.00999999977 : f32
    %234 = vector.broadcast %cst_65 : f32 to vector<32x22xf32>
    %235 = arith.mulf %234, %231 : vector<32x22xf32>
    %236 = arith.select %233, %231, %235 : vector<32x22xi1>, vector<32x22xf32>
    %c0_66 = arith.constant 0 : index
    %c0_67 = arith.constant 0 : index
    %237 = vector.load %arg24[%c0_66, %c0_67] : memref<22x128xf32, #tpu.memory_space<vmem>>, vector<22x128xf32>
    %cst_68 = arith.constant dense<0.000000e+00> : vector<32x128xf32>
    %238 = tpu.matmul %236, %237, %cst_68 {dimension_numbers = #tpu.dot_dimension_numbers<[1], [0], [0], [1], [0, 0, 1, 1], [], []>} : vector<32x22xf32>, vector<22x128xf32>, vector<32x128xf32> -> vector<32x128xf32>
    %c0_69 = arith.constant 0 : index
    %c0_70 = arith.constant 0 : index
    %c0_71 = arith.constant 0 : index
    %239 = vector.load %arg35[%c0_69, %c0_70, %c0_71] : memref<1x32x128xf32, #tpu.memory_space<vmem>>, vector<1x32x128xf32>
    %240 = vector.shape_cast %239 : vector<1x32x128xf32> to vector<32x128xf32>
    %241 = vector.shape_cast %238 : vector<32x128xf32> to vector<1x32x128xf32>
    tpu.vector_store %arg35[%c0_69, %c0_70, %c0_71], %241 {strides = array<i32>} : memref<1x32x128xf32, #tpu.memory_space<vmem>>, vector<1x32x128xf32>,
    %c0_72 = arith.constant 0 : index
    %c0_73 = arith.constant 0 : index
    %242 = vector.load %arg25[%c0_72, %c0_73] : memref<22x36xf32, #tpu.memory_space<vmem>>, vector<22x36xf32>
    %cst_74 = arith.constant dense<0.000000e+00> : vector<32x36xf32>
    %243 = tpu.matmul %236, %242, %cst_74 {dimension_numbers = #tpu.dot_dimension_numbers<[1], [0], [0], [1], [0, 0, 1, 1], [], []>} : vector<32x22xf32>, vector<22x36xf32>, vector<32x36xf32> -> vector<32x36xf32>
    %c0_75 = arith.constant 0 : index
    %c0_76 = arith.constant 0 : index
    %244 = vector.load %arg10[%c0_75, %c0_76] : memref<16x288xbf16, #tpu.memory_space<vmem>>, vector<16x288xbf16>
    %c0_77 = arith.constant 0 : index
    %c0_78 = arith.constant 0 : index
    %245 = vector.load %arg11[%c0_77, %c0_78] : memref<16x3xf32, #tpu.memory_space<vmem>>, vector<16x3xf32>
    %c0_79 = arith.constant 0 : index
    %c0_80 = arith.constant 0 : index
    %246 = vector.load %arg26[%c0_79, %c0_80] : memref<1x22xf32, #tpu.memory_space<vmem>>, vector<1x22xf32>
    %247 = vector.extract_strided_slice %243 {offsets = [0, 0], sizes = [32, 22], strides = [1, 1]} : vector<32x36xf32> to vector<32x22xf32>
    %248 = vector.extract_strided_slice %243 {offsets = [0, 1], sizes = [32, 22], strides = [1, 1]} : vector<32x36xf32> to vector<32x22xf32>
    %249 = vector.extract_strided_slice %243 {offsets = [0, 2], sizes = [32, 22], strides = [1, 1]} : vector<32x36xf32> to vector<32x22xf32>
    %250 = vector.extract_strided_slice %243 {offsets = [0, 6], sizes = [32, 22], strides = [1, 1]} : vector<32x36xf32> to vector<32x22xf32>
    %251 = vector.extract_strided_slice %243 {offsets = [0, 7], sizes = [32, 22], strides = [1, 1]} : vector<32x36xf32> to vector<32x22xf32>
    %252 = vector.extract_strided_slice %243 {offsets = [0, 8], sizes = [32, 22], strides = [1, 1]} : vector<32x36xf32> to vector<32x22xf32>
    %253 = vector.extract_strided_slice %243 {offsets = [0, 12], sizes = [32, 22], strides = [1, 1]} : vector<32x36xf32> to vector<32x22xf32>
    %254 = vector.extract_strided_slice %243 {offsets = [0, 13], sizes = [32, 22], strides = [1, 1]} : vector<32x36xf32> to vector<32x22xf32>
    %255 = vector.extract_strided_slice %243 {offsets = [0, 14], sizes = [32, 22], strides = [1, 1]} : vector<32x36xf32> to vector<32x22xf32>
    %256 = tpu.concatenate %247, %248, %249, %250, %251, %252, %253, %254, %255 in 0 : vector<32x22xf32>, vector<32x22xf32>, vector<32x22xf32>, vector<32x22xf32>, vector<32x22xf32>, vector<32x22xf32>, vector<32x22xf32>, vector<32x22xf32>, vector<32x22xf32> -> vector<288x22xf32>
    %257 = arith.truncf %256 : vector<288x22xf32> to vector<288x22xbf16>
    %cst_81 = arith.constant dense<0.000000e+00> : vector<16x22xf32>
    %258 = tpu.matmul %244, %257, %cst_81 {dimension_numbers = #tpu.dot_dimension_numbers<[1], [0], [0], [1], [0, 0, 1, 1], [], []>} : vector<16x288xbf16>, vector<288x22xbf16>, vector<16x22xf32> -> vector<16x22xf32>
    %259 = vector.extract_strided_slice %245 {offsets = [0, 0], sizes = [16, 1], strides = [1, 1]} : vector<16x3xf32> to vector<16x1xf32>
    %260 = vector.broadcast %259 : vector<16x1xf32> to vector<16x22xf32>
    %261 = arith.addf %258, %260 : vector<16x22xf32>
    %262 = vector.broadcast %246 : vector<1x22xf32> to vector<16x22xf32>
    %263 = arith.mulf %261, %262 : vector<16x22xf32>
    %264 = vector.shape_cast %263 : vector<16x22xf32> to vector<1x16x22xf32>
    %cst_82 = arith.constant dense<0.000000e+00> : vector<1xf32>
    %265 = vector.multi_reduction <add>, %264, %cst_82 [1, 2] : vector<1x16x22xf32> to vector<1xf32>
    %266 = vector.shape_cast %265 : vector<1xf32> to vector<1x1x1xf32>
    %267 = vector.extract %266[0, 0, 0] : f32 from vector<1x1x1xf32>
    %268 = vector.broadcast %267 : f32 to vector<1x1xf32>
    %cst_83 = arith.constant 3.906250e-03 : f32
    %269 = vector.broadcast %cst_83 : f32 to vector<1x1xf32>
    %270 = arith.mulf %268, %269 : vector<1x1xf32>
    %271 = vector.broadcast %270 : vector<1x1xf32> to vector<16x22xf32>
    %272 = arith.subf %261, %271 : vector<16x22xf32>
    %273 = vector.broadcast %246 : vector<1x22xf32> to vector<16x22xf32>
    %274 = arith.mulf %272, %273 : vector<16x22xf32>
    %275 = arith.mulf %274, %274 : vector<16x22xf32>
    %276 = vector.shape_cast %275 : vector<16x22xf32> to vector<1x16x22xf32>
    %cst_84 = arith.constant dense<0.000000e+00> : vector<1xf32>
    %277 = vector.multi_reduction <add>, %276, %cst_84 [1, 2] : vector<1x16x22xf32> to vector<1xf32>
    %278 = vector.shape_cast %277 : vector<1xf32> to vector<1x1x1xf32>
    %279 = vector.extract %278[0, 0, 0] : f32 from vector<1x1x1xf32>
    %280 = vector.broadcast %279 : f32 to vector<1x1xf32>
    %cst_85 = arith.constant 3.906250e-03 : f32
    %281 = vector.broadcast %cst_85 : f32 to vector<1x1xf32>
    %282 = arith.mulf %280, %281 : vector<1x1xf32>
    %283 = vector.broadcast %270 : vector<1x1xf32> to vector<16x22xf32>
    %284 = arith.subf %261, %283 : vector<16x22xf32>
    %cst_86 = arith.constant 9.99999974E-6 : f32
    %285 = vector.broadcast %cst_86 : f32 to vector<1x1xf32>
    %286 = arith.addf %282, %285 : vector<1x1xf32>
    %287 = math.rsqrt %286 : vector<1x1xf32>
    %288 = vector.broadcast %287 : vector<1x1xf32> to vector<16x22xf32>
    %289 = arith.mulf %284, %288 : vector<16x22xf32>
    %290 = vector.extract_strided_slice %245 {offsets = [0, 1], sizes = [16, 1], strides = [1, 1]} : vector<16x3xf32> to vector<16x1xf32>
    %291 = vector.broadcast %290 : vector<16x1xf32> to vector<16x22xf32>
    %292 = arith.mulf %289, %291 : vector<16x22xf32>
    %293 = vector.extract_strided_slice %245 {offsets = [0, 2], sizes = [16, 1], strides = [1, 1]} : vector<16x3xf32> to vector<16x1xf32>
    %294 = vector.broadcast %293 : vector<16x1xf32> to vector<16x22xf32>
    %295 = arith.addf %292, %294 : vector<16x22xf32>
    %cst_87 = arith.constant 0.000000e+00 : f32
    %296 = vector.broadcast %cst_87 : f32 to vector<16x22xf32>
    %297 = arith.cmpf oge, %295, %296 : vector<16x22xf32>
    %cst_88 = arith.constant 0.00999999977 : f32
    %298 = vector.broadcast %cst_88 : f32 to vector<16x22xf32>
    %299 = arith.mulf %298, %295 : vector<16x22xf32>
    %300 = arith.select %297, %295, %299 : vector<16x22xi1>, vector<16x22xf32>
    %c0_89 = arith.constant 0 : index
    %c0_90 = arith.constant 0 : index
    %301 = vector.load %arg27[%c0_89, %c0_90] : memref<22x100xf32, #tpu.memory_space<vmem>>, vector<22x100xf32>
    %cst_91 = arith.constant dense<0.000000e+00> : vector<16x100xf32>
    %302 = tpu.matmul %300, %301, %cst_91 {dimension_numbers = #tpu.dot_dimension_numbers<[1], [0], [0], [1], [0, 0, 1, 1], [], []>} : vector<16x22xf32>, vector<22x100xf32>, vector<16x100xf32> -> vector<16x100xf32>
    %c0_92 = arith.constant 0 : index
    %c0_93 = arith.constant 0 : index
    %303 = vector.load %arg12[%c0_92, %c0_93] : memref<16x144xbf16, #tpu.memory_space<vmem>>, vector<16x144xbf16>
    %c0_94 = arith.constant 0 : index
    %c0_95 = arith.constant 0 : index
    %304 = vector.load %arg13[%c0_94, %c0_95] : memref<16x3xf32, #tpu.memory_space<vmem>>, vector<16x3xf32>
    %c0_96 = arith.constant 0 : index
    %c0_97 = arith.constant 0 : index
    %305 = vector.load %arg30[%c0_96, %c0_97] : memref<1x78xf32, #tpu.memory_space<vmem>>, vector<1x78xf32>
    %306 = arith.addf %120, %302 : vector<16x100xf32>
    %307 = vector.extract_strided_slice %306 {offsets = [0, 0], sizes = [16, 78], strides = [1, 1]} : vector<16x100xf32> to vector<16x78xf32>
    %308 = vector.extract_strided_slice %306 {offsets = [0, 1], sizes = [16, 78], strides = [1, 1]} : vector<16x100xf32> to vector<16x78xf32>
    %309 = vector.extract_strided_slice %306 {offsets = [0, 2], sizes = [16, 78], strides = [1, 1]} : vector<16x100xf32> to vector<16x78xf32>
    %310 = vector.extract_strided_slice %306 {offsets = [0, 10], sizes = [16, 78], strides = [1, 1]} : vector<16x100xf32> to vector<16x78xf32>
    %311 = vector.extract_strided_slice %306 {offsets = [0, 11], sizes = [16, 78], strides = [1, 1]} : vector<16x100xf32> to vector<16x78xf32>
    %312 = vector.extract_strided_slice %306 {offsets = [0, 12], sizes = [16, 78], strides = [1, 1]} : vector<16x100xf32> to vector<16x78xf32>
    %313 = vector.extract_strided_slice %306 {offsets = [0, 20], sizes = [16, 78], strides = [1, 1]} : vector<16x100xf32> to vector<16x78xf32>
    %314 = vector.extract_strided_slice %306 {offsets = [0, 21], sizes = [16, 78], strides = [1, 1]} : vector<16x100xf32> to vector<16x78xf32>
    %315 = vector.extract_strided_slice %306 {offsets = [0, 22], sizes = [16, 78], strides = [1, 1]} : vector<16x100xf32> to vector<16x78xf32>
    %316 = tpu.concatenate %307, %308, %309, %310, %311, %312, %313, %314, %315 in 0 : vector<16x78xf32>, vector<16x78xf32>, vector<16x78xf32>, vector<16x78xf32>, vector<16x78xf32>, vector<16x78xf32>, vector<16x78xf32>, vector<16x78xf32>, vector<16x78xf32> -> vector<144x78xf32>
    %317 = arith.truncf %316 : vector<144x78xf32> to vector<144x78xbf16>
    %cst_98 = arith.constant dense<0.000000e+00> : vector<16x78xf32>
    %318 = tpu.matmul %303, %317, %cst_98 {dimension_numbers = #tpu.dot_dimension_numbers<[1], [0], [0], [1], [0, 0, 1, 1], [], []>} : vector<16x144xbf16>, vector<144x78xbf16>, vector<16x78xf32> -> vector<16x78xf32>
    %319 = vector.extract_strided_slice %304 {offsets = [0, 0], sizes = [16, 1], strides = [1, 1]} : vector<16x3xf32> to vector<16x1xf32>
    %320 = vector.broadcast %319 : vector<16x1xf32> to vector<16x78xf32>
    %321 = arith.addf %318, %320 : vector<16x78xf32>
    %322 = vector.broadcast %305 : vector<1x78xf32> to vector<16x78xf32>
    %323 = arith.mulf %321, %322 : vector<16x78xf32>
    %324 = vector.shape_cast %323 : vector<16x78xf32> to vector<1x16x78xf32>
    %cst_99 = arith.constant dense<0.000000e+00> : vector<1xf32>
    %325 = vector.multi_reduction <add>, %324, %cst_99 [1, 2] : vector<1x16x78xf32> to vector<1xf32>
    %326 = vector.shape_cast %325 : vector<1xf32> to vector<1x1x1xf32>
    %327 = vector.extract %326[0, 0, 0] : f32 from vector<1x1x1xf32>
    %328 = vector.broadcast %327 : f32 to vector<1x1xf32>
    %cst_100 = arith.constant 9.765625E-4 : f32
    %329 = vector.broadcast %cst_100 : f32 to vector<1x1xf32>
    %330 = arith.mulf %328, %329 : vector<1x1xf32>
    %331 = vector.broadcast %330 : vector<1x1xf32> to vector<16x78xf32>
    %332 = arith.subf %321, %331 : vector<16x78xf32>
    %333 = vector.broadcast %305 : vector<1x78xf32> to vector<16x78xf32>
    %334 = arith.mulf %332, %333 : vector<16x78xf32>
    %335 = arith.mulf %334, %334 : vector<16x78xf32>
    %336 = vector.shape_cast %335 : vector<16x78xf32> to vector<1x16x78xf32>
    %cst_101 = arith.constant dense<0.000000e+00> : vector<1xf32>
    %337 = vector.multi_reduction <add>, %336, %cst_101 [1, 2] : vector<1x16x78xf32> to vector<1xf32>
    %338 = vector.shape_cast %337 : vector<1xf32> to vector<1x1x1xf32>
    %339 = vector.extract %338[0, 0, 0] : f32 from vector<1x1x1xf32>
    %340 = vector.broadcast %339 : f32 to vector<1x1xf32>
    %cst_102 = arith.constant 9.765625E-4 : f32
    %341 = vector.broadcast %cst_102 : f32 to vector<1x1xf32>
    %342 = arith.mulf %340, %341 : vector<1x1xf32>
    %343 = vector.broadcast %330 : vector<1x1xf32> to vector<16x78xf32>
    %344 = arith.subf %321, %343 : vector<16x78xf32>
    %cst_103 = arith.constant 9.99999974E-6 : f32
    %345 = vector.broadcast %cst_103 : f32 to vector<1x1xf32>
    %346 = arith.addf %342, %345 : vector<1x1xf32>
    %347 = math.rsqrt %346 : vector<1x1xf32>
    %348 = vector.broadcast %347 : vector<1x1xf32> to vector<16x78xf32>
    %349 = arith.mulf %344, %348 : vector<16x78xf32>
    %350 = vector.extract_strided_slice %304 {offsets = [0, 1], sizes = [16, 1], strides = [1, 1]} : vector<16x3xf32> to vector<16x1xf32>
    %351 = vector.broadcast %350 : vector<16x1xf32> to vector<16x78xf32>
    %352 = arith.mulf %349, %351 : vector<16x78xf32>
    %353 = vector.extract_strided_slice %304 {offsets = [0, 2], sizes = [16, 1], strides = [1, 1]} : vector<16x3xf32> to vector<16x1xf32>
    %354 = vector.broadcast %353 : vector<16x1xf32> to vector<16x78xf32>
    %355 = arith.addf %352, %354 : vector<16x78xf32>
    %cst_104 = arith.constant 0.000000e+00 : f32
    %356 = vector.broadcast %cst_104 : f32 to vector<16x78xf32>
    %357 = arith.cmpf oge, %355, %356 : vector<16x78xf32>
    %cst_105 = arith.constant 0.00999999977 : f32
    %358 = vector.broadcast %cst_105 : f32 to vector<16x78xf32>
    %359 = arith.mulf %358, %355 : vector<16x78xf32>
    %360 = arith.select %357, %355, %359 : vector<16x78xi1>, vector<16x78xf32>
    %c0_106 = arith.constant 0 : index
    %c0_107 = arith.constant 0 : index
    %361 = vector.load %arg28[%c0_106, %c0_107] : memref<78x128xf32, #tpu.memory_space<vmem>>, vector<78x128xf32>
    %cst_108 = arith.constant dense<0.000000e+00> : vector<16x128xf32>
    %362 = tpu.matmul %360, %361, %cst_108 {dimension_numbers = #tpu.dot_dimension_numbers<[1], [0], [0], [1], [0, 0, 1, 1], [], []>} : vector<16x78xf32>, vector<78x128xf32>, vector<16x128xf32> -> vector<16x128xf32>
    %c0_109 = arith.constant 0 : index
    %c0_110 = arith.constant 0 : index
    %c0_111 = arith.constant 0 : index
    %363 = vector.load %arg34[%c0_109, %c0_110, %c0_111] : memref<1x16x128xf32, #tpu.memory_space<vmem>>, vector<1x16x128xf32>
    %364 = vector.shape_cast %363 : vector<1x16x128xf32> to vector<16x128xf32>
    %365 = vector.shape_cast %362 : vector<16x128xf32> to vector<1x16x128xf32>
    tpu.vector_store %arg34[%c0_109, %c0_110, %c0_111], %365 {strides = array<i32>} : memref<1x16x128xf32, #tpu.memory_space<vmem>>, vector<1x16x128xf32>,
    %c0_112 = arith.constant 0 : index
    %c0_113 = arith.constant 0 : index
    %366 = vector.load %arg29[%c0_112, %c0_113] : memref<78x100xf32, #tpu.memory_space<vmem>>, vector<78x100xf32>
    %cst_114 = arith.constant dense<0.000000e+00> : vector<16x100xf32>
    %367 = tpu.matmul %360, %366, %cst_114 {dimension_numbers = #tpu.dot_dimension_numbers<[1], [0], [0], [1], [0, 0, 1, 1], [], []>} : vector<16x78xf32>, vector<78x100xf32>, vector<16x100xf32> -> vector<16x100xf32>
    %c0_115 = arith.constant 0 : index
    %c0_116 = arith.constant 0 : index
    %368 = vector.load %arg14[%c0_115, %c0_116] : memref<8x144xbf16, #tpu.memory_space<vmem>>, vector<8x144xbf16>
    %c0_117 = arith.constant 0 : index
    %c0_118 = arith.constant 0 : index
    %369 = vector.load %arg15[%c0_117, %c0_118] : memref<8x3xf32, #tpu.memory_space<vmem>>, vector<8x3xf32>
    %c0_119 = arith.constant 0 : index
    %c0_120 = arith.constant 0 : index
    %370 = vector.load %arg30[%c0_119, %c0_120] : memref<1x78xf32, #tpu.memory_space<vmem>>, vector<1x78xf32>
    %371 = vector.extract_strided_slice %367 {offsets = [0, 0], sizes = [16, 78], strides = [1, 1]} : vector<16x100xf32> to vector<16x78xf32>
    %372 = vector.extract_strided_slice %367 {offsets = [0, 1], sizes = [16, 78], strides = [1, 1]} : vector<16x100xf32> to vector<16x78xf32>
    %373 = vector.extract_strided_slice %367 {offsets = [0, 2], sizes = [16, 78], strides = [1, 1]} : vector<16x100xf32> to vector<16x78xf32>
    %374 = vector.extract_strided_slice %367 {offsets = [0, 10], sizes = [16, 78], strides = [1, 1]} : vector<16x100xf32> to vector<16x78xf32>
    %375 = vector.extract_strided_slice %367 {offsets = [0, 11], sizes = [16, 78], strides = [1, 1]} : vector<16x100xf32> to vector<16x78xf32>
    %376 = vector.extract_strided_slice %367 {offsets = [0, 12], sizes = [16, 78], strides = [1, 1]} : vector<16x100xf32> to vector<16x78xf32>
    %377 = vector.extract_strided_slice %367 {offsets = [0, 20], sizes = [16, 78], strides = [1, 1]} : vector<16x100xf32> to vector<16x78xf32>
    %378 = vector.extract_strided_slice %367 {offsets = [0, 21], sizes = [16, 78], strides = [1, 1]} : vector<16x100xf32> to vector<16x78xf32>
    %379 = vector.extract_strided_slice %367 {offsets = [0, 22], sizes = [16, 78], strides = [1, 1]} : vector<16x100xf32> to vector<16x78xf32>
    %380 = tpu.concatenate %371, %372, %373, %374, %375, %376, %377, %378, %379 in 0 : vector<16x78xf32>, vector<16x78xf32>, vector<16x78xf32>, vector<16x78xf32>, vector<16x78xf32>, vector<16x78xf32>, vector<16x78xf32>, vector<16x78xf32>, vector<16x78xf32> -> vector<144x78xf32>
    %381 = arith.truncf %380 : vector<144x78xf32> to vector<144x78xbf16>
    %cst_121 = arith.constant dense<0.000000e+00> : vector<8x78xf32>
    %382 = tpu.matmul %368, %381, %cst_121 {dimension_numbers = #tpu.dot_dimension_numbers<[1], [0], [0], [1], [0, 0, 1, 1], [], []>} : vector<8x144xbf16>, vector<144x78xbf16>, vector<8x78xf32> -> vector<8x78xf32>
    %383 = vector.extract_strided_slice %369 {offsets = [0, 0], sizes = [8, 1], strides = [1, 1]} : vector<8x3xf32> to vector<8x1xf32>
    %384 = vector.broadcast %383 : vector<8x1xf32> to vector<8x78xf32>
    %385 = arith.addf %382, %384 : vector<8x78xf32>
    %386 = vector.broadcast %370 : vector<1x78xf32> to vector<8x78xf32>
    %387 = arith.mulf %385, %386 : vector<8x78xf32>
    %388 = vector.shape_cast %387 : vector<8x78xf32> to vector<1x8x78xf32>
    %cst_122 = arith.constant dense<0.000000e+00> : vector<1xf32>
    %389 = vector.multi_reduction <add>, %388, %cst_122 [1, 2] : vector<1x8x78xf32> to vector<1xf32>
    %390 = vector.shape_cast %389 : vector<1xf32> to vector<1x1x1xf32>
    %391 = vector.extract %390[0, 0, 0] : f32 from vector<1x1x1xf32>
    %392 = vector.broadcast %391 : f32 to vector<1x1xf32>
    %cst_123 = arith.constant 0.001953125 : f32
    %393 = vector.broadcast %cst_123 : f32 to vector<1x1xf32>
    %394 = arith.mulf %392, %393 : vector<1x1xf32>
    %395 = vector.broadcast %394 : vector<1x1xf32> to vector<8x78xf32>
    %396 = arith.subf %385, %395 : vector<8x78xf32>
    %397 = vector.broadcast %370 : vector<1x78xf32> to vector<8x78xf32>
    %398 = arith.mulf %396, %397 : vector<8x78xf32>
    %399 = arith.mulf %398, %398 : vector<8x78xf32>
    %400 = vector.shape_cast %399 : vector<8x78xf32> to vector<1x8x78xf32>
    %cst_124 = arith.constant dense<0.000000e+00> : vector<1xf32>
    %401 = vector.multi_reduction <add>, %400, %cst_124 [1, 2] : vector<1x8x78xf32> to vector<1xf32>
    %402 = vector.shape_cast %401 : vector<1xf32> to vector<1x1x1xf32>
    %403 = vector.extract %402[0, 0, 0] : f32 from vector<1x1x1xf32>
    %404 = vector.broadcast %403 : f32 to vector<1x1xf32>
    %cst_125 = arith.constant 0.001953125 : f32
    %405 = vector.broadcast %cst_125 : f32 to vector<1x1xf32>
    %406 = arith.mulf %404, %405 : vector<1x1xf32>
    %407 = vector.broadcast %394 : vector<1x1xf32> to vector<8x78xf32>
    %408 = arith.subf %385, %407 : vector<8x78xf32>
    %cst_126 = arith.constant 9.99999974E-6 : f32
    %409 = vector.broadcast %cst_126 : f32 to vector<1x1xf32>
    %410 = arith.addf %406, %409 : vector<1x1xf32>
    %411 = math.rsqrt %410 : vector<1x1xf32>
    %412 = vector.broadcast %411 : vector<1x1xf32> to vector<8x78xf32>
    %413 = arith.mulf %408, %412 : vector<8x78xf32>
    %414 = vector.extract_strided_slice %369 {offsets = [0, 1], sizes = [8, 1], strides = [1, 1]} : vector<8x3xf32> to vector<8x1xf32>
    %415 = vector.broadcast %414 : vector<8x1xf32> to vector<8x78xf32>
    %416 = arith.mulf %413, %415 : vector<8x78xf32>
    %417 = vector.extract_strided_slice %369 {offsets = [0, 2], sizes = [8, 1], strides = [1, 1]} : vector<8x3xf32> to vector<8x1xf32>
    %418 = vector.broadcast %417 : vector<8x1xf32> to vector<8x78xf32>
    %419 = arith.addf %416, %418 : vector<8x78xf32>
    %cst_127 = arith.constant 0.000000e+00 : f32
    %420 = vector.broadcast %cst_127 : f32 to vector<8x78xf32>
    %421 = arith.cmpf oge, %419, %420 : vector<8x78xf32>
    %cst_128 = arith.constant 0.00999999977 : f32
    %422 = vector.broadcast %cst_128 : f32 to vector<8x78xf32>
    %423 = arith.mulf %422, %419 : vector<8x78xf32>
    %424 = arith.select %421, %419, %423 : vector<8x78xi1>, vector<8x78xf32>
    %c0_129 = arith.constant 0 : index
    %c0_130 = arith.constant 0 : index
    %425 = vector.load %arg31[%c0_129, %c0_130] : memref<78x324xf32, #tpu.memory_space<vmem>>, vector<78x324xf32>
    %cst_131 = arith.constant dense<0.000000e+00> : vector<8x324xf32>
    %426 = tpu.matmul %424, %425, %cst_131 {dimension_numbers = #tpu.dot_dimension_numbers<[1], [0], [0], [1], [0, 0, 1, 1], [], []>} : vector<8x78xf32>, vector<78x324xf32>, vector<8x324xf32> -> vector<8x324xf32>
    %c0_132 = arith.constant 0 : index
    %c0_133 = arith.constant 0 : index
    %427 = vector.load %arg16[%c0_132, %c0_133] : memref<8x72xbf16, #tpu.memory_space<vmem>>, vector<8x72xbf16>
    %c0_134 = arith.constant 0 : index
    %c0_135 = arith.constant 0 : index
    %428 = vector.load %arg17[%c0_134, %c0_135] : memref<8x3xf32, #tpu.memory_space<vmem>>, vector<8x3xf32>
    %c0_136 = arith.constant 0 : index
    %c0_137 = arith.constant 0 : index
    %429 = vector.load %arg19[%c0_136, %c0_137] : memref<1x286xf32, #tpu.memory_space<vmem>>, vector<1x286xf32>
    %430 = arith.addf %61, %426 : vector<8x324xf32>
    %431 = vector.extract_strided_slice %430 {offsets = [0, 0], sizes = [8, 286], strides = [1, 1]} : vector<8x324xf32> to vector<8x286xf32>
    %432 = vector.extract_strided_slice %430 {offsets = [0, 1], sizes = [8, 286], strides = [1, 1]} : vector<8x324xf32> to vector<8x286xf32>
    %433 = vector.extract_strided_slice %430 {offsets = [0, 2], sizes = [8, 286], strides = [1, 1]} : vector<8x324xf32> to vector<8x286xf32>
    %434 = vector.extract_strided_slice %430 {offsets = [0, 18], sizes = [8, 286], strides = [1, 1]} : vector<8x324xf32> to vector<8x286xf32>
    %435 = vector.extract_strided_slice %430 {offsets = [0, 19], sizes = [8, 286], strides = [1, 1]} : vector<8x324xf32> to vector<8x286xf32>
    %436 = vector.extract_strided_slice %430 {offsets = [0, 20], sizes = [8, 286], strides = [1, 1]} : vector<8x324xf32> to vector<8x286xf32>
    %437 = vector.extract_strided_slice %430 {offsets = [0, 36], sizes = [8, 286], strides = [1, 1]} : vector<8x324xf32> to vector<8x286xf32>
    %438 = vector.extract_strided_slice %430 {offsets = [0, 37], sizes = [8, 286], strides = [1, 1]} : vector<8x324xf32> to vector<8x286xf32>
    %439 = vector.extract_strided_slice %430 {offsets = [0, 38], sizes = [8, 286], strides = [1, 1]} : vector<8x324xf32> to vector<8x286xf32>
    %440 = tpu.concatenate %431, %432, %433, %434, %435, %436, %437, %438, %439 in 0 : vector<8x286xf32>, vector<8x286xf32>, vector<8x286xf32>, vector<8x286xf32>, vector<8x286xf32>, vector<8x286xf32>, vector<8x286xf32>, vector<8x286xf32>, vector<8x286xf32> -> vector<72x286xf32>
    %441 = arith.truncf %440 : vector<72x286xf32> to vector<72x286xbf16>
    %cst_138 = arith.constant dense<0.000000e+00> : vector<8x286xf32>
    %442 = tpu.matmul %427, %441, %cst_138 {dimension_numbers = #tpu.dot_dimension_numbers<[1], [0], [0], [1], [0, 0, 1, 1], [], []>} : vector<8x72xbf16>, vector<72x286xbf16>, vector<8x286xf32> -> vector<8x286xf32>
    %443 = vector.extract_strided_slice %428 {offsets = [0, 0], sizes = [8, 1], strides = [1, 1]} : vector<8x3xf32> to vector<8x1xf32>
    %444 = vector.broadcast %443 : vector<8x1xf32> to vector<8x286xf32>
    %445 = arith.addf %442, %444 : vector<8x286xf32>
    %446 = vector.broadcast %429 : vector<1x286xf32> to vector<8x286xf32>
    %447 = arith.mulf %445, %446 : vector<8x286xf32>
    %448 = vector.shape_cast %447 : vector<8x286xf32> to vector<1x8x286xf32>
    %cst_139 = arith.constant dense<0.000000e+00> : vector<1xf32>
    %449 = vector.multi_reduction <add>, %448, %cst_139 [1, 2] : vector<1x8x286xf32> to vector<1xf32>
    %450 = vector.shape_cast %449 : vector<1xf32> to vector<1x1x1xf32>
    %451 = vector.extract %450[0, 0, 0] : f32 from vector<1x1x1xf32>
    %452 = vector.broadcast %451 : f32 to vector<1x1xf32>
    %cst_140 = arith.constant 4.8828125E-4 : f32
    %453 = vector.broadcast %cst_140 : f32 to vector<1x1xf32>
    %454 = arith.mulf %452, %453 : vector<1x1xf32>
    %455 = vector.broadcast %454 : vector<1x1xf32> to vector<8x286xf32>
    %456 = arith.subf %445, %455 : vector<8x286xf32>
    %457 = vector.broadcast %429 : vector<1x286xf32> to vector<8x286xf32>
    %458 = arith.mulf %456, %457 : vector<8x286xf32>
    %459 = arith.mulf %458, %458 : vector<8x286xf32>
    %460 = vector.shape_cast %459 : vector<8x286xf32> to vector<1x8x286xf32>
    %cst_141 = arith.constant dense<0.000000e+00> : vector<1xf32>
    %461 = vector.multi_reduction <add>, %460, %cst_141 [1, 2] : vector<1x8x286xf32> to vector<1xf32>
    %462 = vector.shape_cast %461 : vector<1xf32> to vector<1x1x1xf32>
    %463 = vector.extract %462[0, 0, 0] : f32 from vector<1x1x1xf32>
    %464 = vector.broadcast %463 : f32 to vector<1x1xf32>
    %cst_142 = arith.constant 4.8828125E-4 : f32
    %465 = vector.broadcast %cst_142 : f32 to vector<1x1xf32>
    %466 = arith.mulf %464, %465 : vector<1x1xf32>
    %467 = vector.broadcast %454 : vector<1x1xf32> to vector<8x286xf32>
    %468 = arith.subf %445, %467 : vector<8x286xf32>
    %cst_143 = arith.constant 9.99999974E-6 : f32
    %469 = vector.broadcast %cst_143 : f32 to vector<1x1xf32>
    %470 = arith.addf %466, %469 : vector<1x1xf32>
    %471 = math.rsqrt %470 : vector<1x1xf32>
    %472 = vector.broadcast %471 : vector<1x1xf32> to vector<8x286xf32>
    %473 = arith.mulf %468, %472 : vector<8x286xf32>
    %474 = vector.extract_strided_slice %428 {offsets = [0, 1], sizes = [8, 1], strides = [1, 1]} : vector<8x3xf32> to vector<8x1xf32>
    %475 = vector.broadcast %474 : vector<8x1xf32> to vector<8x286xf32>
    %476 = arith.mulf %473, %475 : vector<8x286xf32>
    %477 = vector.extract_strided_slice %428 {offsets = [0, 2], sizes = [8, 1], strides = [1, 1]} : vector<8x3xf32> to vector<8x1xf32>
    %478 = vector.broadcast %477 : vector<8x1xf32> to vector<8x286xf32>
    %479 = arith.addf %476, %478 : vector<8x286xf32>
    %cst_144 = arith.constant 0.000000e+00 : f32
    %480 = vector.broadcast %cst_144 : f32 to vector<8x286xf32>
    %481 = arith.cmpf oge, %479, %480 : vector<8x286xf32>
    %cst_145 = arith.constant 0.00999999977 : f32
    %482 = vector.broadcast %cst_145 : f32 to vector<8x286xf32>
    %483 = arith.mulf %482, %479 : vector<8x286xf32>
    %484 = arith.select %481, %479, %483 : vector<8x286xi1>, vector<8x286xf32>
    %c0_146 = arith.constant 0 : index
    %c0_147 = arith.constant 0 : index
    %485 = vector.load %arg32[%c0_146, %c0_147] : memref<286x256xf32, #tpu.memory_space<vmem>>, vector<286x256xf32>
    %cst_148 = arith.constant dense<0.000000e+00> : vector<8x256xf32>
    %486 = tpu.matmul %484, %485, %cst_148 {dimension_numbers = #tpu.dot_dimension_numbers<[1], [0], [0], [1], [0, 0, 1, 1], [], []>} : vector<8x286xf32>, vector<286x256xf32>, vector<8x256xf32> -> vector<8x256xf32>
    %c0_149 = arith.constant 0 : index
    %c0_150 = arith.constant 0 : index
    %c0_151 = arith.constant 0 : index
    %487 = vector.load %arg33[%c0_149, %c0_150, %c0_151] : memref<1x8x256xf32, #tpu.memory_space<vmem>>, vector<1x8x256xf32>
    %488 = vector.shape_cast %487 : vector<1x8x256xf32> to vector<8x256xf32>
    %489 = vector.shape_cast %486 : vector<8x256xf32> to vector<1x8x256xf32>
    tpu.vector_store %arg33[%c0_149, %c0_150, %c0_151], %489 {strides = array<i32>} : memref<1x8x256xf32, #tpu.memory_space<vmem>>, vector<1x8x256xf32>,
    return
  }
  func.func @transform_0(%arg0: i32) -> (i32, i32, i32) {
    %c0_i32 = arith.constant 0 : i32
    %c0_i32_0 = arith.constant 0 : i32
    %c0_i32_1 = arith.constant 0 : i32
    return %arg0, %c0_i32, %c0_i32_0 : i32, i32, i32
  }
  func.func @transform_1(%arg0: i32) -> (i32, i32) {
    %c0_i32 = arith.constant 0 : i32
    %c0_i32_0 = arith.constant 0 : i32
    %c0_i32_1 = arith.constant 0 : i32
    return %c0_i32, %c0_i32_0 : i32, i32
  }
  func.func @transform_2(%arg0: i32) -> (i32, i32) {
    %c0_i32 = arith.constant 0 : i32
    %c0_i32_0 = arith.constant 0 : i32
    %c0_i32_1 = arith.constant 0 : i32
    return %c0_i32, %c0_i32_0 : i32, i32
  }
  func.func @transform_3(%arg0: i32) -> (i32, i32) {
    %c0_i32 = arith.constant 0 : i32
    %c0_i32_0 = arith.constant 0 : i32
    %c0_i32_1 = arith.constant 0 : i32
    return %c0_i32, %c0_i32_0 : i32, i32
  }
  func.func @transform_4(%arg0: i32) -> (i32, i32) {
    %c0_i32 = arith.constant 0 : i32
    %c0_i32_0 = arith.constant 0 : i32
    %c0_i32_1 = arith.constant 0 : i32
    return %c0_i32, %c0_i32_0 : i32, i32
  }
  func.func @transform_5(%arg0: i32) -> (i32, i32) {
    %c0_i32 = arith.constant 0 : i32
    %c0_i32_0 = arith.constant 0 : i32
    %c0_i32_1 = arith.constant 0 : i32
    return %c0_i32, %c0_i32_0 : i32, i32
  }
  func.func @transform_6(%arg0: i32) -> (i32, i32) {
    %c0_i32 = arith.constant 0 : i32
    %c0_i32_0 = arith.constant 0 : i32
    %c0_i32_1 = arith.constant 0 : i32
    return %c0_i32, %c0_i32_0 : i32, i32
  }
  func.func @transform_7(%arg0: i32) -> (i32, i32) {
    %c0_i32 = arith.constant 0 : i32
    %c0_i32_0 = arith.constant 0 : i32
    %c0_i32_1 = arith.constant 0 : i32
    return %c0_i32, %c0_i32_0 : i32, i32
  }
  func.func @transform_8(%arg0: i32) -> (i32, i32) {
    %c0_i32 = arith.constant 0 : i32
    %c0_i32_0 = arith.constant 0 : i32
    %c0_i32_1 = arith.constant 0 : i32
    return %c0_i32, %c0_i32_0 : i32, i32
  }
  func.func @transform_9(%arg0: i32) -> (i32, i32) {
    %c0_i32 = arith.constant 0 : i32
    %c0_i32_0 = arith.constant 0 : i32
    %c0_i32_1 = arith.constant 0 : i32
    return %c0_i32, %c0_i32_0 : i32, i32
  }
  func.func @transform_10(%arg0: i32) -> (i32, i32) {
    %c0_i32 = arith.constant 0 : i32
    %c0_i32_0 = arith.constant 0 : i32
    %c0_i32_1 = arith.constant 0 : i32
    return %c0_i32, %c0_i32_0 : i32, i32
  }
  func.func @transform_11(%arg0: i32) -> (i32, i32) {
    %c0_i32 = arith.constant 0 : i32
    %c0_i32_0 = arith.constant 0 : i32
    %c0_i32_1 = arith.constant 0 : i32
    return %c0_i32, %c0_i32_0 : i32, i32
  }
  func.func @transform_12(%arg0: i32) -> (i32, i32) {
    %c0_i32 = arith.constant 0 : i32
    %c0_i32_0 = arith.constant 0 : i32
    %c0_i32_1 = arith.constant 0 : i32
    return %c0_i32, %c0_i32_0 : i32, i32
  }
  func.func @transform_13(%arg0: i32) -> (i32, i32) {
    %c0_i32 = arith.constant 0 : i32
    %c0_i32_0 = arith.constant 0 : i32
    %c0_i32_1 = arith.constant 0 : i32
    return %c0_i32, %c0_i32_0 : i32, i32
  }
  func.func @transform_14(%arg0: i32) -> (i32, i32) {
    %c0_i32 = arith.constant 0 : i32
    %c0_i32_0 = arith.constant 0 : i32
    %c0_i32_1 = arith.constant 0 : i32
    return %c0_i32, %c0_i32_0 : i32, i32
  }
  func.func @transform_15(%arg0: i32) -> (i32, i32) {
    %c0_i32 = arith.constant 0 : i32
    %c0_i32_0 = arith.constant 0 : i32
    %c0_i32_1 = arith.constant 0 : i32
    return %c0_i32, %c0_i32_0 : i32, i32
  }
  func.func @transform_16(%arg0: i32) -> (i32, i32) {
    %c0_i32 = arith.constant 0 : i32
    %c0_i32_0 = arith.constant 0 : i32
    %c0_i32_1 = arith.constant 0 : i32
    return %c0_i32, %c0_i32_0 : i32, i32
  }
  func.func @transform_17(%arg0: i32) -> (i32, i32) {
    %c0_i32 = arith.constant 0 : i32
    %c0_i32_0 = arith.constant 0 : i32
    %c0_i32_1 = arith.constant 0 : i32
    return %c0_i32, %c0_i32_0 : i32, i32
  }
  func.func @transform_18(%arg0: i32) -> (i32, i32) {
    %c0_i32 = arith.constant 0 : i32
    %c0_i32_0 = arith.constant 0 : i32
    %c0_i32_1 = arith.constant 0 : i32
    return %c0_i32, %c0_i32_0 : i32, i32
  }
  func.func @transform_19(%arg0: i32) -> (i32, i32) {
    %c0_i32 = arith.constant 0 : i32
    %c0_i32_0 = arith.constant 0 : i32
    %c0_i32_1 = arith.constant 0 : i32
    return %c0_i32, %c0_i32_0 : i32, i32
  }
  func.func @transform_20(%arg0: i32) -> (i32, i32) {
    %c0_i32 = arith.constant 0 : i32
    %c0_i32_0 = arith.constant 0 : i32
    %c0_i32_1 = arith.constant 0 : i32
    return %c0_i32, %c0_i32_0 : i32, i32
  }
  func.func @transform_21(%arg0: i32) -> (i32, i32) {
    %c0_i32 = arith.constant 0 : i32
    %c0_i32_0 = arith.constant 0 : i32
    %c0_i32_1 = arith.constant 0 : i32
    return %c0_i32, %c0_i32_0 : i32, i32
  }
  func.func @transform_22(%arg0: i32) -> (i32, i32) {
    %c0_i32 = arith.constant 0 : i32
    %c0_i32_0 = arith.constant 0 : i32
    %c0_i32_1 = arith.constant 0 : i32
    return %c0_i32, %c0_i32_0 : i32, i32
  }
  func.func @transform_23(%arg0: i32) -> (i32, i32) {
    %c0_i32 = arith.constant 0 : i32
    %c0_i32_0 = arith.constant 0 : i32
    %c0_i32_1 = arith.constant 0 : i32
    return %c0_i32, %c0_i32_0 : i32, i32
  }
  func.func @transform_24(%arg0: i32) -> (i32, i32) {
    %c0_i32 = arith.constant 0 : i32
    %c0_i32_0 = arith.constant 0 : i32
    %c0_i32_1 = arith.constant 0 : i32
    return %c0_i32, %c0_i32_0 : i32, i32
  }
  func.func @transform_25(%arg0: i32) -> (i32, i32) {
    %c0_i32 = arith.constant 0 : i32
    %c0_i32_0 = arith.constant 0 : i32
    %c0_i32_1 = arith.constant 0 : i32
    return %c0_i32, %c0_i32_0 : i32, i32
  }
  func.func @transform_26(%arg0: i32) -> (i32, i32) {
    %c0_i32 = arith.constant 0 : i32
    %c0_i32_0 = arith.constant 0 : i32
    %c0_i32_1 = arith.constant 0 : i32
    return %c0_i32, %c0_i32_0 : i32, i32
  }
  func.func @transform_27(%arg0: i32) -> (i32, i32) {
    %c0_i32 = arith.constant 0 : i32
    %c0_i32_0 = arith.constant 0 : i32
    %c0_i32_1 = arith.constant 0 : i32
    return %c0_i32, %c0_i32_0 : i32, i32
  }
  func.func @transform_28(%arg0: i32) -> (i32, i32) {
    %c0_i32 = arith.constant 0 : i32
    %c0_i32_0 = arith.constant 0 : i32
    %c0_i32_1 = arith.constant 0 : i32
    return %c0_i32, %c0_i32_0 : i32, i32
  }
  func.func @transform_29(%arg0: i32) -> (i32, i32) {
    %c0_i32 = arith.constant 0 : i32
    %c0_i32_0 = arith.constant 0 : i32
    %c0_i32_1 = arith.constant 0 : i32
    return %c0_i32, %c0_i32_0 : i32, i32
  }
  func.func @transform_30(%arg0: i32) -> (i32, i32) {
    %c0_i32 = arith.constant 0 : i32
    %c0_i32_0 = arith.constant 0 : i32
    %c0_i32_1 = arith.constant 0 : i32
    return %c0_i32, %c0_i32_0 : i32, i32
  }
  func.func @transform_31(%arg0: i32) -> (i32, i32) {
    %c0_i32 = arith.constant 0 : i32
    %c0_i32_0 = arith.constant 0 : i32
    %c0_i32_1 = arith.constant 0 : i32
    return %c0_i32, %c0_i32_0 : i32, i32
  }
  func.func @transform_32(%arg0: i32) -> (i32, i32, i32) {
    %c0_i32 = arith.constant 0 : i32
    %c0_i32_0 = arith.constant 0 : i32
    %c0_i32_1 = arith.constant 0 : i32
    return %arg0, %c0_i32, %c0_i32_0 : i32, i32, i32
  }
  func.func @transform_33(%arg0: i32) -> (i32, i32, i32) {
    %c0_i32 = arith.constant 0 : i32
    %c0_i32_0 = arith.constant 0 : i32
    %c0_i32_1 = arith.constant 0 : i32
    return %arg0, %c0_i32, %c0_i32_0 : i32, i32, i32
  }
  func.func @transform_34(%arg0: i32) -> (i32, i32, i32) {
    %c0_i32 = arith.constant 0 : i32
    %c0_i32_0 = arith.constant 0 : i32
    %c0_i32_1 = arith.constant 0 : i32
    return %arg0, %c0_i32, %c0_i32_0 : i32, i32, i32
  }
}

</mosaic_0001>

<llo_original>
// kernel: forward.1
$region0: #{forward.1}
  #allocation0 [shape = 'u32[]', space=smem, size = 0x4, offset = 0x4, fixed_abs, tag = 'smem constant byte address 0x4 - core index']
  #allocation1 [shape = 'u32[144,128]{1,0:T(1,128)}', space=vmem, size = 0x12000, scoped, tag = 'internal scratch']
  %s0 = inlined_call_operand.smem [shape: u32[35], index: -1, kind: input, shape index: {}]
  %s1 = sld [smem:[%s0]]
  %s2 = scalar_lea.smem %s0, 1
  %s3 = sld [smem:[%s2]]
  %s4 = scalar_lea.smem %s0, 2
  %s5 = sld [smem:[%s4]]
  %s6 = scalar_lea.smem %s0, 3
  %s7 = sld [smem:[%s6]]
  %s8 = scalar_lea.smem %s0, 4
  %s9 = sld [smem:[%s8]]
  %s10 = scalar_lea.smem %s0, 5
  %s11 = sld [smem:[%s10]]
  %s12 = scalar_lea.smem %s0, 6
  %s13 = sld [smem:[%s12]]
  %s14 = scalar_lea.smem %s0, 7
  %s15 = sld [smem:[%s14]]
  %s16 = scalar_lea.smem %s0, 8
  %s17 = sld [smem:[%s16]]
  %s18 = scalar_lea.smem %s0, 9
  %s19 = sld [smem:[%s18]]
  %s20 = scalar_lea.smem %s0, 10
  %s21 = sld [smem:[%s20]]
  %s22 = scalar_lea.smem %s0, 11
  %s23 = sld [smem:[%s22]]
  %s24 = scalar_lea.smem %s0, 12
  %s25 = sld [smem:[%s24]]
  %s26 = scalar_lea.smem %s0, 13
  %s27 = sld [smem:[%s26]]
  %s28 = scalar_lea.smem %s0, 14
  %s29 = sld [smem:[%s28]]
  %s30 = scalar_lea.smem %s0, 15
  %s31 = sld [smem:[%s30]]
  %s32 = scalar_lea.smem %s0, 16
  %s33 = sld [smem:[%s32]]
  %s34 = scalar_lea.smem %s0, 17
  %s35 = sld [smem:[%s34]]
  %s36 = scalar_lea.smem %s0, 18
  %s37 = sld [smem:[%s36]]
  %s38 = scalar_lea.smem %s0, 19
  %s39 = sld [smem:[%s38]]
  %s40 = scalar_lea.smem %s0, 20
  %s41 = sld [smem:[%s40]]
  %s42 = scalar_lea.smem %s0, 21
  %s43 = sld [smem:[%s42]]
  %s44 = scalar_lea.smem %s0, 22
  %s45 = sld [smem:[%s44]]
  %s46 = scalar_lea.smem %s0, 23
  %s47 = sld [smem:[%s46]]
  %s48 = scalar_lea.smem %s0, 24
  %s49 = sld [smem:[%s48]]
  %s50 = scalar_lea.smem %s0, 25
  %s51 = sld [smem:[%s50]]
  %s52 = scalar_lea.smem %s0, 26
  %s53 = sld [smem:[%s52]]
  %s54 = scalar_lea.smem %s0, 27
  %s55 = sld [smem:[%s54]]
  %s56 = scalar_lea.smem %s0, 28
  %s57 = sld [smem:[%s56]]
  %s58 = scalar_lea.smem %s0, 29
  %s59 = sld [smem:[%s58]]
  %s60 = scalar_lea.smem %s0, 30
  %s61 = sld [smem:[%s60]]
  %s62 = scalar_lea.smem %s0, 31
  %s63 = sld [smem:[%s62]]
  %s64 = scalar_lea.smem %s0, 32
  %s65 = sld [smem:[%s64]]
  %s66 = scalar_lea.smem %s0, 33
  %s67 = sld [smem:[%s66]]
  %s68 = scalar_lea.smem %s0, 34
  %s69 = sld [smem:[%s68]]
  %70 = xla_tuple %s65, %s67, %s69
  %s71 = sld [smem:[#allocation0]]
  $region241: #{forward.1} parent=0
    _
  %s73 = ssub.s32 1, %s71
  %s74 = scalar_select 0, %s73, %s71
  $region1: #{forward.1} parent=0
    #allocation2 [shape = 'u8[2048]{0}', space=vmem, size = 0x800, scoped, tag = 'input window, operand 1, single buffered']
    #allocation3 [shape = 's32[2]{0}', space=sflag, size = 0x8, scoped, tag = 'scoped memory for forward.1']
    #allocation4 [shape = 'u8[16384]{0}', space=vmem, size = 0x4000, scoped, tag = 'input window, operand 5, single buffered']
    #allocation5 [shape = 's32[1]{0}', space=sflag, size = 0x4, scoped, tag = 'scoped memory for forward.1']
    #allocation6 [shape = 'u8[24576]{0}', space=vmem, size = 0x6000, scoped, tag = 'input window, operand 7, single buffered']
    #allocation7 [shape = 'u8[12288]{0}', space=vmem, size = 0x3000, scoped, tag = 'input window, operand 9, single buffered']
    #allocation8 [shape = 's32[1]{0}', space=sflag, size = 0x4, scoped, tag = 'scoped memory for forward.1']
    #allocation9 [shape = 'u8[8192]{0}', space=vmem, size = 0x2000, scoped, tag = 'input window, operand 11, single buffered']
    #allocation10 [shape = 'u8[4096]{0}', space=vmem, size = 0x1000, scoped, tag = 'input window, operand 13, single buffered']
    #allocation11 [shape = 's32[1]{0}', space=sflag, size = 0x4, scoped, tag = 'scoped memory for forward.1']
    #allocation12 [shape = 'u8[2048]{0}', space=vmem, size = 0x800, scoped, tag = 'input window, operand 15, single buffered']
    #allocation13 [shape = 'u8[1536]{0}', space=vmem, size = 0x800, scoped, tag = 'input window, operand 18, single buffered']
    #allocation14 [shape = 's32[1]{0}', space=sflag, size = 0x4, scoped, tag = 'scoped memory for forward.1']
    #allocation15 [shape = 'u8[147456]{0}', space=vmem, size = 0x24000, scoped, tag = 'input window, operand 19, single buffered']
    #allocation16 [shape = 'u8[1536]{0}', space=vmem, size = 0x800, scoped, tag = 'input window, operand 20, single buffered']
    #allocation17 [shape = 's32[1]{0}', space=sflag, size = 0x4, scoped, tag = 'scoped memory for forward.1']
    #allocation18 [shape = 'u8[512]{0}', space=vmem, size = 0x400, scoped, tag = 'input window, operand 22, single buffered']
    #allocation19 [shape = 'u8[12288]{0}', space=vmem, size = 0x3000, scoped, tag = 'input window, operand 23, single buffered']
    #allocation20 [shape = 's32[1]{0}', space=sflag, size = 0x4, scoped, tag = 'scoped memory for forward.1']
    #allocation21 [shape = 'u8[12288]{0}', space=vmem, size = 0x3000, scoped, tag = 'input window, operand 24, single buffered']
    #allocation22 [shape = 'u8[12288]{0}', space=vmem, size = 0x3000, scoped, tag = 'input window, operand 26, single buffered']
    #allocation23 [shape = 's32[1]{0}', space=sflag, size = 0x4, scoped, tag = 'scoped memory for forward.1']
    #allocation24 [shape = 'u8[122880]{0}', space=vmem, size = 0x1e000, scoped, tag = 'input window, operand 30, single buffered']
    #allocation25 [shape = 'u8[294912]{0}', space=vmem, size = 0x48000, scoped, tag = 'input window, operand 31, single buffered']
    #allocation26 [shape = 's32[1]{0}', space=sflag, size = 0x4, scoped, tag = 'scoped memory for forward.1']
    %75 = vsyncpa [#allocation3], 0
    %76 = vsyncpa [#allocation5], 0
    %77 = vsyncpa [#allocation8], 0
    %78 = vsyncpa [#allocation11], 0
    %79 = vsyncpa [#allocation14], 0
    %80 = vsyncpa [#allocation17], 0
    %81 = vsyncpa [#allocation20], 0
    %82 = vsyncpa [#allocation23], 0
    %83 = vsyncpa [#allocation26], 0
    loop: start=0, step=1, limit=4
    $region2: #{forward.1} parent=1 // loop_pre_header
      _
    $region3: #{forward.1} parent=1 // loop_header
      %s85 = sphi 0, %s89
      %p86 = scmp.ge.s32.totalorder %s85, 4
      %s95 = sphi 0, %s97
      %s98 = sphi 0, %s95
      %s99 = sphi 0, %s98
      %s115 = sphi 0, %s99
      %s119 = sphi 0, %s119
      %s121 = sphi 0, %s119
      %s122 = sphi 0, %s121
      %s136 = sphi 0, %s122
      %s140 = sphi 0, %s140
      %s142 = sphi 0, %s140
      %s143 = sphi 0, %s142
      %s157 = sphi 0, %s143
      %s161 = sphi 0, %s161
      %s163 = sphi 0, %s161
      %s164 = sphi 0, %s163
      %s178 = sphi 0, %s164
      %s182 = sphi 0, %s182
      %s184 = sphi 0, %s182
      %s185 = sphi 0, %s184
      %s199 = sphi 0, %s185
      %s203 = sphi 0, %s203
      %s205 = sphi 0, %s203
      %s206 = sphi 0, %s205
      %s220 = sphi 0, %s206
      %s224 = sphi 0, %s224
      %s226 = sphi 0, %s224
      %s227 = sphi 0, %s226
      %s241 = sphi 0, %s227
      %s245 = sphi 0, %s245
      %s247 = sphi 0, %s245
      %s248 = sphi 0, %s247
      %s262 = sphi 0, %s248
      %s266 = sphi 0, %s266
      %s268 = sphi 0, %s266
      %s269 = sphi 0, %s268
      %s283 = sphi 0, %s269
      %s287 = sphi 0, %s287
      %s289 = sphi 0, %s287
      %s290 = sphi 0, %s289
      %s304 = sphi 0, %s290
      %s308 = sphi 0, %s308
      %s310 = sphi 0, %s308
      %s311 = sphi 0, %s310
      %s325 = sphi 0, %s311
      %s329 = sphi 0, %s329
      %s331 = sphi 0, %s329
      %s332 = sphi 0, %s331
      %s346 = sphi 0, %s332
      %s350 = sphi 0, %s350
      %s352 = sphi 0, %s350
      %s353 = sphi 0, %s352
      %s367 = sphi 0, %s353
      %s371 = sphi 0, %s371
      %s373 = sphi 0, %s371
      %s374 = sphi 0, %s373
      %s388 = sphi 0, %s374
      %s392 = sphi 0, %s392
      %s394 = sphi 0, %s392
      %s395 = sphi 0, %s394
      %s409 = sphi 0, %s395
      %s413 = sphi 0, %s413
      %s415 = sphi 0, %s413
      %s416 = sphi 0, %s415
      %s430 = sphi 0, %s416
      %s434 = sphi 0, %s434
      %s436 = sphi 0, %s434
      %s437 = sphi 0, %s436
      %s451 = sphi 0, %s437
      %s455 = sphi 0, %s455
      %s457 = sphi 0, %s455
      %s458 = sphi 0, %s457
      %s472 = sphi 0, %s458
      %s476 = sphi 0, %s476
      %s478 = sphi 0, %s476
      %s479 = sphi 0, %s478
      %s493 = sphi 0, %s479
      %s497 = sphi 0, %s497
      %s499 = sphi 0, %s497
      %s500 = sphi 0, %s499
      %s514 = sphi 0, %s500
      %s518 = sphi 0, %s518
      %s520 = sphi 0, %s518
      %s521 = sphi 0, %s520
      %s535 = sphi 0, %s521
      %s539 = sphi 0, %s539
      %s541 = sphi 0, %s539
      %s542 = sphi 0, %s541
      %s556 = sphi 0, %s542
      %s560 = sphi 0, %s560
      %s562 = sphi 0, %s560
      %s563 = sphi 0, %s562
      %s577 = sphi 0, %s563
      %s581 = sphi 0, %s581
      %s583 = sphi 0, %s581
      %s584 = sphi 0, %s583
      %s598 = sphi 0, %s584
      %s602 = sphi 0, %s602
      %s604 = sphi 0, %s602
      %s605 = sphi 0, %s604
      %s619 = sphi 0, %s605
      %s623 = sphi 0, %s623
      %s625 = sphi 0, %s623
      %s626 = sphi 0, %s625
      %s640 = sphi 0, %s626
      %s644 = sphi 0, %s644
      %s646 = sphi 0, %s644
      %s647 = sphi 0, %s646
      %s661 = sphi 0, %s647
      %s665 = sphi 0, %s665
      %s667 = sphi 0, %s665
      %s668 = sphi 0, %s667
      %s682 = sphi 0, %s668
      %s686 = sphi 0, %s686
      %s688 = sphi 0, %s686
      %s689 = sphi 0, %s688
      %s703 = sphi 0, %s689
      %s707 = sphi 0, %s707
      %s709 = sphi 0, %s707
      %s710 = sphi 0, %s709
      %s724 = sphi 0, %s710
      %s728 = sphi 0, %s728
      %s730 = sphi 0, %s728
      %s731 = sphi 0, %s730
      %s745 = sphi 0, %s731
      %s749 = sphi 0, %s749
      %s751 = sphi 0, %s749
      %s752 = sphi 0, %s751
      %s766 = sphi 0, %s752
      %s772 = sphi 0, %s774
      %s775 = sphi 0, %s772
      %s776 = sphi 0, %s775
      %s792 = sphi 0, %s776
      %s798 = sphi 0, %s800
      %s801 = sphi 0, %s798
      %s802 = sphi 0, %s801
      %s818 = sphi 0, %s802
      %s824 = sphi 0, %s826
      %s827 = sphi 0, %s824
      %s828 = sphi 0, %s827
      %s844 = sphi 0, %s828
    $region4: #{forward.1} parent=1 // loop_header_branch
      %88 = sbr.rel (%p86) target = $region8
    $region5: #{forward.1} parent=1 // loop_body
      %s90 = ssub.s32 %s85, 1
      %s91 = ssub.s32 %s85, 2
      %s92 = sadd.s32 %s85, 1
      %s93 = ssub.s32 %s85, %s92
      %p94 = scmp.eq.s32.totalorder %s93, 0
      %s96 = sadd.s32 %s95, 1
      %s97 = scalar_select %p94, %s95, %s96
      %p100 = pneg %p94
      %p101 = scmp.eq.s32.totalorder %s85, 1
      %p102 = por %p100, %p101
      %p103 = scmp.ne.s32.totalorder %s95, %s98
      %p104 = scmp.eq.s32.totalorder %s85, 0
      %p105 = por %p103, %p104
      %p106 = scmp.ne.s32.totalorder %s95, %s98
      %p107 = scmp.eq.s32.totalorder %s90, 1
      %p108 = por %p106, %p107
      %p109 = scmp.ne.s32.totalorder %s98, %s99
      %p110 = scmp.eq.s32.totalorder %s90, 0
      %p111 = por %p109, %p110
      %p112 = scmp.ne.s32.totalorder %s98, %s99
      %p113 = scmp.eq.s32.totalorder %s91, 1
      %p114 = por %p112, %p113
      %p116 = scmp.ne.s32.totalorder %s99, %s115
      %p117 = scmp.eq.s32.totalorder %s91, 0
      %p118 = por %p116, %p117
      %s120 = sadd.s32 %s119, 1
      %p123 = scmp.eq.s32.totalorder %s85, 1
      %p124 = scmp.ne.s32.totalorder %s119, %s121
      %p125 = scmp.eq.s32.totalorder %s85, 0
      %p126 = por %p124, %p125
      %p127 = scmp.ne.s32.totalorder %s119, %s121
      %p128 = scmp.eq.s32.totalorder %s90, 1
      %p129 = por %p127, %p128
      %p130 = scmp.ne.s32.totalorder %s121, %s122
      %p131 = scmp.eq.s32.totalorder %s90, 0
      %p132 = por %p130, %p131
      %p133 = scmp.ne.s32.totalorder %s121, %s122
      %p134 = scmp.eq.s32.totalorder %s91, 1
      %p135 = por %p133, %p134
      %p137 = scmp.ne.s32.totalorder %s122, %s136
      %p138 = scmp.eq.s32.totalorder %s91, 0
      %p139 = por %p137, %p138
      %s141 = sadd.s32 %s140, 1
      %p144 = scmp.eq.s32.totalorder %s85, 1
      %p145 = scmp.ne.s32.totalorder %s140, %s142
      %p146 = scmp.eq.s32.totalorder %s85, 0
      %p147 = por %p145, %p146
      %p148 = scmp.ne.s32.totalorder %s140, %s142
      %p149 = scmp.eq.s32.totalorder %s90, 1
      %p150 = por %p148, %p149
      %p151 = scmp.ne.s32.totalorder %s142, %s143
      %p152 = scmp.eq.s32.totalorder %s90, 0
      %p153 = por %p151, %p152
      %p154 = scmp.ne.s32.totalorder %s142, %s143
      %p155 = scmp.eq.s32.totalorder %s91, 1
      %p156 = por %p154, %p155
      %p158 = scmp.ne.s32.totalorder %s143, %s157
      %p159 = scmp.eq.s32.totalorder %s91, 0
      %p160 = por %p158, %p159
      %s162 = sadd.s32 %s161, 1
      %p165 = scmp.eq.s32.totalorder %s85, 1
      %p166 = scmp.ne.s32.totalorder %s161, %s163
      %p167 = scmp.eq.s32.totalorder %s85, 0
      %p168 = por %p166, %p167
      %p169 = scmp.ne.s32.totalorder %s161, %s163
      %p170 = scmp.eq.s32.totalorder %s90, 1
      %p171 = por %p169, %p170
      %p172 = scmp.ne.s32.totalorder %s163, %s164
      %p173 = scmp.eq.s32.totalorder %s90, 0
      %p174 = por %p172, %p173
      %p175 = scmp.ne.s32.totalorder %s163, %s164
      %p176 = scmp.eq.s32.totalorder %s91, 1
      %p177 = por %p175, %p176
      %p179 = scmp.ne.s32.totalorder %s164, %s178
      %p180 = scmp.eq.s32.totalorder %s91, 0
      %p181 = por %p179, %p180
      %s183 = sadd.s32 %s182, 1
      %p186 = scmp.eq.s32.totalorder %s85, 1
      %p187 = scmp.ne.s32.totalorder %s182, %s184
      %p188 = scmp.eq.s32.totalorder %s85, 0
      %p189 = por %p187, %p188
      %p190 = scmp.ne.s32.totalorder %s182, %s184
      %p191 = scmp.eq.s32.totalorder %s90, 1
      %p192 = por %p190, %p191
      %p193 = scmp.ne.s32.totalorder %s184, %s185
      %p194 = scmp.eq.s32.totalorder %s90, 0
      %p195 = por %p193, %p194
      %p196 = scmp.ne.s32.totalorder %s184, %s185
      %p197 = scmp.eq.s32.totalorder %s91, 1
      %p198 = por %p196, %p197
      %p200 = scmp.ne.s32.totalorder %s185, %s199
      %p201 = scmp.eq.s32.totalorder %s91, 0
      %p202 = por %p200, %p201
      %s204 = sadd.s32 %s203, 1
      %p207 = scmp.eq.s32.totalorder %s85, 1
      %p208 = scmp.ne.s32.totalorder %s203, %s205
      %p209 = scmp.eq.s32.totalorder %s85, 0
      %p210 = por %p208, %p209
      %p211 = scmp.ne.s32.totalorder %s203, %s205
      %p212 = scmp.eq.s32.totalorder %s90, 1
      %p213 = por %p211, %p212
      %p214 = scmp.ne.s32.totalorder %s205, %s206
      %p215 = scmp.eq.s32.totalorder %s90, 0
      %p216 = por %p214, %p215
      %p217 = scmp.ne.s32.totalorder %s205, %s206
      %p218 = scmp.eq.s32.totalorder %s91, 1
      %p219 = por %p217, %p218
      %p221 = scmp.ne.s32.totalorder %s206, %s220
      %p222 = scmp.eq.s32.totalorder %s91, 0
      %p223 = por %p221, %p222
      %s225 = sadd.s32 %s224, 1
      %p228 = scmp.eq.s32.totalorder %s85, 1
      %p229 = scmp.ne.s32.totalorder %s224, %s226
      %p230 = scmp.eq.s32.totalorder %s85, 0
      %p231 = por %p229, %p230
      %p232 = scmp.ne.s32.totalorder %s224, %s226
      %p233 = scmp.eq.s32.totalorder %s90, 1
      %p234 = por %p232, %p233
      %p235 = scmp.ne.s32.totalorder %s226, %s227
      %p236 = scmp.eq.s32.totalorder %s90, 0
      %p237 = por %p235, %p236
      %p238 = scmp.ne.s32.totalorder %s226, %s227
      %p239 = scmp.eq.s32.totalorder %s91, 1
      %p240 = por %p238, %p239
      %p242 = scmp.ne.s32.totalorder %s227, %s241
      %p243 = scmp.eq.s32.totalorder %s91, 0
      %p244 = por %p242, %p243
      %s246 = sadd.s32 %s245, 1
      %p249 = scmp.eq.s32.totalorder %s85, 1
      %p250 = scmp.ne.s32.totalorder %s245, %s247
      %p251 = scmp.eq.s32.totalorder %s85, 0
      %p252 = por %p250, %p251
      %p253 = scmp.ne.s32.totalorder %s245, %s247
      %p254 = scmp.eq.s32.totalorder %s90, 1
      %p255 = por %p253, %p254
      %p256 = scmp.ne.s32.totalorder %s247, %s248
      %p257 = scmp.eq.s32.totalorder %s90, 0
      %p258 = por %p256, %p257
      %p259 = scmp.ne.s32.totalorder %s247, %s248
      %p260 = scmp.eq.s32.totalorder %s91, 1
      %p261 = por %p259, %p260
      %p263 = scmp.ne.s32.totalorder %s248, %s262
      %p264 = scmp.eq.s32.totalorder %s91, 0
      %p265 = por %p263, %p264
      %s267 = sadd.s32 %s266, 1
      %p270 = scmp.eq.s32.totalorder %s85, 1
      %p271 = scmp.ne.s32.totalorder %s266, %s268
      %p272 = scmp.eq.s32.totalorder %s85, 0
      %p273 = por %p271, %p272
      %p274 = scmp.ne.s32.totalorder %s266, %s268
      %p275 = scmp.eq.s32.totalorder %s90, 1
      %p276 = por %p274, %p275
      %p277 = scmp.ne.s32.totalorder %s268, %s269
      %p278 = scmp.eq.s32.totalorder %s90, 0
      %p279 = por %p277, %p278
      %p280 = scmp.ne.s32.totalorder %s268, %s269
      %p281 = scmp.eq.s32.totalorder %s91, 1
      %p282 = por %p280, %p281
      %p284 = scmp.ne.s32.totalorder %s269, %s283
      %p285 = scmp.eq.s32.totalorder %s91, 0
      %p286 = por %p284, %p285
      %s288 = sadd.s32 %s287, 1
      %p291 = scmp.eq.s32.totalorder %s85, 1
      %p292 = scmp.ne.s32.totalorder %s287, %s289
      %p293 = scmp.eq.s32.totalorder %s85, 0
      %p294 = por %p292, %p293
      %p295 = scmp.ne.s32.totalorder %s287, %s289
      %p296 = scmp.eq.s32.totalorder %s90, 1
      %p297 = por %p295, %p296
      %p298 = scmp.ne.s32.totalorder %s289, %s290
      %p299 = scmp.eq.s32.totalorder %s90, 0
      %p300 = por %p298, %p299
      %p301 = scmp.ne.s32.totalorder %s289, %s290
      %p302 = scmp.eq.s32.totalorder %s91, 1
      %p303 = por %p301, %p302
      %p305 = scmp.ne.s32.totalorder %s290, %s304
      %p306 = scmp.eq.s32.totalorder %s91, 0
      %p307 = por %p305, %p306
      %s309 = sadd.s32 %s308, 1
      %p312 = scmp.eq.s32.totalorder %s85, 1
      %p313 = scmp.ne.s32.totalorder %s308, %s310
      %p314 = scmp.eq.s32.totalorder %s85, 0
      %p315 = por %p313, %p314
      %p316 = scmp.ne.s32.totalorder %s308, %s310
      %p317 = scmp.eq.s32.totalorder %s90, 1
      %p318 = por %p316, %p317
      %p319 = scmp.ne.s32.totalorder %s310, %s311
      %p320 = scmp.eq.s32.totalorder %s90, 0
      %p321 = por %p319, %p320
      %p322 = scmp.ne.s32.totalorder %s310, %s311
      %p323 = scmp.eq.s32.totalorder %s91, 1
      %p324 = por %p322, %p323
      %p326 = scmp.ne.s32.totalorder %s311, %s325
      %p327 = scmp.eq.s32.totalorder %s91, 0
      %p328 = por %p326, %p327
      %s330 = sadd.s32 %s329, 1
      %p333 = scmp.eq.s32.totalorder %s85, 1
      %p334 = scmp.ne.s32.totalorder %s329, %s331
      %p335 = scmp.eq.s32.totalorder %s85, 0
      %p336 = por %p334, %p335
      %p337 = scmp.ne.s32.totalorder %s329, %s331
      %p338 = scmp.eq.s32.totalorder %s90, 1
      %p339 = por %p337, %p338
      %p340 = scmp.ne.s32.totalorder %s331, %s332
      %p341 = scmp.eq.s32.totalorder %s90, 0
      %p342 = por %p340, %p341
      %p343 = scmp.ne.s32.totalorder %s331, %s332
      %p344 = scmp.eq.s32.totalorder %s91, 1
      %p345 = por %p343, %p344
      %p347 = scmp.ne.s32.totalorder %s332, %s346
      %p348 = scmp.eq.s32.totalorder %s91, 0
      %p349 = por %p347, %p348
      %s351 = sadd.s32 %s350, 1
      %p354 = scmp.eq.s32.totalorder %s85, 1
      %p355 = scmp.ne.s32.totalorder %s350, %s352
      %p356 = scmp.eq.s32.totalorder %s85, 0
      %p357 = por %p355, %p356
      %p358 = scmp.ne.s32.totalorder %s350, %s352
      %p359 = scmp.eq.s32.totalorder %s90, 1
      %p360 = por %p358, %p359
      %p361 = scmp.ne.s32.totalorder %s352, %s353
      %p362 = scmp.eq.s32.totalorder %s90, 0
      %p363 = por %p361, %p362
      %p364 = scmp.ne.s32.totalorder %s352, %s353
      %p365 = scmp.eq.s32.totalorder %s91, 1
      %p366 = por %p364, %p365
      %p368 = scmp.ne.s32.totalorder %s353, %s367
      %p369 = scmp.eq.s32.totalorder %s91, 0
      %p370 = por %p368, %p369
      %s372 = sadd.s32 %s371, 1
      %p375 = scmp.eq.s32.totalorder %s85, 1
      %p376 = scmp.ne.s32.totalorder %s371, %s373
      %p377 = scmp.eq.s32.totalorder %s85, 0
      %p378 = por %p376, %p377
      %p379 = scmp.ne.s32.totalorder %s371, %s373
      %p380 = scmp.eq.s32.totalorder %s90, 1
      %p381 = por %p379, %p380
      %p382 = scmp.ne.s32.totalorder %s373, %s374
      %p383 = scmp.eq.s32.totalorder %s90, 0
      %p384 = por %p382, %p383
      %p385 = scmp.ne.s32.totalorder %s373, %s374
      %p386 = scmp.eq.s32.totalorder %s91, 1
      %p387 = por %p385, %p386
      %p389 = scmp.ne.s32.totalorder %s374, %s388
      %p390 = scmp.eq.s32.totalorder %s91, 0
      %p391 = por %p389, %p390
      %s393 = sadd.s32 %s392, 1
      %p396 = scmp.eq.s32.totalorder %s85, 1
      %p397 = scmp.ne.s32.totalorder %s392, %s394
      %p398 = scmp.eq.s32.totalorder %s85, 0
      %p399 = por %p397, %p398
      %p400 = scmp.ne.s32.totalorder %s392, %s394
      %p401 = scmp.eq.s32.totalorder %s90, 1
      %p402 = por %p400, %p401
      %p403 = scmp.ne.s32.totalorder %s394, %s395
      %p404 = scmp.eq.s32.totalorder %s90, 0
      %p405 = por %p403, %p404
      %p406 = scmp.ne.s32.totalorder %s394, %s395
      %p407 = scmp.eq.s32.totalorder %s91, 1
      %p408 = por %p406, %p407
      %p410 = scmp.ne.s32.totalorder %s395, %s409
      %p411 = scmp.eq.s32.totalorder %s91, 0
      %p412 = por %p410, %p411
      %s414 = sadd.s32 %s413, 1
      %p417 = scmp.eq.s32.totalorder %s85, 1
      %p418 = scmp.ne.s32.totalorder %s413, %s415
      %p419 = scmp.eq.s32.totalorder %s85, 0
      %p420 = por %p418, %p419
      %p421 = scmp.ne.s32.totalorder %s413, %s415
      %p422 = scmp.eq.s32.totalorder %s90, 1
      %p423 = por %p421, %p422
      %p424 = scmp.ne.s32.totalorder %s415, %s416
      %p425 = scmp.eq.s32.totalorder %s90, 0
      %p426 = por %p424, %p425
      %p427 = scmp.ne.s32.totalorder %s415, %s416
      %p428 = scmp.eq.s32.totalorder %s91, 1
      %p429 = por %p427, %p428
      %p431 = scmp.ne.s32.totalorder %s416, %s430
      %p432 = scmp.eq.s32.totalorder %s91, 0
      %p433 = por %p431, %p432
      %s435 = sadd.s32 %s434, 1
      %p438 = scmp.eq.s32.totalorder %s85, 1
      %p439 = scmp.ne.s32.totalorder %s434, %s436
      %p440 = scmp.eq.s32.totalorder %s85, 0
      %p441 = por %p439, %p440
      %p442 = scmp.ne.s32.totalorder %s434, %s436
      %p443 = scmp.eq.s32.totalorder %s90, 1
      %p444 = por %p442, %p443
      %p445 = scmp.ne.s32.totalorder %s436, %s437
      %p446 = scmp.eq.s32.totalorder %s90, 0
      %p447 = por %p445, %p446
      %p448 = scmp.ne.s32.totalorder %s436, %s437
      %p449 = scmp.eq.s32.totalorder %s91, 1
      %p450 = por %p448, %p449
      %p452 = scmp.ne.s32.totalorder %s437, %s451
      %p453 = scmp.eq.s32.totalorder %s91, 0
      %p454 = por %p452, %p453
      %s456 = sadd.s32 %s455, 1
      %p459 = scmp.eq.s32.totalorder %s85, 1
      %p460 = scmp.ne.s32.totalorder %s455, %s457
      %p461 = scmp.eq.s32.totalorder %s85, 0
      %p462 = por %p460, %p461
      %p463 = scmp.ne.s32.totalorder %s455, %s457
      %p464 = scmp.eq.s32.totalorder %s90, 1
      %p465 = por %p463, %p464
      %p466 = scmp.ne.s32.totalorder %s457, %s458
      %p467 = scmp.eq.s32.totalorder %s90, 0
      %p468 = por %p466, %p467
      %p469 = scmp.ne.s32.totalorder %s457, %s458
      %p470 = scmp.eq.s32.totalorder %s91, 1
      %p471 = por %p469, %p470
      %p473 = scmp.ne.s32.totalorder %s458, %s472
      %p474 = scmp.eq.s32.totalorder %s91, 0
      %p475 = por %p473, %p474
      %s477 = sadd.s32 %s476, 1
      %p480 = scmp.eq.s32.totalorder %s85, 1
      %p481 = scmp.ne.s32.totalorder %s476, %s478
      %p482 = scmp.eq.s32.totalorder %s85, 0
      %p483 = por %p481, %p482
      %p484 = scmp.ne.s32.totalorder %s476, %s478
      %p485 = scmp.eq.s32.totalorder %s90, 1
      %p486 = por %p484, %p485
      %p487 = scmp.ne.s32.totalorder %s478, %s479
      %p488 = scmp.eq.s32.totalorder %s90, 0
      %p489 = por %p487, %p488
      %p490 = scmp.ne.s32.totalorder %s478, %s479
      %p491 = scmp.eq.s32.totalorder %s91, 1
      %p492 = por %p490, %p491
      %p494 = scmp.ne.s32.totalorder %s479, %s493
      %p495 = scmp.eq.s32.totalorder %s91, 0
      %p496 = por %p494, %p495
      %s498 = sadd.s32 %s497, 1
      %p501 = scmp.eq.s32.totalorder %s85, 1
      %p502 = scmp.ne.s32.totalorder %s497, %s499
      %p503 = scmp.eq.s32.totalorder %s85, 0
      %p504 = por %p502, %p503
      %p505 = scmp.ne.s32.totalorder %s497, %s499
      %p506 = scmp.eq.s32.totalorder %s90, 1
      %p507 = por %p505, %p506
      %p508 = scmp.ne.s32.totalorder %s499, %s500
      %p509 = scmp.eq.s32.totalorder %s90, 0
      %p510 = por %p508, %p509
      %p511 = scmp.ne.s32.totalorder %s499, %s500
      %p512 = scmp.eq.s32.totalorder %s91, 1
      %p513 = por %p511, %p512
      %p515 = scmp.ne.s32.totalorder %s500, %s514
      %p516 = scmp.eq.s32.totalorder %s91, 0
      %p517 = por %p515, %p516
      %s519 = sadd.s32 %s518, 1
      %p522 = scmp.eq.s32.totalorder %s85, 1
      %p523 = scmp.ne.s32.totalorder %s518, %s520
      %p524 = scmp.eq.s32.totalorder %s85, 0
      %p525 = por %p523, %p524
      %p526 = scmp.ne.s32.totalorder %s518, %s520
      %p527 = scmp.eq.s32.totalorder %s90, 1
      %p528 = por %p526, %p527
      %p529 = scmp.ne.s32.totalorder %s520, %s521
      %p530 = scmp.eq.s32.totalorder %s90, 0
      %p531 = por %p529, %p530
      %p532 = scmp.ne.s32.totalorder %s520, %s521
      %p533 = scmp.eq.s32.totalorder %s91, 1
      %p534 = por %p532, %p533
      %p536 = scmp.ne.s32.totalorder %s521, %s535
      %p537 = scmp.eq.s32.totalorder %s91, 0
      %p538 = por %p536, %p537
      %s540 = sadd.s32 %s539, 1
      %p543 = scmp.eq.s32.totalorder %s85, 1
      %p544 = scmp.ne.s32.totalorder %s539, %s541
      %p545 = scmp.eq.s32.totalorder %s85, 0
      %p546 = por %p544, %p545
      %p547 = scmp.ne.s32.totalorder %s539, %s541
      %p548 = scmp.eq.s32.totalorder %s90, 1
      %p549 = por %p547, %p548
      %p550 = scmp.ne.s32.totalorder %s541, %s542
      %p551 = scmp.eq.s32.totalorder %s90, 0
      %p552 = por %p550, %p551
      %p553 = scmp.ne.s32.totalorder %s541, %s542
      %p554 = scmp.eq.s32.totalorder %s91, 1
      %p555 = por %p553, %p554
      %p557 = scmp.ne.s32.totalorder %s542, %s556
      %p558 = scmp.eq.s32.totalorder %s91, 0
      %p559 = por %p557, %p558
      %s561 = sadd.s32 %s560, 1
      %p564 = scmp.eq.s32.totalorder %s85, 1
      %p565 = scmp.ne.s32.totalorder %s560, %s562
      %p566 = scmp.eq.s32.totalorder %s85, 0
      %p567 = por %p565, %p566
      %p568 = scmp.ne.s32.totalorder %s560, %s562
      %p569 = scmp.eq.s32.totalorder %s90, 1
      %p570 = por %p568, %p569
      %p571 = scmp.ne.s32.totalorder %s562, %s563
      %p572 = scmp.eq.s32.totalorder %s90, 0
      %p573 = por %p571, %p572
      %p574 = scmp.ne.s32.totalorder %s562, %s563
      %p575 = scmp.eq.s32.totalorder %s91, 1
      %p576 = por %p574, %p575
      %p578 = scmp.ne.s32.totalorder %s563, %s577
      %p579 = scmp.eq.s32.totalorder %s91, 0
      %p580 = por %p578, %p579
      %s582 = sadd.s32 %s581, 1
      %p585 = scmp.eq.s32.totalorder %s85, 1
      %p586 = scmp.ne.s32.totalorder %s581, %s583
      %p587 = scmp.eq.s32.totalorder %s85, 0
      %p588 = por %p586, %p587
      %p589 = scmp.ne.s32.totalorder %s581, %s583
      %p590 = scmp.eq.s32.totalorder %s90, 1
      %p591 = por %p589, %p590
      %p592 = scmp.ne.s32.totalorder %s583, %s584
      %p593 = scmp.eq.s32.totalorder %s90, 0
      %p594 = por %p592, %p593
      %p595 = scmp.ne.s32.totalorder %s583, %s584
      %p596 = scmp.eq.s32.totalorder %s91, 1
      %p597 = por %p595, %p596
      %p599 = scmp.ne.s32.totalorder %s584, %s598
      %p600 = scmp.eq.s32.totalorder %s91, 0
      %p601 = por %p599, %p600
      %s603 = sadd.s32 %s602, 1
      %p606 = scmp.eq.s32.totalorder %s85, 1
      %p607 = scmp.ne.s32.totalorder %s602, %s604
      %p608 = scmp.eq.s32.totalorder %s85, 0
      %p609 = por %p607, %p608
      %p610 = scmp.ne.s32.totalorder %s602, %s604
      %p611 = scmp.eq.s32.totalorder %s90, 1
      %p612 = por %p610, %p611
      %p613 = scmp.ne.s32.totalorder %s604, %s605
      %p614 = scmp.eq.s32.totalorder %s90, 0
      %p615 = por %p613, %p614
      %p616 = scmp.ne.s32.totalorder %s604, %s605
      %p617 = scmp.eq.s32.totalorder %s91, 1
      %p618 = por %p616, %p617
      %p620 = scmp.ne.s32.totalorder %s605, %s619
      %p621 = scmp.eq.s32.totalorder %s91, 0
      %p622 = por %p620, %p621
      %s624 = sadd.s32 %s623, 1
      %p627 = scmp.eq.s32.totalorder %s85, 1
      %p628 = scmp.ne.s32.totalorder %s623, %s625
      %p629 = scmp.eq.s32.totalorder %s85, 0
      %p630 = por %p628, %p629
      %p631 = scmp.ne.s32.totalorder %s623, %s625
      %p632 = scmp.eq.s32.totalorder %s90, 1
      %p633 = por %p631, %p632
      %p634 = scmp.ne.s32.totalorder %s625, %s626
      %p635 = scmp.eq.s32.totalorder %s90, 0
      %p636 = por %p634, %p635
      %p637 = scmp.ne.s32.totalorder %s625, %s626
      %p638 = scmp.eq.s32.totalorder %s91, 1
      %p639 = por %p637, %p638
      %p641 = scmp.ne.s32.totalorder %s626, %s640
      %p642 = scmp.eq.s32.totalorder %s91, 0
      %p643 = por %p641, %p642
      %s645 = sadd.s32 %s644, 1
      %p648 = scmp.eq.s32.totalorder %s85, 1
      %p649 = scmp.ne.s32.totalorder %s644, %s646
      %p650 = scmp.eq.s32.totalorder %s85, 0
      %p651 = por %p649, %p650
      %p652 = scmp.ne.s32.totalorder %s644, %s646
      %p653 = scmp.eq.s32.totalorder %s90, 1
      %p654 = por %p652, %p653
      %p655 = scmp.ne.s32.totalorder %s646, %s647
      %p656 = scmp.eq.s32.totalorder %s90, 0
      %p657 = por %p655, %p656
      %p658 = scmp.ne.s32.totalorder %s646, %s647
      %p659 = scmp.eq.s32.totalorder %s91, 1
      %p660 = por %p658, %p659
      %p662 = scmp.ne.s32.totalorder %s647, %s661
      %p663 = scmp.eq.s32.totalorder %s91, 0
      %p664 = por %p662, %p663
      %s666 = sadd.s32 %s665, 1
      %p669 = scmp.eq.s32.totalorder %s85, 1
      %p670 = scmp.ne.s32.totalorder %s665, %s667
      %p671 = scmp.eq.s32.totalorder %s85, 0
      %p672 = por %p670, %p671
      %p673 = scmp.ne.s32.totalorder %s665, %s667
      %p674 = scmp.eq.s32.totalorder %s90, 1
      %p675 = por %p673, %p674
      %p676 = scmp.ne.s32.totalorder %s667, %s668
      %p677 = scmp.eq.s32.totalorder %s90, 0
      %p678 = por %p676, %p677
      %p679 = scmp.ne.s32.totalorder %s667, %s668
      %p680 = scmp.eq.s32.totalorder %s91, 1
      %p681 = por %p679, %p680
      %p683 = scmp.ne.s32.totalorder %s668, %s682
      %p684 = scmp.eq.s32.totalorder %s91, 0
      %p685 = por %p683, %p684
      %s687 = sadd.s32 %s686, 1
      %p690 = scmp.eq.s32.totalorder %s85, 1
      %p691 = scmp.ne.s32.totalorder %s686, %s688
      %p692 = scmp.eq.s32.totalorder %s85, 0
      %p693 = por %p691, %p692
      %p694 = scmp.ne.s32.totalorder %s686, %s688
      %p695 = scmp.eq.s32.totalorder %s90, 1
      %p696 = por %p694, %p695
      %p697 = scmp.ne.s32.totalorder %s688, %s689
      %p698 = scmp.eq.s32.totalorder %s90, 0
      %p699 = por %p697, %p698
      %p700 = scmp.ne.s32.totalorder %s688, %s689
      %p701 = scmp.eq.s32.totalorder %s91, 1
      %p702 = por %p700, %p701
      %p704 = scmp.ne.s32.totalorder %s689, %s703
      %p705 = scmp.eq.s32.totalorder %s91, 0
      %p706 = por %p704, %p705
      %s708 = sadd.s32 %s707, 1
      %p711 = scmp.eq.s32.totalorder %s85, 1
      %p712 = scmp.ne.s32.totalorder %s707, %s709
      %p713 = scmp.eq.s32.totalorder %s85, 0
      %p714 = por %p712, %p713
      %p715 = scmp.ne.s32.totalorder %s707, %s709
      %p716 = scmp.eq.s32.totalorder %s90, 1
      %p717 = por %p715, %p716
      %p718 = scmp.ne.s32.totalorder %s709, %s710
      %p719 = scmp.eq.s32.totalorder %s90, 0
      %p720 = por %p718, %p719
      %p721 = scmp.ne.s32.totalorder %s709, %s710
      %p722 = scmp.eq.s32.totalorder %s91, 1
      %p723 = por %p721, %p722
      %p725 = scmp.ne.s32.totalorder %s710, %s724
      %p726 = scmp.eq.s32.totalorder %s91, 0
      %p727 = por %p725, %p726
      %s729 = sadd.s32 %s728, 1
      %p732 = scmp.eq.s32.totalorder %s85, 1
      %p733 = scmp.ne.s32.totalorder %s728, %s730
      %p734 = scmp.eq.s32.totalorder %s85, 0
      %p735 = por %p733, %p734
      %p736 = scmp.ne.s32.totalorder %s728, %s730
      %p737 = scmp.eq.s32.totalorder %s90, 1
      %p738 = por %p736, %p737
      %p739 = scmp.ne.s32.totalorder %s730, %s731
      %p740 = scmp.eq.s32.totalorder %s90, 0
      %p741 = por %p739, %p740
      %p742 = scmp.ne.s32.totalorder %s730, %s731
      %p743 = scmp.eq.s32.totalorder %s91, 1
      %p744 = por %p742, %p743
      %p746 = scmp.ne.s32.totalorder %s731, %s745
      %p747 = scmp.eq.s32.totalorder %s91, 0
      %p748 = por %p746, %p747
      %s750 = sadd.s32 %s749, 1
      %p753 = scmp.eq.s32.totalorder %s85, 1
      %p754 = scmp.ne.s32.totalorder %s749, %s751
      %p755 = scmp.eq.s32.totalorder %s85, 0
      %p756 = por %p754, %p755
      %p757 = scmp.ne.s32.totalorder %s749, %s751
      %p758 = scmp.eq.s32.totalorder %s90, 1
      %p759 = por %p757, %p758
      %p760 = scmp.ne.s32.totalorder %s751, %s752
      %p761 = scmp.eq.s32.totalorder %s90, 0
      %p762 = por %p760, %p761
      %p763 = scmp.ne.s32.totalorder %s751, %s752
      %p764 = scmp.eq.s32.totalorder %s91, 1
      %p765 = por %p763, %p764
      %p767 = scmp.ne.s32.totalorder %s752, %s766
      %p768 = scmp.eq.s32.totalorder %s91, 0
      %p769 = por %p767, %p768
      %s770 = ssub.s32 %s85, %s92
      %p771 = scmp.eq.s32.totalorder %s770, 0
      %s773 = sadd.s32 %s772, 1
      %s774 = scalar_select %p771, %s772, %s773
      %p777 = pneg %p771
      %p778 = scmp.eq.s32.totalorder %s85, 1
      %p779 = por %p777, %p778
      %p780 = scmp.ne.s32.totalorder %s772, %s775
      %p781 = scmp.eq.s32.totalorder %s85, 0
      %p782 = por %p780, %p781
      %p783 = scmp.ne.s32.totalorder %s772, %s775
      %p784 = scmp.eq.s32.totalorder %s90, 1
      %p785 = por %p783, %p784
      %p786 = scmp.ne.s32.totalorder %s775, %s776
      %p787 = scmp.eq.s32.totalorder %s90, 0
      %p788 = por %p786, %p787
      %p789 = scmp.ne.s32.totalorder %s775, %s776
      %p790 = scmp.eq.s32.totalorder %s91, 1
      %p791 = por %p789, %p790
      %p793 = scmp.ne.s32.totalorder %s776, %s792
      %p794 = scmp.eq.s32.totalorder %s91, 0
      %p795 = por %p793, %p794
      %s796 = ssub.s32 %s85, %s92
      %p797 = scmp.eq.s32.totalorder %s796, 0
      %s799 = sadd.s32 %s798, 1
      %s800 = scalar_select %p797, %s798, %s799
      %p803 = pneg %p797
      %p804 = scmp.eq.s32.totalorder %s85, 1
      %p805 = por %p803, %p804
      %p806 = scmp.ne.s32.totalorder %s798, %s801
      %p807 = scmp.eq.s32.totalorder %s85, 0
      %p808 = por %p806, %p807
      %p809 = scmp.ne.s32.totalorder %s798, %s801
      %p810 = scmp.eq.s32.totalorder %s90, 1
      %p811 = por %p809, %p810
      %p812 = scmp.ne.s32.totalorder %s801, %s802
      %p813 = scmp.eq.s32.totalorder %s90, 0
      %p814 = por %p812, %p813
      %p815 = scmp.ne.s32.totalorder %s801, %s802
      %p816 = scmp.eq.s32.totalorder %s91, 1
      %p817 = por %p815, %p816
      %p819 = scmp.ne.s32.totalorder %s802, %s818
      %p820 = scmp.eq.s32.totalorder %s91, 0
      %p821 = por %p819, %p820
      %s822 = ssub.s32 %s85, %s92
      %p823 = scmp.eq.s32.totalorder %s822, 0
      %s825 = sadd.s32 %s824, 1
      %s826 = scalar_select %p823, %s824, %s825
      %p829 = pneg %p823
      %p830 = scmp.eq.s32.totalorder %s85, 1
      %p831 = por %p829, %p830
      %p832 = scmp.ne.s32.totalorder %s824, %s827
      %p833 = scmp.eq.s32.totalorder %s85, 0
      %p834 = por %p832, %p833
      %p835 = scmp.ne.s32.totalorder %s824, %s827
      %p836 = scmp.eq.s32.totalorder %s90, 1
      %p837 = por %p835, %p836
      %p838 = scmp.ne.s32.totalorder %s827, %s828
      %p839 = scmp.eq.s32.totalorder %s90, 0
      %p840 = por %p838, %p839
      %p841 = scmp.ne.s32.totalorder %s827, %s828
      %p842 = scmp.eq.s32.totalorder %s91, 1
      %p843 = por %p841, %p842
      %p845 = scmp.ne.s32.totalorder %s828, %s844
      %p846 = scmp.eq.s32.totalorder %s91, 0
      %p847 = por %p845, %p846
      %p848 = scmp.le.s32.totalorder 1, %s85
      %p849 = scmp.lt.s32.totalorder %s85, 3
      %p850 = pnand %p848, %p849
      %p851 = pneg %p850
      // Predicated region
      $region9: #{forward.1} parent=5 // pred_check
        _
      $region10: #{forward.1} parent=5 // pred_check_branch
        %853 = sbr.rel (%p850) target = $region12
      $region11: #{forward.1} parent=5 // pred_region
        %s854 = ssub.s32 %s85, 1
        // Predicated region
        $region13: #{forward.1} parent=11 // pred_check
          %p855 = pneg %p132
        $region14: #{forward.1} parent=11 // pred_check_branch
          %857 = sbr.rel (%p855) target = $region16
        $region15: #{forward.1} parent=11 // pred_region
          %s859 = ssub.s32 64, 64
          %860 = vsyncadd [#allocation3], %s859
          %s862 = sshll.u32 [#allocation2], 4
          %s863 = int_to_ptr.vmem [resolvable:$true] %s862
          %865 = dma.hbm_to_vmem [thread:$0]  %s3, 64, %s863, [#allocation3]
        $region16: #{forward.1} parent=11 // pred_fallthru
          _
        // Predicated region
        $region17: #{forward.1} parent=11 // pred_check
          %p866 = pneg %p153
        $region18: #{forward.1} parent=11 // pred_check_branch
          %868 = sbr.rel (%p866) target = $region20
        $region19: #{forward.1} parent=11 // pred_region
          _
        $region20: #{forward.1} parent=11 // pred_fallthru
          _
        // Predicated region
        $region21: #{forward.1} parent=11 // pred_check
          %p869 = pneg %p174
        $region22: #{forward.1} parent=11 // pred_check_branch
          %871 = sbr.rel (%p869) target = $region24
        $region23: #{forward.1} parent=11 // pred_region
          _
        $region24: #{forward.1} parent=11 // pred_fallthru
          _
        // Predicated region
        $region25: #{forward.1} parent=11 // pred_check
          %p872 = pneg %p195
        $region26: #{forward.1} parent=11 // pred_check_branch
          %874 = sbr.rel (%p872) target = $region28
        $region27: #{forward.1} parent=11 // pred_region
          _
        $region28: #{forward.1} parent=11 // pred_fallthru
          _
        // Predicated region
        $region29: #{forward.1} parent=11 // pred_check
          %p875 = pneg %p216
        $region30: #{forward.1} parent=11 // pred_check_branch
          %877 = sbr.rel (%p875) target = $region32
        $region31: #{forward.1} parent=11 // pred_region
          %s879 = ssub.s32 512, 512
          %880 = vsyncadd [#allocation5], %s879
          %s881 = sshll.u32 [#allocation4], 4
          %s882 = int_to_ptr.vmem [resolvable:$true] %s881
          %887 = dma.hbm_to_vmem [thread:$0]  %s11, 512, %s882, [#allocation5], 128, 128, 8
        $region32: #{forward.1} parent=11 // pred_fallthru
          _
        // Predicated region
        $region33: #{forward.1} parent=11 // pred_check
          %p888 = pneg %p237
        $region34: #{forward.1} parent=11 // pred_check_branch
          %890 = sbr.rel (%p888) target = $region36
        $region35: #{forward.1} parent=11 // pred_region
          _
        $region36: #{forward.1} parent=11 // pred_fallthru
          _
        // Predicated region
        $region37: #{forward.1} parent=11 // pred_check
          %p891 = pneg %p258
        $region38: #{forward.1} parent=11 // pred_check_branch
          %893 = sbr.rel (%p891) target = $region40
        $region39: #{forward.1} parent=11 // pred_region
          %s895 = ssub.s32 768, 768
          %896 = vsyncadd [#allocation5], %s895
          %s897 = sshll.u32 [#allocation6], 4
          %s898 = int_to_ptr.vmem [resolvable:$true] %s897
          %903 = dma.hbm_to_vmem [thread:$0]  %s15, 768, %s898, [#allocation5], 192, 192, 12
        $region40: #{forward.1} parent=11 // pred_fallthru
          _
        // Predicated region
        $region41: #{forward.1} parent=11 // pred_check
          %p904 = pneg %p279
        $region42: #{forward.1} parent=11 // pred_check_branch
          %906 = sbr.rel (%p904) target = $region44
        $region43: #{forward.1} parent=11 // pred_region
          _
        $region44: #{forward.1} parent=11 // pred_fallthru
          _
        // Predicated region
        $region45: #{forward.1} parent=11 // pred_check
          %p907 = pneg %p300
        $region46: #{forward.1} parent=11 // pred_check_branch
          %909 = sbr.rel (%p907) target = $region48
        $region47: #{forward.1} parent=11 // pred_region
          %s911 = ssub.s32 384, 384
          %912 = vsyncadd [#allocation8], %s911
          %s913 = sshll.u32 [#allocation7], 4
          %s914 = int_to_ptr.vmem [resolvable:$true] %s913
          %919 = dma.hbm_to_vmem [thread:$0]  %s19, 384, %s914, [#allocation8], 192, 192, 12
        $region48: #{forward.1} parent=11 // pred_fallthru
          _
        // Predicated region
        $region49: #{forward.1} parent=11 // pred_check
          %p920 = pneg %p321
        $region50: #{forward.1} parent=11 // pred_check_branch
          %922 = sbr.rel (%p920) target = $region52
        $region51: #{forward.1} parent=11 // pred_region
          _
        $region52: #{forward.1} parent=11 // pred_fallthru
          _
        // Predicated region
        $region53: #{forward.1} parent=11 // pred_check
          %p923 = pneg %p342
        $region54: #{forward.1} parent=11 // pred_check_branch
          %925 = sbr.rel (%p923) target = $region56
        $region55: #{forward.1} parent=11 // pred_region
          %s927 = ssub.s32 256, 256
          %928 = vsyncadd [#allocation8], %s927
          %s929 = sshll.u32 [#allocation9], 4
          %s930 = int_to_ptr.vmem [resolvable:$true] %s929
          %935 = dma.hbm_to_vmem [thread:$0]  %s23, 256, %s930, [#allocation8], 128, 128, 8
        $region56: #{forward.1} parent=11 // pred_fallthru
          _
        // Predicated region
        $region57: #{forward.1} parent=11 // pred_check
          %p936 = pneg %p363
        $region58: #{forward.1} parent=11 // pred_check_branch
          %938 = sbr.rel (%p936) target = $region60
        $region59: #{forward.1} parent=11 // pred_region
          _
        $region60: #{forward.1} parent=11 // pred_fallthru
          _
        // Predicated region
        $region61: #{forward.1} parent=11 // pred_check
          %p939 = pneg %p384
        $region62: #{forward.1} parent=11 // pred_check_branch
          %941 = sbr.rel (%p939) target = $region64
        $region63: #{forward.1} parent=11 // pred_region
          %s943 = ssub.s32 128, 128
          %944 = vsyncadd [#allocation11], %s943
          %s946 = sshll.u32 [#allocation10], 4
          %s947 = int_to_ptr.vmem [resolvable:$true] %s946
          %949 = dma.hbm_to_vmem [thread:$0]  %s27, 128, %s947, [#allocation11]
        $region64: #{forward.1} parent=11 // pred_fallthru
          _
        // Predicated region
        $region65: #{forward.1} parent=11 // pred_check
          %p950 = pneg %p405
        $region66: #{forward.1} parent=11 // pred_check_branch
          %952 = sbr.rel (%p950) target = $region68
        $region67: #{forward.1} parent=11 // pred_region
          _
        $region68: #{forward.1} parent=11 // pred_fallthru
          _
        // Predicated region
        $region69: #{forward.1} parent=11 // pred_check
          %p953 = pneg %p426
        $region70: #{forward.1} parent=11 // pred_check_branch
          %955 = sbr.rel (%p953) target = $region72
        $region71: #{forward.1} parent=11 // pred_region
          %s957 = ssub.s32 64, 64
          %958 = vsyncadd [#allocation11], %s957
          %s960 = sshll.u32 [#allocation12], 4
          %s961 = int_to_ptr.vmem [resolvable:$true] %s960
          %963 = dma.hbm_to_vmem [thread:$0]  %s31, 64, %s961, [#allocation11]
        $region72: #{forward.1} parent=11 // pred_fallthru
          _
        // Predicated region
        $region73: #{forward.1} parent=11 // pred_check
          %p964 = pneg %p447
        $region74: #{forward.1} parent=11 // pred_check_branch
          %966 = sbr.rel (%p964) target = $region76
        $region75: #{forward.1} parent=11 // pred_region
          _
        $region76: #{forward.1} parent=11 // pred_fallthru
          _
        // Predicated region
        $region77: #{forward.1} parent=11 // pred_check
          %p967 = pneg %p468
        $region78: #{forward.1} parent=11 // pred_check_branch
          %969 = sbr.rel (%p967) target = $region80
        $region79: #{forward.1} parent=11 // pred_region
          _
        $region80: #{forward.1} parent=11 // pred_fallthru
          _
        // Predicated region
        $region81: #{forward.1} parent=11 // pred_check
          %p970 = pneg %p489
        $region82: #{forward.1} parent=11 // pred_check_branch
          %972 = sbr.rel (%p970) target = $region84
        $region83: #{forward.1} parent=11 // pred_region
          %s974 = ssub.s32 48, 48
          %975 = vsyncadd [#allocation14], %s974
          %s977 = sshll.u32 [#allocation13], 4
          %s978 = int_to_ptr.vmem [resolvable:$true] %s977
          %980 = dma.hbm_to_vmem [thread:$0]  %s37, 48, %s978, [#allocation14]
        $region84: #{forward.1} parent=11 // pred_fallthru
          _
        // Predicated region
        $region85: #{forward.1} parent=11 // pred_check
          %p981 = pneg %p510
        $region86: #{forward.1} parent=11 // pred_check_branch
          %983 = sbr.rel (%p981) target = $region88
        $region87: #{forward.1} parent=11 // pred_region
          %s985 = ssub.s32 4608, 4608
          %986 = vsyncadd [#allocation14], %s985
          %s987 = sshll.u32 [#allocation15], 4
          %s988 = int_to_ptr.vmem [resolvable:$true] %s987
          %993 = dma.hbm_to_vmem [thread:$0]  %s39, 4608, %s988, [#allocation14], 128, 128, 8
        $region88: #{forward.1} parent=11 // pred_fallthru
          _
        // Predicated region
        $region89: #{forward.1} parent=11 // pred_check
          %p994 = pneg %p531
        $region90: #{forward.1} parent=11 // pred_check_branch
          %996 = sbr.rel (%p994) target = $region92
        $region91: #{forward.1} parent=11 // pred_region
          %s998 = ssub.s32 48, 48
          %999 = vsyncadd [#allocation17], %s998
          %s1001 = sshll.u32 [#allocation16], 4
          %s1002 = int_to_ptr.vmem [resolvable:$true] %s1001
          %1004 = dma.hbm_to_vmem [thread:$0]  %s41, 48, %s1002, [#allocation17]
        $region92: #{forward.1} parent=11 // pred_fallthru
          _
        // Predicated region
        $region93: #{forward.1} parent=11 // pred_check
          %p1005 = pneg %p552
        $region94: #{forward.1} parent=11 // pred_check_branch
          %1007 = sbr.rel (%p1005) target = $region96
        $region95: #{forward.1} parent=11 // pred_region
          _
        $region96: #{forward.1} parent=11 // pred_fallthru
          _
        // Predicated region
        $region97: #{forward.1} parent=11 // pred_check
          %p1008 = pneg %p573
        $region98: #{forward.1} parent=11 // pred_check_branch
          %1010 = sbr.rel (%p1008) target = $region100
        $region99: #{forward.1} parent=11 // pred_region
          %s1012 = ssub.s32 16, 16
          %1013 = vsyncadd [#allocation17], %s1012
          %s1015 = sshll.u32 [#allocation18], 4
          %s1016 = int_to_ptr.vmem [resolvable:$true] %s1015
          %1018 = dma.hbm_to_vmem [thread:$0]  %s45, 16, %s1016, [#allocation17]
        $region100: #{forward.1} parent=11 // pred_fallthru
          _
        // Predicated region
        $region101: #{forward.1} parent=11 // pred_check
          %p1019 = pneg %p594
        $region102: #{forward.1} parent=11 // pred_check_branch
          %1021 = sbr.rel (%p1019) target = $region104
        $region103: #{forward.1} parent=11 // pred_region
          %s1023 = ssub.s32 384, 384
          %1024 = vsyncadd [#allocation20], %s1023
          %s1025 = sshll.u32 [#allocation19], 4
          %s1026 = int_to_ptr.vmem [resolvable:$true] %s1025
          %1031 = dma.hbm_to_vmem [thread:$0]  %s47, 384, %s1026, [#allocation20], 128, 128, 8
        $region104: #{forward.1} parent=11 // pred_fallthru
          _
        // Predicated region
        $region105: #{forward.1} parent=11 // pred_check
          %p1032 = pneg %p615
        $region106: #{forward.1} parent=11 // pred_check_branch
          %1034 = sbr.rel (%p1032) target = $region108
        $region107: #{forward.1} parent=11 // pred_region
          %s1036 = ssub.s32 384, 384
          %1037 = vsyncadd [#allocation20], %s1036
          %s1038 = sshll.u32 [#allocation21], 4
          %s1039 = int_to_ptr.vmem [resolvable:$true] %s1038
          %1044 = dma.hbm_to_vmem [thread:$0]  %s49, 384, %s1039, [#allocation20], 128, 128, 8
        $region108: #{forward.1} parent=11 // pred_fallthru
          _
        // Predicated region
        $region109: #{forward.1} parent=11 // pred_check
          %p1045 = pneg %p636
        $region110: #{forward.1} parent=11 // pred_check_branch
          %1047 = sbr.rel (%p1045) target = $region112
        $region111: #{forward.1} parent=11 // pred_region
          _
        $region112: #{forward.1} parent=11 // pred_fallthru
          _
        // Predicated region
        $region113: #{forward.1} parent=11 // pred_check
          %p1048 = pneg %p657
        $region114: #{forward.1} parent=11 // pred_check_branch
          %1050 = sbr.rel (%p1048) target = $region116
        $region115: #{forward.1} parent=11 // pred_region
          %s1052 = ssub.s32 384, 384
          %1053 = vsyncadd [#allocation23], %s1052
          %s1054 = sshll.u32 [#allocation22], 4
          %s1055 = int_to_ptr.vmem [resolvable:$true] %s1054
          %1060 = dma.hbm_to_vmem [thread:$0]  %s53, 384, %s1055, [#allocation23], 128, 128, 8
        $region116: #{forward.1} parent=11 // pred_fallthru
          _
        // Predicated region
        $region117: #{forward.1} parent=11 // pred_check
          %p1061 = pneg %p678
        $region118: #{forward.1} parent=11 // pred_check_branch
          %1063 = sbr.rel (%p1061) target = $region120
        $region119: #{forward.1} parent=11 // pred_region
          _
        $region120: #{forward.1} parent=11 // pred_fallthru
          _
        // Predicated region
        $region121: #{forward.1} parent=11 // pred_check
          %p1064 = pneg %p699
        $region122: #{forward.1} parent=11 // pred_check_branch
          %1066 = sbr.rel (%p1064) target = $region124
        $region123: #{forward.1} parent=11 // pred_region
          _
        $region124: #{forward.1} parent=11 // pred_fallthru
          _
        // Predicated region
        $region125: #{forward.1} parent=11 // pred_check
          %p1067 = pneg %p720
        $region126: #{forward.1} parent=11 // pred_check_branch
          %1069 = sbr.rel (%p1067) target = $region128
        $region127: #{forward.1} parent=11 // pred_region
          _
        $region128: #{forward.1} parent=11 // pred_fallthru
          _
        // Predicated region
        $region129: #{forward.1} parent=11 // pred_check
          %p1070 = pneg %p741
        $region130: #{forward.1} parent=11 // pred_check_branch
          %1072 = sbr.rel (%p1070) target = $region132
        $region131: #{forward.1} parent=11 // pred_region
          %s1074 = ssub.s32 3840, 3840
          %1075 = vsyncadd [#allocation23], %s1074
          %s1076 = sshll.u32 [#allocation24], 4
          %s1077 = int_to_ptr.vmem [resolvable:$true] %s1076
          %1082 = dma.hbm_to_vmem [thread:$0]  %s61, 3840, %s1077, [#allocation23], 384, 384, 24
        $region132: #{forward.1} parent=11 // pred_fallthru
          _
        // Predicated region
        $region133: #{forward.1} parent=11 // pred_check
          %p1083 = pneg %p762
        $region134: #{forward.1} parent=11 // pred_check_branch
          %1085 = sbr.rel (%p1083) target = $region136
        $region135: #{forward.1} parent=11 // pred_region
          %s1087 = ssub.s32 9216, 9216
          %1088 = vsyncadd [#allocation26], %s1087
          %s1089 = sshll.u32 [#allocation25], 4
          %s1090 = int_to_ptr.vmem [resolvable:$true] %s1089
          %1095 = dma.hbm_to_vmem [thread:$0]  %s63, 9216, %s1090, [#allocation26], 256, 256, 16
        $region136: #{forward.1} parent=11 // pred_fallthru
          _
      $region12: #{forward.1} parent=5 // pred_fallthru
        _
      %p1096 = scmp.lt.s32.totalorder %s85, 2
      // Predicated region
      $region137: #{forward.1} parent=5 // pred_check
        %p1097 = pneg %p1096
      $region138: #{forward.1} parent=5 // pred_check_branch
        %1099 = sbr.rel (%p1097) target = $region140
      $region139: #{forward.1} parent=5 // pred_region
        // Predicated region
        $region141: #{forward.1} parent=139 // pred_check
          %p1100 = pneg %p105
        $region142: #{forward.1} parent=139 // pred_check_branch
          %1102 = sbr.rel (%p1100) target = $region144
        $region143: #{forward.1} parent=139 // pred_region
          %p1103 = scmp.lt.s32.totalorder %s85, 1
          %s1104 = scalar_select %p1103, %s85, 1
          %s1105 = smul.addr %s1104, 3
          %s1106 = smul.addr %s1105, 4
          %s1107 = scalar_lea.vmem %s1, %s1106
        $region144: #{forward.1} parent=139 // pred_fallthru
          _
      $region140: #{forward.1} parent=5 // pred_fallthru
        _
      %p1108 = scmp.le.s32.totalorder 1, %s85
      %p1109 = scmp.lt.s32.totalorder %s85, 3
      %p1110 = pnand %p1108, %p1109
      %p1111 = pneg %p1110
      // Predicated region
      $region145: #{forward.1} parent=5 // pred_check
        _
      $region146: #{forward.1} parent=5 // pred_check_branch
        %1113 = sbr.rel (%p1110) target = $region148
      $region147: #{forward.1} parent=5 // pred_region
        %s1114 = ssub.s32 %s85, 1
        // Predicated region
        $region149: #{forward.1} parent=147 // pred_check
          %p1115 = pneg %p132
        $region150: #{forward.1} parent=147 // pred_check_branch
          %1117 = sbr.rel (%p1115) target = $region152
        $region151: #{forward.1} parent=147 // pred_region
          %1118 = dma.done [#allocation3], 64
        $region152: #{forward.1} parent=147 // pred_fallthru
          _
        // Predicated region
        $region153: #{forward.1} parent=147 // pred_check
          %p1119 = pneg %p216
        $region154: #{forward.1} parent=147 // pred_check_branch
          %1121 = sbr.rel (%p1119) target = $region156
        $region155: #{forward.1} parent=147 // pred_region
          %1122 = dma.done [#allocation5], 512
        $region156: #{forward.1} parent=147 // pred_fallthru
          _
        // Predicated region
        $region157: #{forward.1} parent=147 // pred_check
          %p1123 = pneg %p258
        $region158: #{forward.1} parent=147 // pred_check_branch
          %1125 = sbr.rel (%p1123) target = $region160
        $region159: #{forward.1} parent=147 // pred_region
          %1126 = dma.done [#allocation5], 768
        $region160: #{forward.1} parent=147 // pred_fallthru
          _
        // Predicated region
        $region161: #{forward.1} parent=147 // pred_check
          %p1127 = pneg %p300
        $region162: #{forward.1} parent=147 // pred_check_branch
          %1129 = sbr.rel (%p1127) target = $region164
        $region163: #{forward.1} parent=147 // pred_region
          %1130 = dma.done [#allocation8], 384
        $region164: #{forward.1} parent=147 // pred_fallthru
          _
        // Predicated region
        $region165: #{forward.1} parent=147 // pred_check
          %p1131 = pneg %p342
        $region166: #{forward.1} parent=147 // pred_check_branch
          %1133 = sbr.rel (%p1131) target = $region168
        $region167: #{forward.1} parent=147 // pred_region
          %1134 = dma.done [#allocation8], 256
        $region168: #{forward.1} parent=147 // pred_fallthru
          _
        // Predicated region
        $region169: #{forward.1} parent=147 // pred_check
          %p1135 = pneg %p384
        $region170: #{forward.1} parent=147 // pred_check_branch
          %1137 = sbr.rel (%p1135) target = $region172
        $region171: #{forward.1} parent=147 // pred_region
          %1138 = dma.done [#allocation11], 128
        $region172: #{forward.1} parent=147 // pred_fallthru
          _
        // Predicated region
        $region173: #{forward.1} parent=147 // pred_check
          %p1139 = pneg %p426
        $region174: #{forward.1} parent=147 // pred_check_branch
          %1141 = sbr.rel (%p1139) target = $region176
        $region175: #{forward.1} parent=147 // pred_region
          %1142 = dma.done [#allocation11], 64
        $region176: #{forward.1} parent=147 // pred_fallthru
          _
        // Predicated region
        $region177: #{forward.1} parent=147 // pred_check
          %p1143 = pneg %p489
        $region178: #{forward.1} parent=147 // pred_check_branch
          %1145 = sbr.rel (%p1143) target = $region180
        $region179: #{forward.1} parent=147 // pred_region
          %1146 = dma.done [#allocation14], 48
        $region180: #{forward.1} parent=147 // pred_fallthru
          _
        // Predicated region
        $region181: #{forward.1} parent=147 // pred_check
          %p1147 = pneg %p510
        $region182: #{forward.1} parent=147 // pred_check_branch
          %1149 = sbr.rel (%p1147) target = $region184
        $region183: #{forward.1} parent=147 // pred_region
          %1150 = dma.done [#allocation14], 4608
        $region184: #{forward.1} parent=147 // pred_fallthru
          _
        // Predicated region
        $region185: #{forward.1} parent=147 // pred_check
          %p1151 = pneg %p531
        $region186: #{forward.1} parent=147 // pred_check_branch
          %1153 = sbr.rel (%p1151) target = $region188
        $region187: #{forward.1} parent=147 // pred_region
          %1154 = dma.done [#allocation17], 48
        $region188: #{forward.1} parent=147 // pred_fallthru
          _
        // Predicated region
        $region189: #{forward.1} parent=147 // pred_check
          %p1155 = pneg %p573
        $region190: #{forward.1} parent=147 // pred_check_branch
          %1157 = sbr.rel (%p1155) target = $region192
        $region191: #{forward.1} parent=147 // pred_region
          %1158 = dma.done [#allocation17], 16
        $region192: #{forward.1} parent=147 // pred_fallthru
          _
        // Predicated region
        $region193: #{forward.1} parent=147 // pred_check
          %p1159 = pneg %p594
        $region194: #{forward.1} parent=147 // pred_check_branch
          %1161 = sbr.rel (%p1159) target = $region196
        $region195: #{forward.1} parent=147 // pred_region
          %1162 = dma.done [#allocation20], 384
        $region196: #{forward.1} parent=147 // pred_fallthru
          _
        // Predicated region
        $region197: #{forward.1} parent=147 // pred_check
          %p1163 = pneg %p615
        $region198: #{forward.1} parent=147 // pred_check_branch
          %1165 = sbr.rel (%p1163) target = $region200
        $region199: #{forward.1} parent=147 // pred_region
          %1166 = dma.done [#allocation20], 384
        $region200: #{forward.1} parent=147 // pred_fallthru
          _
        // Predicated region
        $region201: #{forward.1} parent=147 // pred_check
          %p1167 = pneg %p657
        $region202: #{forward.1} parent=147 // pred_check_branch
          %1169 = sbr.rel (%p1167) target = $region204
        $region203: #{forward.1} parent=147 // pred_region
          %1170 = dma.done [#allocation23], 384
        $region204: #{forward.1} parent=147 // pred_fallthru
          _
        // Predicated region
        $region205: #{forward.1} parent=147 // pred_check
          %p1171 = pneg %p741
        $region206: #{forward.1} parent=147 // pred_check_branch
          %1173 = sbr.rel (%p1171) target = $region208
        $region207: #{forward.1} parent=147 // pred_region
          %1174 = dma.done [#allocation23], 3840
        $region208: #{forward.1} parent=147 // pred_fallthru
          _
        // Predicated region
        $region209: #{forward.1} parent=147 // pred_check
          %p1175 = pneg %p762
        $region210: #{forward.1} parent=147 // pred_check_branch
          %1177 = sbr.rel (%p1175) target = $region212
        $region211: #{forward.1} parent=147 // pred_region
          %1178 = dma.done [#allocation26], 9216
        $region212: #{forward.1} parent=147 // pred_fallthru
          _
        %p1179 = scmp.lt.s32.totalorder %s90, 1
        %s1180 = scalar_select %p1179, %s90, 1
        %s1181 = smul.addr %s1180, 3
        %s1182 = smul.addr %s1181, 4
        %s1183 = scalar_lea.vmem %s1, %s1182
        %p1184 = pneg %p111
        %p1185 = pneg %p108
        %p1186 = pneg %p132
        %p1187 = pneg %p129
        %p1188 = pneg %p153
        %p1189 = pneg %p150
        %p1190 = pneg %p174
        %p1191 = pneg %p171
        %p1192 = pneg %p195
        %p1193 = pneg %p192
        %p1194 = pneg %p216
        %p1195 = pneg %p213
        %p1196 = pneg %p237
        %p1197 = pneg %p234
        %p1198 = pneg %p258
        %p1199 = pneg %p255
        %p1200 = pneg %p279
        %p1201 = pneg %p276
        %p1202 = pneg %p300
        %p1203 = pneg %p297
        %p1204 = pneg %p321
        %p1205 = pneg %p318
        %p1206 = pneg %p342
        %p1207 = pneg %p339
        %p1208 = pneg %p363
        %p1209 = pneg %p360
        %p1210 = pneg %p384
        %p1211 = pneg %p381
        %p1212 = pneg %p405
        %p1213 = pneg %p402
        %p1214 = pneg %p426
        %p1215 = pneg %p423
        %p1216 = pneg %p447
        %p1217 = pneg %p444
        %p1218 = pneg %p468
        %p1219 = pneg %p465
        %p1220 = pneg %p489
        %p1221 = pneg %p486
        %p1222 = pneg %p510
        %p1223 = pneg %p507
        %p1224 = pneg %p531
        %p1225 = pneg %p528
        %p1226 = pneg %p552
        %p1227 = pneg %p549
        %p1228 = pneg %p573
        %p1229 = pneg %p570
        %p1230 = pneg %p594
        %p1231 = pneg %p591
        %p1232 = pneg %p615
        %p1233 = pneg %p612
        %p1234 = pneg %p636
        %p1235 = pneg %p633
        %p1236 = pneg %p657
        %p1237 = pneg %p654
        %p1238 = pneg %p678
        %p1239 = pneg %p675
        %p1240 = pneg %p699
        %p1241 = pneg %p696
        %p1242 = pneg %p720
        %p1243 = pneg %p717
        %p1244 = pneg %p741
        %p1245 = pneg %p738
        %p1246 = pneg %p762
        %p1247 = pneg %p759
        %p1248 = pneg %p788
        %p1249 = pneg %p785
        %p1250 = scmp.lt.s32.totalorder %s90, 1
        %s1251 = scalar_select %p1250, %s90, 1
        %s1252 = smul.addr %s1251, 2
        %s1253 = smul.addr %s1252, 8
        %s1254 = scalar_lea.vmem %s65, %s1253
        %p1255 = pneg %p814
        %p1256 = pneg %p811
        %p1257 = scmp.lt.s32.totalorder %s90, 1
        %s1258 = scalar_select %p1257, %s90, 1
        %s1259 = smul.addr %s1258, 2
        %s1260 = smul.addr %s1259, 8
        %s1261 = scalar_lea.vmem %s67, %s1260
        %p1262 = pneg %p840
        %p1263 = pneg %p837
        %p1264 = scmp.lt.s32.totalorder %s90, 1
        %s1265 = scalar_select %p1264, %s90, 1
        %s1266 = smul.addr %s1265, 4
        %s1267 = smul.addr %s1266, 8
        %s1268 = scalar_lea.vmem %s69, %s1267
        %p1269 = scmp.lt.s32.totalorder %s90, 1
        %s1270 = scalar_select %p1269, %s90, 1
        %s1271 = smul.addr %s1270, 3
        %s1272 = smul.addr %s1271, 4
        %s1273 = scalar_lea.vmem %s1, %s1272
        %p1274 = scmp.lt.s32.totalorder %s90, 1
        %s1275 = scalar_select %p1274, %s90, 1
        %s1276 = smul.addr %s1275, 2
        %s1277 = smul.addr %s1276, 8
        %s1278 = scalar_lea.vmem %s65, %s1277
        %p1279 = scmp.lt.s32.totalorder %s90, 1
        %s1280 = scalar_select %p1279, %s90, 1
        %s1281 = smul.addr %s1280, 2
        %s1282 = smul.addr %s1281, 8
        %s1283 = scalar_lea.vmem %s67, %s1282
        %p1284 = scmp.lt.s32.totalorder %s90, 1
        %s1285 = scalar_select %p1284, %s90, 1
        %s1286 = smul.addr %s1285, 4
        %s1287 = smul.addr %s1286, 8
        %s1288 = scalar_lea.vmem %s69, %s1287
        %v1290 = vld [vmem:[%s1273] sm:$0xff]
        %v1291 = vld [vmem:[%s1273 + $0x8] sm:$0xf]
        %v1292 = vunpack.c.l.bf16 %v1290
        %v1293 = vunpack.c.h.bf16 %v1290
        %v1294 = vunpack.c.l.bf16 %v1291
        %v1295 = vld [vmem:[#allocation2] sm:$0xf]
        %v1296 = vld [vmem:[%s5] sm:$0xff]
        %v1297 = vld [vmem:[#allocation13] sm:$0x7]
        %1301 = vrot.lane.b32.xlu0 %v1292, 127
        %v1302 = vpop.permute.xlu0 %1301
        %1303 = vrot.lane.b32.xlu0 %v1293, 127
        %v1304 = vpop.permute.xlu0 %1303
        %1305 = vrot.lane.b32.xlu0 %v1294, 127
        %v1306 = vpop.permute.xlu0 %1305
        %vm1307 = vcmask 1039360
        %v1308 = vsel %vm1307, %v1302, %v1304
        %v1309 = vsel %vm1307, %v1304, %v1306
        %1313 = vrot.lane.b32.xlu0 %v1292, 126
        %v1314 = vpop.permute.xlu0 %1313
        %1315 = vrot.lane.b32.xlu0 %v1293, 126
        %v1316 = vpop.permute.xlu0 %1315
        %1317 = vrot.lane.b32.xlu0 %v1294, 126
        %v1318 = vpop.permute.xlu0 %1317
        %vm1319 = vcmask 1031168
        %v1320 = vsel %vm1319, %v1314, %v1316
        %v1321 = vsel %vm1319, %v1316, %v1318
        %1325 = vrot.lane.b32.xlu0 %v1292, 110
        %v1326 = vpop.permute.xlu0 %1325
        %1327 = vrot.lane.b32.xlu0 %v1293, 110
        %v1328 = vpop.permute.xlu0 %1327
        %1329 = vrot.lane.b32.xlu0 %v1294, 110
        %v1330 = vpop.permute.xlu0 %1329
        %vm1331 = vcmask 900096
        %v1332 = vsel %vm1331, %v1326, %v1328
        %v1333 = vsel %vm1331, %v1328, %v1330
        %1337 = vrot.lane.b32.xlu0 %v1292, 109
        %v1338 = vpop.permute.xlu0 %1337
        %1339 = vrot.lane.b32.xlu0 %v1293, 109
        %v1340 = vpop.permute.xlu0 %1339
        %1341 = vrot.lane.b32.xlu0 %v1294, 109
        %v1342 = vpop.permute.xlu0 %1341
        %vm1343 = vcmask 891904
        %v1344 = vsel %vm1343, %v1338, %v1340
        %v1345 = vsel %vm1343, %v1340, %v1342
        %1349 = vrot.lane.b32.xlu0 %v1292, 108
        %v1350 = vpop.permute.xlu0 %1349
        %1351 = vrot.lane.b32.xlu0 %v1293, 108
        %v1352 = vpop.permute.xlu0 %1351
        %1353 = vrot.lane.b32.xlu0 %v1294, 108
        %v1354 = vpop.permute.xlu0 %1353
        %vm1355 = vcmask 883712
        %v1356 = vsel %vm1355, %v1350, %v1352
        %v1357 = vsel %vm1355, %v1352, %v1354
        %1361 = vrot.lane.b32.xlu0 %v1292, 92
        %v1362 = vpop.permute.xlu0 %1361
        %1363 = vrot.lane.b32.xlu0 %v1293, 92
        %v1364 = vpop.permute.xlu0 %1363
        %1365 = vrot.lane.b32.xlu0 %v1294, 92
        %v1366 = vpop.permute.xlu0 %1365
        %vm1367 = vcmask 752640
        %v1368 = vsel %vm1367, %v1362, %v1364
        %v1369 = vsel %vm1367, %v1364, %v1366
        %1373 = vrot.lane.b32.xlu0 %v1292, 91
        %v1374 = vpop.permute.xlu0 %1373
        %1375 = vrot.lane.b32.xlu0 %v1293, 91
        %v1376 = vpop.permute.xlu0 %1375
        %1377 = vrot.lane.b32.xlu0 %v1294, 91
        %v1378 = vpop.permute.xlu0 %1377
        %vm1379 = vcmask 744448
        %v1380 = vsel %vm1379, %v1374, %v1376
        %v1381 = vsel %vm1379, %v1376, %v1378
        %1385 = vrot.lane.b32.xlu0 %v1292, 90
        %v1386 = vpop.permute.xlu0 %1385
        %1387 = vrot.lane.b32.xlu0 %v1293, 90
        %v1388 = vpop.permute.xlu0 %1387
        %1389 = vrot.lane.b32.xlu0 %v1294, 90
        %v1390 = vpop.permute.xlu0 %1389
        %vm1391 = vcmask 736256
        %v1392 = vsel %vm1391, %v1386, %v1388
        %v1393 = vsel %vm1391, %v1388, %v1390
        %v1397 = vpack.c.bf16 %v1308, %v1292
        %v1398 = vpack.c.bf16 %v1309, %v1293
        %v1399 = vpack.c.bf16 %v1306, %v1294
        %v1400 = vpack.c.bf16 %v1332, %v1320
        %v1401 = vpack.c.bf16 %v1333, %v1321
        %v1402 = vpack.c.bf16 %v1330, %v1318
        %v1403 = vpack.c.bf16 %v1356, %v1344
        %v1404 = vpack.c.bf16 %v1357, %v1345
        %v1405 = vpack.c.bf16 %v1354, %v1342
        %v1406 = vpack.c.bf16 %v1380, %v1368
        %v1407 = vpack.c.bf16 %v1381, %v1369
        %v1408 = vpack.c.bf16 %v1378, %v1366
        %v1409 = vpack.c.bf16 %v1392, %v1392
        %v1410 = vpack.c.bf16 %v1393, %v1393
        %v1411 = vpack.c.bf16 %v1390, %v1390
        %1413 = vset.pattern.permute.xlu0 0
        %1414 = vperm.xlu0 %1413, %v1296
        %v1415 = vpop.permute.xlu0 %1414
        %vm1417 = vcmask 588800
        %v1419 = vsel %vm1417, %v1295, 0
        %vm1421 = vcmask 1043456
        %v1423 = vsel %vm1421, %v1409, 0
        %v1426 = vsel %vm1421, %v1410, 0
        %v1429 = vsel %vm1421, %v1411, 0
        %1431 = vmatprep.subr.bf16.mxu0 %v1398
        %1432 = vmatpush1.bf16.msra.mxu0 %v1397
        %1433 = vmatprep.subr.bf16.mxu0 %v1401
        %1434 = vmatpush1.bf16.msra.mxu0 %v1400
        %1435 = vmatprep.subr.bf16.mxu0 %v1404
        %1436 = vmatpush1.bf16.msra.mxu0 %v1403
        %1437 = vmatprep.subr.bf16.mxu0 %v1407
        %1438 = vmatpush1.bf16.msra.mxu0 %v1406
        %1439 = vmatprep.subr.bf16.mxu0 %v1426
        %1440 = vmatpush1.bf16.msra.mxu0 %v1423
        %1441 = vmatprep.subr.bf16.mxu0 0
        %1442 = vmatpush1.bf16.msra.mxu0 0
        %1443 = vmatprep.subr.bf16.mxu0 0
        %1444 = vmatpush1.bf16.msra.mxu0 0
        %1445 = vmatprep.subr.bf16.mxu0 0
        %1446 = vmatpush1.bf16.msra.mxu0 0
        %1447 = vmatprep.subr.bf16.mxu0 0
        %1448 = vmatpush1.bf16.msra.mxu0 0
        %1449 = vmatprep.subr.bf16.mxu0 0
        %1450 = vmatpush1.bf16.msra.mxu0 0
        %1451 = vmatprep.subr.bf16.mxu0 0
        %1452 = vmatpush1.bf16.msra.mxu0 0
        %1453 = vmatprep.subr.bf16.mxu0 0
        %1454 = vmatpush1.bf16.msra.mxu0 0
        %1455 = vmatprep.subr.bf16.mxu0 0
        %1456 = vmatpush1.bf16.msra.mxu0 0
        %1457 = vmatprep.subr.bf16.mxu0 0
        %1458 = vmatpush1.bf16.msra.mxu0 0
        %1459 = vmatprep.subr.bf16.mxu0 0
        %1460 = vmatpush1.bf16.msra.mxu0 0
        %1461 = vmatprep.subr.bf16.mxu0 0
        %1462 = vmatpush1.bf16.msra.mxu0 0
        %1463 = vmatprep.mubr.bf16.mxu0 0
        %1464 = vmatmul.mubr.bf16.gmra.mrb[0].mxu0 %v1419
        %v1465 = vpop.f32.mrb[0].mxu0
        %v1466 = vadd.f32 %v1415, %v1465
        %v1467 = vpop.f32.mrb[0].mxu0
        %v1468 = vadd.f32 %v1415, %v1467
        %v1469 = vpop.f32.mrb[0].mxu0
        %v1470 = vpop.f32.mrb[0].mxu0
        %1471 = vdwg.mxu0
        %1472 = vmatprep.subr.bf16.mxu0 0
        %1473 = vmatpush1.bf16.msra.mxu0 %v1399
        %1474 = vmatprep.subr.bf16.mxu0 0
        %1475 = vmatpush1.bf16.msra.mxu0 %v1402
        %1476 = vmatprep.subr.bf16.mxu0 0
        %1477 = vmatpush1.bf16.msra.mxu0 %v1405
        %1478 = vmatprep.subr.bf16.mxu0 0
        %1479 = vmatpush1.bf16.msra.mxu0 %v1408
        %1480 = vmatprep.subr.bf16.mxu0 0
        %1481 = vmatpush1.bf16.msra.mxu0 %v1429
        %1482 = vmatprep.subr.bf16.mxu0 0
        %1483 = vmatpush1.bf16.msra.mxu0 0
        %1484 = vmatprep.subr.bf16.mxu0 0
        %1485 = vmatpush1.bf16.msra.mxu0 0
        %1486 = vmatprep.subr.bf16.mxu0 0
        %1487 = vmatpush1.bf16.msra.mxu0 0
        %1488 = vmatprep.subr.bf16.mxu0 0
        %1489 = vmatpush1.bf16.msra.mxu0 0
        %1490 = vmatprep.subr.bf16.mxu0 0
        %1491 = vmatpush1.bf16.msra.mxu0 0
        %1492 = vmatprep.subr.bf16.mxu0 0
        %1493 = vmatpush1.bf16.msra.mxu0 0
        %1494 = vmatprep.subr.bf16.mxu0 0
        %1495 = vmatpush1.bf16.msra.mxu0 0
        %1496 = vmatprep.subr.bf16.mxu0 0
        %1497 = vmatpush1.bf16.msra.mxu0 0
        %1498 = vmatprep.subr.bf16.mxu0 0
        %1499 = vmatpush1.bf16.msra.mxu0 0
        %1500 = vmatprep.subr.bf16.mxu0 0
        %1501 = vmatpush1.bf16.msra.mxu0 0
        %1502 = vmatprep.subr.bf16.mxu0 0
        %1503 = vmatpush1.bf16.msra.mxu0 0
        %1504 = vmatprep.mubr.bf16.mxu0 0
        %1505 = vmatmul.mubr.bf16.gmra.mrb[0].mxu0 %v1419
        %v1506 = vpop.f32.mrb[0].mxu0
        %v1507 = vadd.f32 %v1415, %v1506
        %v1508 = vpop.f32.mrb[0].mxu0
        %v1509 = vpop.f32.mrb[0].mxu0
        %v1510 = vpop.f32.mrb[0].mxu0
        %1511 = vdwg.mxu0
        %v1513 = vlaneseq
        %v1514 = vshrl.u32 %v1513, 7
        %v1515 = vsub.s32 0, %v1514
        %v1516 = vrot.slane %v1297, %v1515
        %v1517 = vlaneseq
        %v1518 = vshrl.u32 %v1517, 7
        %v1519 = vsub.s32 1, %v1518
        %v1520 = vrot.slane %v1297, %v1519
        %v1521 = vlaneseq
        %v1522 = vshrl.u32 %v1521, 7
        %v1523 = vsub.s32 2, %v1522
        %v1524 = vrot.slane %v1297, %v1523
        %v1528 = vmul.f32 %v1466, %v1516
        %v1529 = vmul.f32 %v1468, %v1520
        %v1530 = vmul.f32 %v1507, %v1524
        %v1531 = vadd.f32 %v1528, %v1529
        %vm1532 = vcmask 244736
        %v1533 = vsel %vm1532, %v1530, 0.0
        %v1534 = vadd.f32 %v1531, %v1533
        %1535 = vadd.xlane.f32.xlu0 %v1534
        %v1536 = vpop.xlane.xlu0 %1535
        %v1537 = vrot.slane %v1536, 4
        %v1538 = vadd.f32 %v1536, %v1537
        %v1539 = vrot.slane %v1538, 2
        %v1540 = vadd.f32 %v1538, %v1539
        %v1541 = vrot.slane %v1540, 1
        %v1542 = vadd.f32 %v1540, %v1541
        %s1543 = vtos %v1542
        %v1544 = vstv %s1543
        %v1545 = vmul.f32 %v1544, 0.00048828125
        %v1546 = vsub.f32 %v1466, %v1545
        %v1547 = vsub.f32 %v1468, %v1545
        %v1548 = vsub.f32 %v1507, %v1545
        %v1549 = vmul.f32 %v1546, %v1516
        %v1550 = vmul.f32 %v1547, %v1520
        %v1551 = vmul.f32 %v1548, %v1524
        %v1552 = vmul.f32 %v1549, %v1549
        %v1553 = vmul.f32 %v1550, %v1550
        %v1554 = vmul.f32 %v1551, %v1551
        %v1555 = vadd.f32 %v1552, %v1553
        %v1556 = vsel %vm1532, %v1554, 0.0
        %v1557 = vadd.f32 %v1555, %v1556
        %1558 = vadd.xlane.f32.xlu0 %v1557
        %v1559 = vpop.xlane.xlu0 %1558
        %v1560 = vrot.slane %v1559, 4
        %v1561 = vadd.f32 %v1559, %v1560
        %v1562 = vrot.slane %v1561, 2
        %v1563 = vadd.f32 %v1561, %v1562
        %v1564 = vrot.slane %v1563, 1
        %v1565 = vadd.f32 %v1563, %v1564
        %s1566 = vtos %v1565
        %v1567 = vstv %s1566
        %v1568 = vmul.f32 %v1567, 0.00048828125
        %v1569 = vadd.f32 %v1568, 1e-05
        %v1570 = vrsqrt.pop %v1569
        %v1571 = vmul.f32 %v1546, %v1570
        %v1572 = vmul.f32 %v1547, %v1570
        %v1573 = vmul.f32 %v1548, %v1570
        %1574 = vset.pattern.permute.xlu0 1
        %1575 = vperm.xlu0 %1574, %v1296
        %v1576 = vpop.permute.xlu0 %1575
        %v1578 = vmul.f32 %v1571, %v1576
        %v1579 = vmul.f32 %v1572, %v1576
        %v1580 = vmul.f32 %v1573, %v1576
        %1581 = vset.pattern.permute.xlu0 2
        %1582 = vperm.xlu0 %1581, %v1296
        %v1583 = vpop.permute.xlu0 %1582
        %v1585 = vadd.f32 %v1578, %v1583
        %v1586 = vadd.f32 %v1579, %v1583
        %v1587 = vadd.f32 %v1580, %v1583
        %vm1588 = vcmp.ge.f32.partialorder %v1585, 0.0
        %vm1589 = vcmp.ge.f32.partialorder %v1586, 0.0
        %vm1590 = vcmp.ge.f32.partialorder %v1587, 0.0
        %v1591 = vmul.f32 %v1585, 0.01
        %v1592 = vmul.f32 %v1586, 0.01
        %v1593 = vmul.f32 %v1587, 0.01
        %v1594 = vsel %vm1588, %v1585, %v1591
        %v1595 = vsel %vm1589, %v1586, %v1592
        %v1596 = vsel %vm1590, %v1587, %v1593
        %v1597 = vld [vmem:[%s35] sm:$0xff]
        %v1598 = vld [vmem:[%s35 + $0x8] sm:$0xff]
        %v1599 = vld [vmem:[%s35 + $0x10] sm:$0xff]
        %v1600 = vld [vmem:[%s35 + $0x18] sm:$0xff]
        %v1601 = vld [vmem:[%s35 + $0x20] sm:$0xff]
        %v1602 = vld [vmem:[%s35 + $0x28] sm:$0xff]
        %v1603 = vld [vmem:[%s35 + $0x30] sm:$0xff]
        %v1604 = vld [vmem:[%s35 + $0x38] sm:$0xff]
        %v1605 = vld [vmem:[%s35 + $0x40] sm:$0xff]
        %v1606 = vld [vmem:[%s35 + $0x48] sm:$0xff]
        %v1607 = vld [vmem:[%s35 + $0x50] sm:$0xff]
        %v1608 = vld [vmem:[%s35 + $0x58] sm:$0xff]
        %v1609 = vld [vmem:[%s35 + $0x60] sm:$0xff]
        %v1610 = vld [vmem:[%s35 + $0x68] sm:$0xff]
        %v1611 = vld [vmem:[%s35 + $0x70] sm:$0xff]
        %v1612 = vld [vmem:[%s35 + $0x78] sm:$0xff]
        %v1613 = vld [vmem:[%s35 + $0x80] sm:$0xff]
        %v1614 = vld [vmem:[%s35 + $0x88] sm:$0xff]
        %v1615 = vld [vmem:[%s35 + $0x90] sm:$0xff]
        %v1616 = vld [vmem:[%s35 + $0x98] sm:$0xff]
        %v1617 = vld [vmem:[%s35 + $0xa0] sm:$0xff]
        %v1618 = vld [vmem:[%s35 + $0xa8] sm:$0xff]
        %v1619 = vld [vmem:[%s35 + $0xb0] sm:$0xff]
        %v1620 = vld [vmem:[%s35 + $0xb8] sm:$0xff]
        %v1621 = vld [vmem:[%s35 + $0xc0] sm:$0xff]
        %v1622 = vld [vmem:[%s35 + $0xc8] sm:$0xff]
        %v1623 = vld [vmem:[%s35 + $0xd0] sm:$0xff]
        %v1624 = vld [vmem:[%s35 + $0xd8] sm:$0xff]
        %v1625 = vld [vmem:[%s35 + $0xe0] sm:$0xff]
        %v1626 = vld [vmem:[%s35 + $0xe8] sm:$0xff]
        %v1627 = vld [vmem:[%s35 + $0xf0] sm:$0xff]
        %v1628 = vld [vmem:[%s35 + $0xf8] sm:$0xff]
        %v1629 = vld [vmem:[%s35 + $0x100] sm:$0xff]
        %v1630 = vld [vmem:[%s35 + $0x108] sm:$0xff]
        %v1631 = vld [vmem:[%s35 + $0x110] sm:$0xff]
        %v1632 = vld [vmem:[%s35 + $0x118] sm:$0xff]
        %v1633 = vld [vmem:[%s35 + $0x120] sm:$0xff]
        %v1634 = vld [vmem:[%s35 + $0x128] sm:$0xff]
        %v1635 = vld [vmem:[%s35 + $0x130] sm:$0xff]
        %v1636 = vld [vmem:[%s35 + $0x138] sm:$0xff]
        %v1637 = vld [vmem:[%s35 + $0x140] sm:$0xff]
        %v1638 = vld [vmem:[%s35 + $0x148] sm:$0xff]
        %v1639 = vld [vmem:[%s35 + $0x150] sm:$0xff]
        %v1640 = vld [vmem:[%s35 + $0x158] sm:$0xff]
        %v1641 = vld [vmem:[%s35 + $0x160] sm:$0xff]
        %v1642 = vld [vmem:[%s35 + $0x168] sm:$0xff]
        %v1643 = vld [vmem:[%s35 + $0x170] sm:$0xff]
        %v1644 = vld [vmem:[%s35 + $0x178] sm:$0xff]
        %v1645 = vld [vmem:[%s35 + $0x180] sm:$0xff]
        %v1646 = vld [vmem:[%s35 + $0x188] sm:$0xff]
        %v1647 = vld [vmem:[%s35 + $0x190] sm:$0xff]
        %v1648 = vld [vmem:[%s35 + $0x198] sm:$0xff]
        %v1649 = vld [vmem:[%s35 + $0x1a0] sm:$0xff]
        %v1650 = vld [vmem:[%s35 + $0x1a8] sm:$0xff]
        %v1651 = vld [vmem:[%s35 + $0x1b0] sm:$0xff]
        %v1652 = vld [vmem:[%s35 + $0x1b8] sm:$0xff]
        %v1653 = vld [vmem:[%s35 + $0x1c0] sm:$0xff]
        %v1654 = vld [vmem:[%s35 + $0x1c8] sm:$0xff]
        %v1655 = vld [vmem:[%s35 + $0x1d0] sm:$0xff]
        %v1656 = vld [vmem:[%s35 + $0x1d8] sm:$0xff]
        %v1657 = vld [vmem:[%s35 + $0x1e0] sm:$0xff]
        %v1658 = vld [vmem:[%s35 + $0x1e8] sm:$0xff]
        %v1659 = vld [vmem:[%s35 + $0x1f0] sm:$0xff]
        %v1660 = vld [vmem:[%s35 + $0x1f8] sm:$0xff]
        %v1661 = vld [vmem:[%s35 + $0x200] sm:$0xff]
        %v1662 = vld [vmem:[%s35 + $0x208] sm:$0xff]
        %v1663 = vld [vmem:[%s35 + $0x210] sm:$0xff]
        %v1664 = vld [vmem:[%s35 + $0x218] sm:$0xff]
        %v1665 = vld [vmem:[%s35 + $0x220] sm:$0xff]
        %v1666 = vld [vmem:[%s35 + $0x228] sm:$0xff]
        %v1667 = vld [vmem:[%s35 + $0x230] sm:$0xff]
        %v1668 = vld [vmem:[%s35 + $0x238] sm:$0xff]
        %v1669 = vld [vmem:[%s35 + $0x240] sm:$0xff]
        %v1670 = vld [vmem:[%s35 + $0x248] sm:$0xff]
        %v1671 = vld [vmem:[%s35 + $0x250] sm:$0xff]
        %v1672 = vld [vmem:[%s35 + $0x258] sm:$0xff]
        %v1673 = vld [vmem:[%s35 + $0x260] sm:$0xff]
        %v1674 = vld [vmem:[%s35 + $0x268] sm:$0xff]
        %v1675 = vld [vmem:[%s35 + $0x270] sm:$0xff]
        %v1676 = vld [vmem:[%s35 + $0x278] sm:$0xff]
        %v1677 = vld [vmem:[%s35 + $0x280] sm:$0xff]
        %v1678 = vld [vmem:[%s35 + $0x288] sm:$0xff]
        %v1679 = vld [vmem:[%s35 + $0x290] sm:$0xff]
        %v1680 = vld [vmem:[%s35 + $0x298] sm:$0xff]
        %v1681 = vld [vmem:[%s35 + $0x2a0] sm:$0xff]
        %v1682 = vld [vmem:[%s35 + $0x2a8] sm:$0xff]
        %v1683 = vld [vmem:[%s35 + $0x2b0] sm:$0xff]
        %v1684 = vld [vmem:[%s35 + $0x2b8] sm:$0xff]
        %v1685 = vld [vmem:[%s35 + $0x2c0] sm:$0xff]
        %v1686 = vld [vmem:[%s35 + $0x2c8] sm:$0xff]
        %v1687 = vld [vmem:[%s35 + $0x2d0] sm:$0xff]
        %v1688 = vld [vmem:[%s35 + $0x2d8] sm:$0xff]
        %v1689 = vld [vmem:[%s35 + $0x2e0] sm:$0xff]
        %v1690 = vld [vmem:[%s35 + $0x2e8] sm:$0xff]
        %v1691 = vld [vmem:[%s35 + $0x2f0] sm:$0xff]
        %v1692 = vld [vmem:[%s35 + $0x2f8] sm:$0xff]
        %v1693 = vld [vmem:[%s35 + $0x300] sm:$0xff]
        %v1694 = vld [vmem:[%s35 + $0x308] sm:$0xff]
        %v1695 = vld [vmem:[%s35 + $0x310] sm:$0xff]
        %v1696 = vld [vmem:[%s35 + $0x318] sm:$0xff]
        %v1697 = vld [vmem:[%s35 + $0x320] sm:$0xff]
        %v1698 = vld [vmem:[%s35 + $0x328] sm:$0xff]
        %v1699 = vld [vmem:[%s35 + $0x330] sm:$0xff]
        %v1700 = vld [vmem:[%s35 + $0x338] sm:$0xff]
        %v1701 = vld [vmem:[%s35 + $0x340] sm:$0xff]
        %v1702 = vld [vmem:[%s35 + $0x348] sm:$0x3f]
        %v1703 = vld [vmem:[%s35 + $0x350] sm:$0x3f]
        %v1704 = vld [vmem:[%s35 + $0x358] sm:$0x3f]
        %v1706 = vsel %vm1532, %v1596, 0
        %vm1708 = vcmask 1045504
        %v1710 = vsel %vm1708, %v1702, 0
        %v1713 = vsel %vm1708, %v1703, 0
        %v1716 = vsel %vm1708, %v1704, 0
        %1718 = vmatprep.subr.mxu0 %v1598
        %1719 = vmatpush1.msra.mxu0 %v1597
        %1720 = vmatprep.subr.mxu0 %v1601
        %1721 = vmatpush1.msra.mxu0 %v1600
        %1722 = vmatprep.subr.mxu0 %v1604
        %1723 = vmatpush1.msra.mxu0 %v1603
        %1724 = vmatprep.subr.mxu0 %v1607
        %1725 = vmatpush1.msra.mxu0 %v1606
        %1726 = vmatprep.subr.mxu0 %v1610
        %1727 = vmatpush1.msra.mxu0 %v1609
        %1728 = vmatprep.subr.mxu0 %v1613
        %1729 = vmatpush1.msra.mxu0 %v1612
        %1730 = vmatprep.subr.mxu0 %v1616
        %1731 = vmatpush1.msra.mxu0 %v1615
        %1732 = vmatprep.subr.mxu0 %v1619
        %1733 = vmatpush1.msra.mxu0 %v1618
        %1734 = vmatprep.subr.mxu0 %v1622
        %1735 = vmatpush1.msra.mxu0 %v1621
        %1736 = vmatprep.subr.mxu0 %v1625
        %1737 = vmatpush1.msra.mxu0 %v1624
        %1738 = vmatprep.subr.mxu0 %v1628
        %1739 = vmatpush1.msra.mxu0 %v1627
        %1740 = vmatprep.subr.mxu0 %v1631
        %1741 = vmatpush1.msra.mxu0 %v1630
        %1742 = vmatprep.subr.mxu0 %v1634
        %1743 = vmatpush1.msra.mxu0 %v1633
        %1744 = vmatprep.subr.mxu0 %v1637
        %1745 = vmatpush1.msra.mxu0 %v1636
        %1746 = vmatprep.subr.mxu0 %v1640
        %1747 = vmatpush1.msra.mxu0 %v1639
        %1748 = vmatprep.subr.mxu0 %v1643
        %1749 = vmatpush1.msra.mxu0 %v1642
        %1750 = vmatprep.subr.mxu0 %v1646
        %1751 = vmatpush1.msra.mxu0 %v1645
        %1752 = vmatprep.subr.mxu0 %v1649
        %1753 = vmatpush1.msra.mxu0 %v1648
        %1754 = vmatprep.subr.mxu0 %v1652
        %1755 = vmatpush1.msra.mxu0 %v1651
        %1756 = vmatprep.subr.mxu0 %v1655
        %1757 = vmatpush1.msra.mxu0 %v1654
        %1758 = vmatprep.subr.mxu0 %v1658
        %1759 = vmatpush1.msra.mxu0 %v1657
        %1760 = vmatprep.subr.mxu0 %v1661
        %1761 = vmatpush1.msra.mxu0 %v1660
        %1762 = vmatprep.subr.mxu0 %v1664
        %1763 = vmatpush1.msra.mxu0 %v1663
        %1764 = vmatprep.subr.mxu0 %v1667
        %1765 = vmatpush1.msra.mxu0 %v1666
        %1766 = vmatprep.subr.mxu0 %v1670
        %1767 = vmatpush1.msra.mxu0 %v1669
        %1768 = vmatprep.subr.mxu0 %v1673
        %1769 = vmatpush1.msra.mxu0 %v1672
        %1770 = vmatprep.subr.mxu0 %v1676
        %1771 = vmatpush1.msra.mxu0 %v1675
        %1772 = vmatprep.subr.mxu0 %v1679
        %1773 = vmatpush1.msra.mxu0 %v1678
        %1774 = vmatprep.subr.mxu0 %v1682
        %1775 = vmatpush1.msra.mxu0 %v1681
        %1776 = vmatprep.subr.mxu0 %v1685
        %1777 = vmatpush1.msra.mxu0 %v1684
        %1778 = vmatprep.subr.mxu0 %v1688
        %1779 = vmatpush1.msra.mxu0 %v1687
        %1780 = vmatprep.subr.mxu0 %v1691
        %1781 = vmatpush1.msra.mxu0 %v1690
        %1782 = vmatprep.mubr.f32.mxu0 %v1595
        %1783 = vmatmul.mubr.f32.gmra.mrb[0].mxu0 %v1594
        %v1784 = vpop.f32.mrb[0].mxu0
        %v1785 = vadd.f32 0.0, %v1784
        %v1786 = vpop.f32.mrb[0].mxu0
        %v1787 = vadd.f32 0.0, %v1786
        %1788 = vdwg.mxu0
        %1789 = vmatprep.subr.mxu0 %v1694
        %1790 = vmatpush1.msra.mxu0 %v1693
        %1791 = vmatprep.subr.mxu0 %v1697
        %1792 = vmatpush1.msra.mxu0 %v1696
        %1793 = vmatprep.subr.mxu0 %v1700
        %1794 = vmatpush1.msra.mxu0 %v1699
        %1795 = vmatprep.subr.mxu0 %v1713
        %1796 = vmatpush1.msra.mxu0 %v1710
        %1797 = vmatprep.subr.mxu0 0.0
        %1798 = vmatpush1.msra.mxu0 0.0
        %1799 = vmatprep.subr.mxu0 0.0
        %1800 = vmatpush1.msra.mxu0 0.0
        %1801 = vmatprep.subr.mxu0 0.0
        %1802 = vmatpush1.msra.mxu0 0.0
        %1803 = vmatprep.subr.mxu0 0.0
        %1804 = vmatpush1.msra.mxu0 0.0
        %1805 = vmatprep.subr.mxu0 0.0
        %1806 = vmatpush1.msra.mxu0 0.0
        %1807 = vmatprep.subr.mxu0 0.0
        %1808 = vmatpush1.msra.mxu0 0.0
        %1809 = vmatprep.subr.mxu0 0.0
        %1810 = vmatpush1.msra.mxu0 0.0
        %1811 = vmatprep.subr.mxu0 0.0
        %1812 = vmatpush1.msra.mxu0 0.0
        %1813 = vmatprep.subr.mxu0 0.0
        %1814 = vmatpush1.msra.mxu0 0.0
        %1815 = vmatprep.subr.mxu0 0.0
        %1816 = vmatpush1.msra.mxu0 0.0
        %1817 = vmatprep.subr.mxu0 0.0
        %1818 = vmatpush1.msra.mxu0 0.0
        %1819 = vmatprep.subr.mxu0 0.0
        %1820 = vmatpush1.msra.mxu0 0.0
        %1821 = vmatprep.subr.mxu0 0.0
        %1822 = vmatpush1.msra.mxu0 0.0
        %1823 = vmatprep.subr.mxu0 0.0
        %1824 = vmatpush1.msra.mxu0 0.0
        %1825 = vmatprep.subr.mxu0 0.0
        %1826 = vmatpush1.msra.mxu0 0.0
        %1827 = vmatprep.subr.mxu0 0.0
        %1828 = vmatpush1.msra.mxu0 0.0
        %1829 = vmatprep.subr.mxu0 0.0
        %1830 = vmatpush1.msra.mxu0 0.0
        %1831 = vmatprep.subr.mxu0 0.0
        %1832 = vmatpush1.msra.mxu0 0.0
        %1833 = vmatprep.subr.mxu0 0.0
        %1834 = vmatpush1.msra.mxu0 0.0
        %1835 = vmatprep.subr.mxu0 0.0
        %1836 = vmatpush1.msra.mxu0 0.0
        %1837 = vmatprep.subr.mxu0 0.0
        %1838 = vmatpush1.msra.mxu0 0.0
        %1839 = vmatprep.subr.mxu0 0.0
        %1840 = vmatpush1.msra.mxu0 0.0
        %1841 = vmatprep.subr.mxu0 0.0
        %1842 = vmatpush1.msra.mxu0 0.0
        %1843 = vmatprep.subr.mxu0 0.0
        %1844 = vmatpush1.msra.mxu0 0.0
        %1845 = vmatprep.subr.mxu0 0.0
        %1846 = vmatpush1.msra.mxu0 0.0
        %1847 = vmatprep.subr.mxu0 0.0
        %1848 = vmatpush1.msra.mxu0 0.0
        %1849 = vmatprep.subr.mxu0 0.0
        %1850 = vmatpush1.msra.mxu0 0.0
        %1851 = vmatprep.subr.mxu0 0.0
        %1852 = vmatpush1.msra.mxu0 0.0
        %1853 = vmatprep.mubr.f32.mxu0 0.0
        %1854 = vmatmul.mubr.f32.gmra.mrb[0].mxu0 %v1706
        %v1855 = vpop.f32.mrb[0].mxu0
        %v1856 = vadd.f32 %v1785, %v1855
        %v1857 = vpop.f32.mrb[0].mxu0
        %v1858 = vadd.f32 %v1787, %v1857
        %1859 = vdwg.mxu0
        %1860 = vmatprep.subr.mxu0 0.0
        %1861 = vmatpush1.msra.mxu0 %v1599
        %1862 = vmatprep.subr.mxu0 0.0
        %1863 = vmatpush1.msra.mxu0 %v1602
        %1864 = vmatprep.subr.mxu0 0.0
        %1865 = vmatpush1.msra.mxu0 %v1605
        %1866 = vmatprep.subr.mxu0 0.0
        %1867 = vmatpush1.msra.mxu0 %v1608
        %1868 = vmatprep.subr.mxu0 0.0
        %1869 = vmatpush1.msra.mxu0 %v1611
        %1870 = vmatprep.subr.mxu0 0.0
        %1871 = vmatpush1.msra.mxu0 %v1614
        %1872 = vmatprep.subr.mxu0 0.0
        %1873 = vmatpush1.msra.mxu0 %v1617
        %1874 = vmatprep.subr.mxu0 0.0
        %1875 = vmatpush1.msra.mxu0 %v1620
        %1876 = vmatprep.subr.mxu0 0.0
        %1877 = vmatpush1.msra.mxu0 %v1623
        %1878 = vmatprep.subr.mxu0 0.0
        %1879 = vmatpush1.msra.mxu0 %v1626
        %1880 = vmatprep.subr.mxu0 0.0
        %1881 = vmatpush1.msra.mxu0 %v1629
        %1882 = vmatprep.subr.mxu0 0.0
        %1883 = vmatpush1.msra.mxu0 %v1632
        %1884 = vmatprep.subr.mxu0 0.0
        %1885 = vmatpush1.msra.mxu0 %v1635
        %1886 = vmatprep.subr.mxu0 0.0
        %1887 = vmatpush1.msra.mxu0 %v1638
        %1888 = vmatprep.subr.mxu0 0.0
        %1889 = vmatpush1.msra.mxu0 %v1641
        %1890 = vmatprep.subr.mxu0 0.0
        %1891 = vmatpush1.msra.mxu0 %v1644
        %1892 = vmatprep.subr.mxu0 0.0
        %1893 = vmatpush1.msra.mxu0 %v1647
        %1894 = vmatprep.subr.mxu0 0.0
        %1895 = vmatpush1.msra.mxu0 %v1650
        %1896 = vmatprep.subr.mxu0 0.0
        %1897 = vmatpush1.msra.mxu0 %v1653
        %1898 = vmatprep.subr.mxu0 0.0
        %1899 = vmatpush1.msra.mxu0 %v1656
        %1900 = vmatprep.subr.mxu0 0.0
        %1901 = vmatpush1.msra.mxu0 %v1659
        %1902 = vmatprep.subr.mxu0 0.0
        %1903 = vmatpush1.msra.mxu0 %v1662
        %1904 = vmatprep.subr.mxu0 0.0
        %1905 = vmatpush1.msra.mxu0 %v1665
        %1906 = vmatprep.subr.mxu0 0.0
        %1907 = vmatpush1.msra.mxu0 %v1668
        %1908 = vmatprep.subr.mxu0 0.0
        %1909 = vmatpush1.msra.mxu0 %v1671
        %1910 = vmatprep.subr.mxu0 0.0
        %1911 = vmatpush1.msra.mxu0 %v1674
        %1912 = vmatprep.subr.mxu0 0.0
        %1913 = vmatpush1.msra.mxu0 %v1677
        %1914 = vmatprep.subr.mxu0 0.0
        %1915 = vmatpush1.msra.mxu0 %v1680
        %1916 = vmatprep.subr.mxu0 0.0
        %1917 = vmatpush1.msra.mxu0 %v1683
        %1918 = vmatprep.subr.mxu0 0.0
        %1919 = vmatpush1.msra.mxu0 %v1686
        %1920 = vmatprep.subr.mxu0 0.0
        %1921 = vmatpush1.msra.mxu0 %v1689
        %1922 = vmatprep.subr.mxu0 0.0
        %1923 = vmatpush1.msra.mxu0 %v1692
        %1924 = vmatprep.mubr.f32.mxu0 %v1595
        %1925 = vmatmul.mubr.f32.gmra.mrb[0].mxu0 %v1594
        %v1926 = vpop.f32.mrb[0].mxu0
        %v1927 = vadd.f32 0.0, %v1926
        %v1928 = vpop.f32.mrb[0].mxu0
        %1929 = vdwg.mxu0
        %1930 = vmatprep.subr.mxu0 0.0
        %1931 = vmatpush1.msra.mxu0 %v1695
        %1932 = vmatprep.subr.mxu0 0.0
        %1933 = vmatpush1.msra.mxu0 %v1698
        %1934 = vmatprep.subr.mxu0 0.0
        %1935 = vmatpush1.msra.mxu0 %v1701
        %1936 = vmatprep.subr.mxu0 0.0
        %1937 = vmatpush1.msra.mxu0 %v1716
        %1938 = vmatprep.subr.mxu0 0.0
        %1939 = vmatpush1.msra.mxu0 0.0
        %1940 = vmatprep.subr.mxu0 0.0
        %1941 = vmatpush1.msra.mxu0 0.0
        %1942 = vmatprep.subr.mxu0 0.0
        %1943 = vmatpush1.msra.mxu0 0.0
        %1944 = vmatprep.subr.mxu0 0.0
        %1945 = vmatpush1.msra.mxu0 0.0
        %1946 = vmatprep.subr.mxu0 0.0
        %1947 = vmatpush1.msra.mxu0 0.0
        %1948 = vmatprep.subr.mxu0 0.0
        %1949 = vmatpush1.msra.mxu0 0.0
        %1950 = vmatprep.subr.mxu0 0.0
        %1951 = vmatpush1.msra.mxu0 0.0
        %1952 = vmatprep.subr.mxu0 0.0
        %1953 = vmatpush1.msra.mxu0 0.0
        %1954 = vmatprep.subr.mxu0 0.0
        %1955 = vmatpush1.msra.mxu0 0.0
        %1956 = vmatprep.subr.mxu0 0.0
        %1957 = vmatpush1.msra.mxu0 0.0
        %1958 = vmatprep.subr.mxu0 0.0
        %1959 = vmatpush1.msra.mxu0 0.0
        %1960 = vmatprep.subr.mxu0 0.0
        %1961 = vmatpush1.msra.mxu0 0.0
        %1962 = vmatprep.subr.mxu0 0.0
        %1963 = vmatpush1.msra.mxu0 0.0
        %1964 = vmatprep.subr.mxu0 0.0
        %1965 = vmatpush1.msra.mxu0 0.0
        %1966 = vmatprep.subr.mxu0 0.0
        %1967 = vmatpush1.msra.mxu0 0.0
        %1968 = vmatprep.subr.mxu0 0.0
        %1969 = vmatpush1.msra.mxu0 0.0
        %1970 = vmatprep.subr.mxu0 0.0
        %1971 = vmatpush1.msra.mxu0 0.0
        %1972 = vmatprep.subr.mxu0 0.0
        %1973 = vmatpush1.msra.mxu0 0.0
        %1974 = vmatprep.subr.mxu0 0.0
        %1975 = vmatpush1.msra.mxu0 0.0
        %1976 = vmatprep.subr.mxu0 0.0
        %1977 = vmatpush1.msra.mxu0 0.0
        %1978 = vmatprep.subr.mxu0 0.0
        %1979 = vmatpush1.msra.mxu0 0.0
        %1980 = vmatprep.subr.mxu0 0.0
        %1981 = vmatpush1.msra.mxu0 0.0
        %1982 = vmatprep.subr.mxu0 0.0
        %1983 = vmatpush1.msra.mxu0 0.0
        %1984 = vmatprep.subr.mxu0 0.0
        %1985 = vmatpush1.msra.mxu0 0.0
        %1986 = vmatprep.subr.mxu0 0.0
        %1987 = vmatpush1.msra.mxu0 0.0
        %1988 = vmatprep.subr.mxu0 0.0
        %1989 = vmatpush1.msra.mxu0 0.0
        %1990 = vmatprep.subr.mxu0 0.0
        %1991 = vmatpush1.msra.mxu0 0.0
        %1992 = vmatprep.subr.mxu0 0.0
        %1993 = vmatpush1.msra.mxu0 0.0
        %1994 = vmatprep.mubr.f32.mxu0 0.0
        %1995 = vmatmul.mubr.f32.gmra.mrb[0].mxu0 %v1706
        %v1996 = vpop.f32.mrb[0].mxu0
        %v1997 = vadd.f32 %v1927, %v1996
        %v1998 = vpop.f32.mrb[0].mxu0
        %1999 = vdwg.mxu0
        %v2000 = vld [vmem:[%s7] sm:$0xf]
        %v2001 = vld [vmem:[%s7 + $0x4] sm:$0xf]
        %v2002 = vld [vmem:[%s9] sm:$0xff]
        %v2003 = vld [vmem:[%s9 + $0x8] sm:$0xff]
        %v2004 = vld [vmem:[#allocation16] sm:$0x7]
        %2008 = vrot.lane.b32.xlu0 %v1856, 127
        %v2009 = vpop.permute.xlu0 %2008
        %2010 = vrot.lane.b32.xlu0 %v1858, 127
        %v2011 = vpop.permute.xlu0 %2010
        %2012 = vrot.lane.b32.xlu0 %v1997, 127
        %v2013 = vpop.permute.xlu0 %2012
        %v2014 = vsel %vm1307, %v2009, %v2011
        %v2015 = vsel %vm1307, %v2011, %v2013
        %2019 = vrot.lane.b32.xlu0 %v1856, 126
        %v2020 = vpop.permute.xlu0 %2019
        %2021 = vrot.lane.b32.xlu0 %v1858, 126
        %v2022 = vpop.permute.xlu0 %2021
        %2023 = vrot.lane.b32.xlu0 %v1997, 126
        %v2024 = vpop.permute.xlu0 %2023
        %v2025 = vsel %vm1319, %v2020, %v2022
        %v2026 = vsel %vm1319, %v2022, %v2024
        %2030 = vrot.lane.b32.xlu0 %v1856, 110
        %v2031 = vpop.permute.xlu0 %2030
        %2032 = vrot.lane.b32.xlu0 %v1858, 110
        %v2033 = vpop.permute.xlu0 %2032
        %2034 = vrot.lane.b32.xlu0 %v1997, 110
        %v2035 = vpop.permute.xlu0 %2034
        %v2036 = vsel %vm1331, %v2031, %v2033
        %v2037 = vsel %vm1331, %v2033, %v2035
        %2041 = vrot.lane.b32.xlu0 %v1856, 109
        %v2042 = vpop.permute.xlu0 %2041
        %2043 = vrot.lane.b32.xlu0 %v1858, 109
        %v2044 = vpop.permute.xlu0 %2043
        %2045 = vrot.lane.b32.xlu0 %v1997, 109
        %v2046 = vpop.permute.xlu0 %2045
        %v2047 = vsel %vm1343, %v2042, %v2044
        %v2048 = vsel %vm1343, %v2044, %v2046
        %2052 = vrot.lane.b32.xlu0 %v1856, 108
        %v2053 = vpop.permute.xlu0 %2052
        %2054 = vrot.lane.b32.xlu0 %v1858, 108
        %v2055 = vpop.permute.xlu0 %2054
        %2056 = vrot.lane.b32.xlu0 %v1997, 108
        %v2057 = vpop.permute.xlu0 %2056
        %v2058 = vsel %vm1355, %v2053, %v2055
        %v2059 = vsel %vm1355, %v2055, %v2057
        %2063 = vrot.lane.b32.xlu0 %v1856, 92
        %v2064 = vpop.permute.xlu0 %2063
        %2065 = vrot.lane.b32.xlu0 %v1858, 92
        %v2066 = vpop.permute.xlu0 %2065
        %2067 = vrot.lane.b32.xlu0 %v1997, 92
        %v2068 = vpop.permute.xlu0 %2067
        %v2069 = vsel %vm1367, %v2064, %v2066
        %v2070 = vsel %vm1367, %v2066, %v2068
        %2074 = vrot.lane.b32.xlu0 %v1856, 91
        %v2075 = vpop.permute.xlu0 %2074
        %2076 = vrot.lane.b32.xlu0 %v1858, 91
        %v2077 = vpop.permute.xlu0 %2076
        %2078 = vrot.lane.b32.xlu0 %v1997, 91
        %v2079 = vpop.permute.xlu0 %2078
        %v2080 = vsel %vm1379, %v2075, %v2077
        %v2081 = vsel %vm1379, %v2077, %v2079
        %2085 = vrot.lane.b32.xlu0 %v1856, 90
        %v2086 = vpop.permute.xlu0 %2085
        %2087 = vrot.lane.b32.xlu0 %v1858, 90
        %v2088 = vpop.permute.xlu0 %2087
        %2089 = vrot.lane.b32.xlu0 %v1997, 90
        %v2090 = vpop.permute.xlu0 %2089
        %v2091 = vsel %vm1391, %v2086, %v2088
        %v2092 = vsel %vm1391, %v2088, %v2090
        %v2096 = vpack.c.bf16 %v2014, %v1856
        %v2097 = vpack.c.bf16 %v2015, %v1858
        %v2098 = vpack.c.bf16 %v2013, %v1997
        %v2099 = vpack.c.bf16 %v2036, %v2025
        %v2100 = vpack.c.bf16 %v2037, %v2026
        %v2101 = vpack.c.bf16 %v2035, %v2024
        %v2102 = vpack.c.bf16 %v2058, %v2047
        %v2103 = vpack.c.bf16 %v2059, %v2048
        %v2104 = vpack.c.bf16 %v2057, %v2046
        %v2105 = vpack.c.bf16 %v2080, %v2069
        %v2106 = vpack.c.bf16 %v2081, %v2070
        %v2107 = vpack.c.bf16 %v2079, %v2068
        %v2108 = vpack.c.bf16 %v2091, %v2091
        %v2109 = vpack.c.bf16 %v2092, %v2092
        %v2110 = vpack.c.bf16 %v2090, %v2090
        %2112 = vset.pattern.permute.xlu0 0
        %2113 = vperm.xlu0 %2112, %v2002
        %v2114 = vpop.permute.xlu0 %2113
        %2117 = vset.pattern.permute.xlu0 0
        %2118 = vperm.xlu0 %2117, %v2003
        %v2119 = vpop.permute.xlu0 %2118
        %v2123 = vunpack.c.l.b16 %v2000
        %v2124 = vunpack.c.l.b16 %v2001
        %v2125 = vpack.c.b16 %v2124, %v2123
        %v2127 = vsel %vm1417, %v2125, 0
        %v2130 = vsel %vm1421, %v2108, 0
        %v2133 = vsel %vm1421, %v2109, 0
        %v2136 = vsel %vm1421, %v2110, 0
        %2138 = vmatprep.subr.bf16.mxu0 %v2097
        %2139 = vmatpush1.bf16.msra.mxu0 %v2096
        %2140 = vmatprep.subr.bf16.mxu0 %v2100
        %2141 = vmatpush1.bf16.msra.mxu0 %v2099
        %2142 = vmatprep.subr.bf16.mxu0 %v2103
        %2143 = vmatpush1.bf16.msra.mxu0 %v2102
        %2144 = vmatprep.subr.bf16.mxu0 %v2106
        %2145 = vmatpush1.bf16.msra.mxu0 %v2105
        %2146 = vmatprep.subr.bf16.mxu0 %v2133
        %2147 = vmatpush1.bf16.msra.mxu0 %v2130
        %2148 = vmatprep.subr.bf16.mxu0 0
        %2149 = vmatpush1.bf16.msra.mxu0 0
        %2150 = vmatprep.subr.bf16.mxu0 0
        %2151 = vmatpush1.bf16.msra.mxu0 0
        %2152 = vmatprep.subr.bf16.mxu0 0
        %2153 = vmatpush1.bf16.msra.mxu0 0
        %2154 = vmatprep.subr.bf16.mxu0 0
        %2155 = vmatpush1.bf16.msra.mxu0 0
        %2156 = vmatprep.subr.bf16.mxu0 0
        %2157 = vmatpush1.bf16.msra.mxu0 0
        %2158 = vmatprep.subr.bf16.mxu0 0
        %2159 = vmatpush1.bf16.msra.mxu0 0
        %2160 = vmatprep.subr.bf16.mxu0 0
        %2161 = vmatpush1.bf16.msra.mxu0 0
        %2162 = vmatprep.subr.bf16.mxu0 0
        %2163 = vmatpush1.bf16.msra.mxu0 0
        %2164 = vmatprep.subr.bf16.mxu0 0
        %2165 = vmatpush1.bf16.msra.mxu0 0
        %2166 = vmatprep.subr.bf16.mxu0 0
        %2167 = vmatpush1.bf16.msra.mxu0 0
        %2168 = vmatprep.subr.bf16.mxu0 0
        %2169 = vmatpush1.bf16.msra.mxu0 0
        %2170 = vmatprep.mubr.bf16.mxu0 0
        %2171 = vmatmul.mubr.bf16.gmra.mrb[0].mxu0 %v2127
        %v2172 = vpop.f32.mrb[0].mxu0
        %v2173 = vadd.f32 %v2114, %v2172
        %v2174 = vpop.f32.mrb[0].mxu0
        %v2175 = vadd.f32 %v2114, %v2174
        %v2176 = vpop.f32.mrb[0].mxu0
        %v2177 = vadd.f32 %v2119, %v2176
        %v2178 = vpop.f32.mrb[0].mxu0
        %v2179 = vadd.f32 %v2119, %v2178
        %2180 = vdwg.mxu0
        %2181 = vmatprep.subr.bf16.mxu0 0
        %2182 = vmatpush1.bf16.msra.mxu0 %v2098
        %2183 = vmatprep.subr.bf16.mxu0 0
        %2184 = vmatpush1.bf16.msra.mxu0 %v2101
        %2185 = vmatprep.subr.bf16.mxu0 0
        %2186 = vmatpush1.bf16.msra.mxu0 %v2104
        %2187 = vmatprep.subr.bf16.mxu0 0
        %2188 = vmatpush1.bf16.msra.mxu0 %v2107
        %2189 = vmatprep.subr.bf16.mxu0 0
        %2190 = vmatpush1.bf16.msra.mxu0 %v2136
        %2191 = vmatprep.subr.bf16.mxu0 0
        %2192 = vmatpush1.bf16.msra.mxu0 0
        %2193 = vmatprep.subr.bf16.mxu0 0
        %2194 = vmatpush1.bf16.msra.mxu0 0
        %2195 = vmatprep.subr.bf16.mxu0 0
        %2196 = vmatpush1.bf16.msra.mxu0 0
        %2197 = vmatprep.subr.bf16.mxu0 0
        %2198 = vmatpush1.bf16.msra.mxu0 0
        %2199 = vmatprep.subr.bf16.mxu0 0
        %2200 = vmatpush1.bf16.msra.mxu0 0
        %2201 = vmatprep.subr.bf16.mxu0 0
        %2202 = vmatpush1.bf16.msra.mxu0 0
        %2203 = vmatprep.subr.bf16.mxu0 0
        %2204 = vmatpush1.bf16.msra.mxu0 0
        %2205 = vmatprep.subr.bf16.mxu0 0
        %2206 = vmatpush1.bf16.msra.mxu0 0
        %2207 = vmatprep.subr.bf16.mxu0 0
        %2208 = vmatpush1.bf16.msra.mxu0 0
        %2209 = vmatprep.subr.bf16.mxu0 0
        %2210 = vmatpush1.bf16.msra.mxu0 0
        %2211 = vmatprep.subr.bf16.mxu0 0
        %2212 = vmatpush1.bf16.msra.mxu0 0
        %2213 = vmatprep.mubr.bf16.mxu0 0
        %2214 = vmatmul.mubr.bf16.gmra.mrb[0].mxu0 %v2127
        %v2215 = vpop.f32.mrb[0].mxu0
        %v2216 = vadd.f32 %v2114, %v2215
        %v2217 = vpop.f32.mrb[0].mxu0
        %v2218 = vpop.f32.mrb[0].mxu0
        %v2219 = vadd.f32 %v2119, %v2218
        %v2220 = vpop.f32.mrb[0].mxu0
        %2221 = vdwg.mxu0
        %v2223 = vlaneseq
        %v2224 = vshrl.u32 %v2223, 7
        %v2225 = vsub.s32 0, %v2224
        %v2226 = vrot.slane %v2004, %v2225
        %v2227 = vlaneseq
        %v2228 = vshrl.u32 %v2227, 7
        %v2229 = vsub.s32 1, %v2228
        %v2230 = vrot.slane %v2004, %v2229
        %v2231 = vlaneseq
        %v2232 = vshrl.u32 %v2231, 7
        %v2233 = vsub.s32 2, %v2232
        %v2234 = vrot.slane %v2004, %v2233
        %v2238 = vmul.f32 %v2173, %v2226
        %v2239 = vmul.f32 %v2175, %v2230
        %v2240 = vmul.f32 %v2216, %v2234
        %v2241 = vmul.f32 %v2177, %v2226
        %v2242 = vmul.f32 %v2179, %v2230
        %v2243 = vmul.f32 %v2219, %v2234
        %v2244 = vadd.f32 %v2238, %v2239
        %v2245 = vsel %vm1532, %v2240, 0.0
        %v2246 = vadd.f32 %v2244, %v2245
        %v2247 = vadd.f32 %v2246, %v2241
        %v2248 = vadd.f32 %v2247, %v2242
        %v2249 = vsel %vm1532, %v2243, 0.0
        %v2250 = vadd.f32 %v2248, %v2249
        %2251 = vadd.xlane.f32.xlu0 %v2250
        %v2252 = vpop.xlane.xlu0 %2251
        %v2253 = vrot.slane %v2252, 4
        %v2254 = vadd.f32 %v2252, %v2253
        %v2255 = vrot.slane %v2254, 2
        %v2256 = vadd.f32 %v2254, %v2255
        %v2257 = vrot.slane %v2256, 1
        %v2258 = vadd.f32 %v2256, %v2257
        %s2259 = vtos %v2258
        %v2260 = vstv %s2259
        %v2261 = vmul.f32 %v2260, 0.0009765625
        %v2262 = vsub.f32 %v2173, %v2261
        %v2263 = vsub.f32 %v2175, %v2261
        %v2264 = vsub.f32 %v2216, %v2261
        %v2265 = vsub.f32 %v2177, %v2261
        %v2266 = vsub.f32 %v2179, %v2261
        %v2267 = vsub.f32 %v2219, %v2261
        %v2268 = vmul.f32 %v2262, %v2226
        %v2269 = vmul.f32 %v2263, %v2230
        %v2270 = vmul.f32 %v2264, %v2234
        %v2271 = vmul.f32 %v2265, %v2226
        %v2272 = vmul.f32 %v2266, %v2230
        %v2273 = vmul.f32 %v2267, %v2234
        %v2274 = vmul.f32 %v2268, %v2268
        %v2275 = vmul.f32 %v2269, %v2269
        %v2276 = vmul.f32 %v2270, %v2270
        %v2277 = vmul.f32 %v2271, %v2271
        %v2278 = vmul.f32 %v2272, %v2272
        %v2279 = vmul.f32 %v2273, %v2273
        %v2280 = vadd.f32 %v2274, %v2275
        %v2281 = vsel %vm1532, %v2276, 0.0
        %v2282 = vadd.f32 %v2280, %v2281
        %v2283 = vadd.f32 %v2282, %v2277
        %v2284 = vadd.f32 %v2283, %v2278
        %v2285 = vsel %vm1532, %v2279, 0.0
        %v2286 = vadd.f32 %v2284, %v2285
        %2287 = vadd.xlane.f32.xlu0 %v2286
        %v2288 = vpop.xlane.xlu0 %2287
        %v2289 = vrot.slane %v2288, 4
        %v2290 = vadd.f32 %v2288, %v2289
        %v2291 = vrot.slane %v2290, 2
        %v2292 = vadd.f32 %v2290, %v2291
        %v2293 = vrot.slane %v2292, 1
        %v2294 = vadd.f32 %v2292, %v2293
        %s2295 = vtos %v2294
        %v2296 = vstv %s2295
        %v2297 = vmul.f32 %v2296, 0.0009765625
        %v2298 = vadd.f32 %v2297, 1e-05
        %v2299 = vrsqrt.pop %v2298
        %v2300 = vmul.f32 %v2262, %v2299
        %v2301 = vmul.f32 %v2263, %v2299
        %v2302 = vmul.f32 %v2264, %v2299
        %v2303 = vmul.f32 %v2265, %v2299
        %v2304 = vmul.f32 %v2266, %v2299
        %v2305 = vmul.f32 %v2267, %v2299
        %2306 = vset.pattern.permute.xlu0 1
        %2307 = vperm.xlu0 %2306, %v2002
        %v2308 = vpop.permute.xlu0 %2307
        %2310 = vset.pattern.permute.xlu0 1
        %2311 = vperm.xlu0 %2310, %v2003
        %v2312 = vpop.permute.xlu0 %2311
        %v2314 = vmul.f32 %v2300, %v2308
        %v2315 = vmul.f32 %v2301, %v2308
        %v2316 = vmul.f32 %v2302, %v2308
        %v2317 = vmul.f32 %v2303, %v2312
        %v2318 = vmul.f32 %v2304, %v2312
        %v2319 = vmul.f32 %v2305, %v2312
        %2320 = vset.pattern.permute.xlu0 2
        %2321 = vperm.xlu0 %2320, %v2002
        %v2322 = vpop.permute.xlu0 %2321
        %2324 = vset.pattern.permute.xlu0 2
        %2325 = vperm.xlu0 %2324, %v2003
        %v2326 = vpop.permute.xlu0 %2325
        %v2328 = vadd.f32 %v2314, %v2322
        %v2329 = vadd.f32 %v2315, %v2322
        %v2330 = vadd.f32 %v2316, %v2322
        %v2331 = vadd.f32 %v2317, %v2326
        %v2332 = vadd.f32 %v2318, %v2326
        %v2333 = vadd.f32 %v2319, %v2326
        %vm2334 = vcmp.ge.f32.partialorder %v2328, 0.0
        %vm2335 = vcmp.ge.f32.partialorder %v2329, 0.0
        %vm2336 = vcmp.ge.f32.partialorder %v2330, 0.0
        %vm2337 = vcmp.ge.f32.partialorder %v2331, 0.0
        %vm2338 = vcmp.ge.f32.partialorder %v2332, 0.0
        %vm2339 = vcmp.ge.f32.partialorder %v2333, 0.0
        %v2340 = vmul.f32 %v2328, 0.01
        %v2341 = vmul.f32 %v2329, 0.01
        %v2342 = vmul.f32 %v2330, 0.01
        %v2343 = vmul.f32 %v2331, 0.01
        %v2344 = vmul.f32 %v2332, 0.01
        %v2345 = vmul.f32 %v2333, 0.01
        %v2346 = vsel %vm2334, %v2328, %v2340
        %v2347 = vsel %vm2335, %v2329, %v2341
        %v2348 = vsel %vm2336, %v2330, %v2342
        %v2349 = vsel %vm2337, %v2331, %v2343
        %v2350 = vsel %vm2338, %v2332, %v2344
        %v2351 = vsel %vm2339, %v2333, %v2345
        %v2352 = vld [vmem:[#allocation15] sm:$0xff]
        %v2353 = vld [vmem:[#allocation15 + $0x8] sm:$0xff]
        %v2354 = vld [vmem:[#allocation15 + $0x10] sm:$0xff]
        %v2355 = vld [vmem:[#allocation15 + $0x18] sm:$0xff]
        %v2356 = vld [vmem:[#allocation15 + $0x20] sm:$0xff]
        %v2357 = vld [vmem:[#allocation15 + $0x28] sm:$0xff]
        %v2358 = vld [vmem:[#allocation15 + $0x30] sm:$0xff]
        %v2359 = vld [vmem:[#allocation15 + $0x38] sm:$0xff]
        %v2360 = vld [vmem:[#allocation15 + $0x40] sm:$0xff]
        %v2361 = vld [vmem:[#allocation15 + $0x48] sm:$0xff]
        %v2362 = vld [vmem:[#allocation15 + $0x50] sm:$0xff]
        %v2363 = vld [vmem:[#allocation15 + $0x58] sm:$0xff]
        %v2364 = vld [vmem:[#allocation15 + $0x60] sm:$0xff]
        %v2365 = vld [vmem:[#allocation15 + $0x68] sm:$0xff]
        %v2366 = vld [vmem:[#allocation15 + $0x70] sm:$0xff]
        %v2367 = vld [vmem:[#allocation15 + $0x78] sm:$0xff]
        %v2368 = vld [vmem:[#allocation15 + $0x80] sm:$0xff]
        %v2369 = vld [vmem:[#allocation15 + $0x88] sm:$0xff]
        %v2370 = vld [vmem:[#allocation15 + $0x90] sm:$0xff]
        %v2371 = vld [vmem:[#allocation15 + $0x98] sm:$0xff]
        %v2372 = vld [vmem:[#allocation15 + $0xa0] sm:$0xff]
        %v2373 = vld [vmem:[#allocation15 + $0xa8] sm:$0xff]
        %v2374 = vld [vmem:[#allocation15 + $0xb0] sm:$0xff]
        %v2375 = vld [vmem:[#allocation15 + $0xb8] sm:$0xff]
        %v2376 = vld [vmem:[#allocation15 + $0xc0] sm:$0xff]
        %v2377 = vld [vmem:[#allocation15 + $0xc8] sm:$0xff]
        %v2378 = vld [vmem:[#allocation15 + $0xd0] sm:$0xff]
        %v2379 = vld [vmem:[#allocation15 + $0xd8] sm:$0xff]
        %v2380 = vld [vmem:[#allocation15 + $0xe0] sm:$0xff]
        %v2381 = vld [vmem:[#allocation15 + $0xe8] sm:$0xff]
        %v2382 = vld [vmem:[#allocation15 + $0xf0] sm:$0xff]
        %v2383 = vld [vmem:[#allocation15 + $0xf8] sm:$0xff]
        %v2384 = vld [vmem:[#allocation15 + $0x100] sm:$0xff]
        %v2385 = vld [vmem:[#allocation15 + $0x108] sm:$0xff]
        %v2386 = vld [vmem:[#allocation15 + $0x110] sm:$0xff]
        %v2387 = vld [vmem:[#allocation15 + $0x118] sm:$0x3f]
        %v2389 = vsel %vm1532, %v2348, 0
        %v2392 = vsel %vm1532, %v2351, 0
        %v2395 = vsel %vm1708, %v2387, 0
        %2397 = vmatprep.subr.mxu0 0.0
        %2398 = vmatpush1.msra.mxu0 %v2352
        %2399 = vmatprep.subr.mxu0 0.0
        %2400 = vmatpush1.msra.mxu0 %v2353
        %2401 = vmatprep.subr.mxu0 0.0
        %2402 = vmatpush1.msra.mxu0 %v2354
        %2403 = vmatprep.subr.mxu0 0.0
        %2404 = vmatpush1.msra.mxu0 %v2355
        %2405 = vmatprep.subr.mxu0 0.0
        %2406 = vmatpush1.msra.mxu0 %v2356
        %2407 = vmatprep.subr.mxu0 0.0
        %2408 = vmatpush1.msra.mxu0 %v2357
        %2409 = vmatprep.subr.mxu0 0.0
        %2410 = vmatpush1.msra.mxu0 %v2358
        %2411 = vmatprep.subr.mxu0 0.0
        %2412 = vmatpush1.msra.mxu0 %v2359
        %2413 = vmatprep.subr.mxu0 0.0
        %2414 = vmatpush1.msra.mxu0 %v2360
        %2415 = vmatprep.subr.mxu0 0.0
        %2416 = vmatpush1.msra.mxu0 %v2361
        %2417 = vmatprep.subr.mxu0 0.0
        %2418 = vmatpush1.msra.mxu0 %v2362
        %2419 = vmatprep.subr.mxu0 0.0
        %2420 = vmatpush1.msra.mxu0 %v2363
        %2421 = vmatprep.subr.mxu0 0.0
        %2422 = vmatpush1.msra.mxu0 %v2364
        %2423 = vmatprep.subr.mxu0 0.0
        %2424 = vmatpush1.msra.mxu0 %v2365
        %2425 = vmatprep.subr.mxu0 0.0
        %2426 = vmatpush1.msra.mxu0 %v2366
        %2427 = vmatprep.subr.mxu0 0.0
        %2428 = vmatpush1.msra.mxu0 %v2367
        %2429 = vmatprep.subr.mxu0 0.0
        %2430 = vmatpush1.msra.mxu0 %v2368
        %2431 = vmatprep.subr.mxu0 0.0
        %2432 = vmatpush1.msra.mxu0 %v2369
        %2433 = vmatprep.subr.mxu0 0.0
        %2434 = vmatpush1.msra.mxu0 %v2370
        %2435 = vmatprep.subr.mxu0 0.0
        %2436 = vmatpush1.msra.mxu0 %v2371
        %2437 = vmatprep.subr.mxu0 0.0
        %2438 = vmatpush1.msra.mxu0 %v2372
        %2439 = vmatprep.subr.mxu0 0.0
        %2440 = vmatpush1.msra.mxu0 %v2373
        %2441 = vmatprep.subr.mxu0 0.0
        %2442 = vmatpush1.msra.mxu0 %v2374
        %2443 = vmatprep.subr.mxu0 0.0
        %2444 = vmatpush1.msra.mxu0 %v2375
        %2445 = vmatprep.subr.mxu0 0.0
        %2446 = vmatpush1.msra.mxu0 %v2376
        %2447 = vmatprep.subr.mxu0 0.0
        %2448 = vmatpush1.msra.mxu0 %v2377
        %2449 = vmatprep.subr.mxu0 0.0
        %2450 = vmatpush1.msra.mxu0 %v2378
        %2451 = vmatprep.subr.mxu0 0.0
        %2452 = vmatpush1.msra.mxu0 %v2379
        %2453 = vmatprep.subr.mxu0 0.0
        %2454 = vmatpush1.msra.mxu0 %v2380
        %2455 = vmatprep.subr.mxu0 0.0
        %2456 = vmatpush1.msra.mxu0 %v2381
        %2457 = vmatprep.subr.mxu0 0.0
        %2458 = vmatpush1.msra.mxu0 %v2382
        %2459 = vmatprep.subr.mxu0 0.0
        %2460 = vmatpush1.msra.mxu0 %v2383
        %2461 = vmatprep.mubr.f32.mxu0 %v2347
        %2462 = vmatmul.mubr.f32.gmra.mrb[0].mxu0 %v2346
        %v2463 = vpop.f32.mrb[0].mxu0
        %v2464 = vadd.f32 0.0, %v2463
        %v2465 = vpop.f32.mrb[0].mxu0
        %2466 = vmatprep.mubr.f32.mxu0 %v2350
        %2467 = vmatmul.mubr.f32.gmra.mrb[0].mxu0 %v2349
        %v2468 = vpop.f32.mrb[0].mxu0
        %v2469 = vadd.f32 0.0, %v2468
        %v2470 = vpop.f32.mrb[0].mxu0
        %2471 = vdwg.mxu0
        %2472 = vmatprep.subr.mxu0 0.0
        %2473 = vmatpush1.msra.mxu0 %v2384
        %2474 = vmatprep.subr.mxu0 0.0
        %2475 = vmatpush1.msra.mxu0 %v2385
        %2476 = vmatprep.subr.mxu0 0.0
        %2477 = vmatpush1.msra.mxu0 %v2386
        %2478 = vmatprep.subr.mxu0 0.0
        %2479 = vmatpush1.msra.mxu0 %v2395
        %2480 = vmatprep.subr.mxu0 0.0
        %2481 = vmatpush1.msra.mxu0 0.0
        %2482 = vmatprep.subr.mxu0 0.0
        %2483 = vmatpush1.msra.mxu0 0.0
        %2484 = vmatprep.subr.mxu0 0.0
        %2485 = vmatpush1.msra.mxu0 0.0
        %2486 = vmatprep.subr.mxu0 0.0
        %2487 = vmatpush1.msra.mxu0 0.0
        %2488 = vmatprep.subr.mxu0 0.0
        %2489 = vmatpush1.msra.mxu0 0.0
        %2490 = vmatprep.subr.mxu0 0.0
        %2491 = vmatpush1.msra.mxu0 0.0
        %2492 = vmatprep.subr.mxu0 0.0
        %2493 = vmatpush1.msra.mxu0 0.0
        %2494 = vmatprep.subr.mxu0 0.0
        %2495 = vmatpush1.msra.mxu0 0.0
        %2496 = vmatprep.subr.mxu0 0.0
        %2497 = vmatpush1.msra.mxu0 0.0
        %2498 = vmatprep.subr.mxu0 0.0
        %2499 = vmatpush1.msra.mxu0 0.0
        %2500 = vmatprep.subr.mxu0 0.0
        %2501 = vmatpush1.msra.mxu0 0.0
        %2502 = vmatprep.subr.mxu0 0.0
        %2503 = vmatpush1.msra.mxu0 0.0
        %2504 = vmatprep.subr.mxu0 0.0
        %2505 = vmatpush1.msra.mxu0 0.0
        %2506 = vmatprep.subr.mxu0 0.0
        %2507 = vmatpush1.msra.mxu0 0.0
        %2508 = vmatprep.subr.mxu0 0.0
        %2509 = vmatpush1.msra.mxu0 0.0
        %2510 = vmatprep.subr.mxu0 0.0
        %2511 = vmatpush1.msra.mxu0 0.0
        %2512 = vmatprep.subr.mxu0 0.0
        %2513 = vmatpush1.msra.mxu0 0.0
        %2514 = vmatprep.subr.mxu0 0.0
        %2515 = vmatpush1.msra.mxu0 0.0
        %2516 = vmatprep.subr.mxu0 0.0
        %2517 = vmatpush1.msra.mxu0 0.0
        %2518 = vmatprep.subr.mxu0 0.0
        %2519 = vmatpush1.msra.mxu0 0.0
        %2520 = vmatprep.subr.mxu0 0.0
        %2521 = vmatpush1.msra.mxu0 0.0
        %2522 = vmatprep.subr.mxu0 0.0
        %2523 = vmatpush1.msra.mxu0 0.0
        %2524 = vmatprep.subr.mxu0 0.0
        %2525 = vmatpush1.msra.mxu0 0.0
        %2526 = vmatprep.subr.mxu0 0.0
        %2527 = vmatpush1.msra.mxu0 0.0
        %2528 = vmatprep.subr.mxu0 0.0
        %2529 = vmatpush1.msra.mxu0 0.0
        %2530 = vmatprep.subr.mxu0 0.0
        %2531 = vmatpush1.msra.mxu0 0.0
        %2532 = vmatprep.subr.mxu0 0.0
        %2533 = vmatpush1.msra.mxu0 0.0
        %2534 = vmatprep.subr.mxu0 0.0
        %2535 = vmatpush1.msra.mxu0 0.0
        %2536 = vmatprep.mubr.f32.mxu0 0.0
        %2537 = vmatmul.mubr.f32.gmra.mrb[0].mxu0 %v2389
        %v2538 = vpop.f32.mrb[0].mxu0
        %v2539 = vadd.f32 %v2464, %v2538
        %v2540 = vpop.f32.mrb[0].mxu0
        %2541 = vmatprep.mubr.f32.mxu0 0.0
        %2542 = vmatmul.mubr.f32.gmra.mrb[0].mxu0 %v2392
        %v2543 = vpop.f32.mrb[0].mxu0
        %v2544 = vadd.f32 %v2469, %v2543
        %v2545 = vpop.f32.mrb[0].mxu0
        %2546 = vdwg.mxu0
        %v2547 = vld [vmem:[#allocation4] sm:$0xff]
        %v2548 = vld [vmem:[#allocation4 + $0x8] sm:$0xff]
        %v2549 = vld [vmem:[#allocation4 + $0x10] sm:$0xff]
        %v2550 = vld [vmem:[#allocation4 + $0x18] sm:$0xff]
        %v2551 = vld [vmem:[%s13] sm:$0xff]
        %v2552 = vld [vmem:[%s13 + $0x8] sm:$0xff]
        %v2553 = vld [vmem:[%s13 + $0x10] sm:$0xff]
        %v2554 = vld [vmem:[%s13 + $0x18] sm:$0xff]
        %v2555 = vld [vmem:[#allocation18] sm:$0x1]
        %2558 = vrot.lane.b32.xlu0 %v2539, 127
        %v2559 = vpop.permute.xlu0 %2558
        %2560 = vrot.lane.b32.xlu0 %v2544, 127
        %v2561 = vpop.permute.xlu0 %2560
        %2564 = vrot.lane.b32.xlu0 %v2539, 126
        %v2565 = vpop.permute.xlu0 %2564
        %2566 = vrot.lane.b32.xlu0 %v2544, 126
        %v2567 = vpop.permute.xlu0 %2566
        %2570 = vrot.lane.b32.xlu0 %v2539, 118
        %v2571 = vpop.permute.xlu0 %2570
        %2572 = vrot.lane.b32.xlu0 %v2544, 118
        %v2573 = vpop.permute.xlu0 %2572
        %2576 = vrot.lane.b32.xlu0 %v2539, 117
        %v2577 = vpop.permute.xlu0 %2576
        %2578 = vrot.lane.b32.xlu0 %v2544, 117
        %v2579 = vpop.permute.xlu0 %2578
        %2582 = vrot.lane.b32.xlu0 %v2539, 116
        %v2583 = vpop.permute.xlu0 %2582
        %2584 = vrot.lane.b32.xlu0 %v2544, 116
        %v2585 = vpop.permute.xlu0 %2584
        %2588 = vrot.lane.b32.xlu0 %v2539, 108
        %v2589 = vpop.permute.xlu0 %2588
        %2590 = vrot.lane.b32.xlu0 %v2544, 108
        %v2591 = vpop.permute.xlu0 %2590
        %2594 = vrot.lane.b32.xlu0 %v2539, 107
        %v2595 = vpop.permute.xlu0 %2594
        %2596 = vrot.lane.b32.xlu0 %v2544, 107
        %v2597 = vpop.permute.xlu0 %2596
        %2600 = vrot.lane.b32.xlu0 %v2539, 106
        %v2601 = vpop.permute.xlu0 %2600
        %2602 = vrot.lane.b32.xlu0 %v2544, 106
        %v2603 = vpop.permute.xlu0 %2602
        %v2606 = vpack.c.bf16 %v2544, %v2539
        %v2607 = vpack.c.bf16 %v2561, %v2559
        %v2608 = vpack.c.bf16 %v2567, %v2565
        %v2609 = vpack.c.bf16 %v2573, %v2571
        %v2610 = vpack.c.bf16 %v2579, %v2577
        %v2611 = vpack.c.bf16 %v2585, %v2583
        %v2612 = vpack.c.bf16 %v2591, %v2589
        %v2613 = vpack.c.bf16 %v2597, %v2595
        %v2614 = vpack.c.bf16 %v2603, %v2601
        %2616 = vset.pattern.permute.xlu0 0
        %2617 = vperm.xlu0 %2616, %v2551
        %v2618 = vpop.permute.xlu0 %2617
        %2621 = vset.pattern.permute.xlu0 0
        %2622 = vperm.xlu0 %2621, %v2552
        %v2623 = vpop.permute.xlu0 %2622
        %2626 = vset.pattern.permute.xlu0 0
        %2627 = vperm.xlu0 %2626, %v2553
        %v2628 = vpop.permute.xlu0 %2627
        %2631 = vset.pattern.permute.xlu0 0
        %2632 = vperm.xlu0 %2631, %v2554
        %v2633 = vpop.permute.xlu0 %2632
        %v2639 = vunpack.c.l.b16 %v2547
        %v2640 = vunpack.c.h.b16 %v2547
        %v2641 = vunpack.c.l.b16 %v2548
        %v2642 = vunpack.c.h.b16 %v2548
        %v2643 = vunpack.c.l.b16 %v2549
        %v2644 = vunpack.c.h.b16 %v2549
        %v2645 = vunpack.c.l.b16 %v2550
        %v2646 = vunpack.c.h.b16 %v2550
        %v2647 = vpack.c.b16 %v2641, %v2639
        %v2648 = vpack.c.b16 %v2642, %v2640
        %v2649 = vpack.c.b16 %v2645, %v2643
        %v2650 = vpack.c.b16 %v2646, %v2644
        %vm2653 = vcmask 130048
        %v2655 = vsel %vm2653, %v2648, 0
        %v2658 = vsel %vm2653, %v2650, 0
        %2660 = vmatprep.subr.bf16.mxu0 0
        %2661 = vmatpush1.bf16.msra.mxu0 %v2606
        %2662 = vmatprep.subr.bf16.mxu0 0
        %2663 = vmatpush1.bf16.msra.mxu0 %v2607
        %2664 = vmatprep.subr.bf16.mxu0 0
        %2665 = vmatpush1.bf16.msra.mxu0 %v2608
        %2666 = vmatprep.subr.bf16.mxu0 0
        %2667 = vmatpush1.bf16.msra.mxu0 %v2609
        %2668 = vmatprep.subr.bf16.mxu0 0
        %2669 = vmatpush1.bf16.msra.mxu0 %v2610
        %2670 = vmatprep.subr.bf16.mxu0 0
        %2671 = vmatpush1.bf16.msra.mxu0 %v2611
        %2672 = vmatprep.subr.bf16.mxu0 0
        %2673 = vmatpush1.bf16.msra.mxu0 %v2612
        %2674 = vmatprep.subr.bf16.mxu0 0
        %2675 = vmatpush1.bf16.msra.mxu0 %v2613
        %2676 = vmatprep.subr.bf16.mxu0 0
        %2677 = vmatpush1.bf16.msra.mxu0 %v2614
        %2678 = vmatprep.subr.bf16.mxu0 0
        %2679 = vmatpush1.bf16.msra.mxu0 0
        %2680 = vmatprep.subr.bf16.mxu0 0
        %2681 = vmatpush1.bf16.msra.mxu0 0
        %2682 = vmatprep.subr.bf16.mxu0 0
        %2683 = vmatpush1.bf16.msra.mxu0 0
        %2684 = vmatprep.subr.bf16.mxu0 0
        %2685 = vmatpush1.bf16.msra.mxu0 0
        %2686 = vmatprep.subr.bf16.mxu0 0
        %2687 = vmatpush1.bf16.msra.mxu0 0
        %2688 = vmatprep.subr.bf16.mxu0 0
        %2689 = vmatpush1.bf16.msra.mxu0 0
        %2690 = vmatprep.subr.bf16.mxu0 0
        %2691 = vmatpush1.bf16.msra.mxu0 0
        %2692 = vmatprep.mubr.bf16.mxu0 %v2655
        %2693 = vmatmul.mubr.bf16.gmra.mrb[0].mxu0 %v2647
        %v2694 = vpop.f32.mrb[0].mxu0
        %v2695 = vadd.f32 %v2618, %v2694
        %v2696 = vpop.f32.mrb[0].mxu0
        %v2697 = vpop.f32.mrb[0].mxu0
        %v2698 = vadd.f32 %v2623, %v2697
        %v2699 = vpop.f32.mrb[0].mxu0
        %2700 = vmatprep.mubr.bf16.mxu0 %v2658
        %2701 = vmatmul.mubr.bf16.gmra.mrb[0].mxu0 %v2649
        %v2702 = vpop.f32.mrb[0].mxu0
        %v2703 = vadd.f32 %v2628, %v2702
        %v2704 = vpop.f32.mrb[0].mxu0
        %v2705 = vpop.f32.mrb[0].mxu0
        %v2706 = vadd.f32 %v2633, %v2705
        %v2707 = vpop.f32.mrb[0].mxu0
        %2708 = vdwg.mxu0
        %v2710 = vlaneseq
        %v2711 = vshrl.u32 %v2710, 7
        %v2712 = vsub.s32 0, %v2711
        %v2713 = vrot.slane %v2555, %v2712
        %v2715 = vmul.f32 %v2695, %v2713
        %v2716 = vmul.f32 %v2698, %v2713
        %v2717 = vmul.f32 %v2703, %v2713
        %v2718 = vmul.f32 %v2706, %v2713
        %vm2719 = vcmask 637952
        %v2720 = vsel %vm2719, %v2715, 0.0
        %v2721 = vsel %vm2719, %v2716, 0.0
        %v2722 = vadd.f32 %v2720, %v2721
        %v2723 = vsel %vm2719, %v2717, 0.0
        %v2724 = vadd.f32 %v2722, %v2723
        %v2725 = vsel %vm2719, %v2718, 0.0
        %v2726 = vadd.f32 %v2724, %v2725
        %2727 = vadd.xlane.f32.xlu0 %v2726
        %v2728 = vpop.xlane.xlu0 %2727
        %v2729 = vrot.slane %v2728, 4
        %v2730 = vadd.f32 %v2728, %v2729
        %v2731 = vrot.slane %v2730, 2
        %v2732 = vadd.f32 %v2730, %v2731
        %v2733 = vrot.slane %v2732, 1
        %v2734 = vadd.f32 %v2732, %v2733
        %s2735 = vtos %v2734
        %v2736 = vstv %s2735
        %v2737 = vmul.f32 %v2736, 0.001953125
        %v2738 = vsub.f32 %v2695, %v2737
        %v2739 = vsub.f32 %v2698, %v2737
        %v2740 = vsub.f32 %v2703, %v2737
        %v2741 = vsub.f32 %v2706, %v2737
        %v2742 = vmul.f32 %v2738, %v2713
        %v2743 = vmul.f32 %v2739, %v2713
        %v2744 = vmul.f32 %v2740, %v2713
        %v2745 = vmul.f32 %v2741, %v2713
        %v2746 = vmul.f32 %v2742, %v2742
        %v2747 = vmul.f32 %v2743, %v2743
        %v2748 = vmul.f32 %v2744, %v2744
        %v2749 = vmul.f32 %v2745, %v2745
        %v2750 = vsel %vm2719, %v2746, 0.0
        %v2751 = vsel %vm2719, %v2747, 0.0
        %v2752 = vadd.f32 %v2750, %v2751
        %v2753 = vsel %vm2719, %v2748, 0.0
        %v2754 = vadd.f32 %v2752, %v2753
        %v2755 = vsel %vm2719, %v2749, 0.0
        %v2756 = vadd.f32 %v2754, %v2755
        %2757 = vadd.xlane.f32.xlu0 %v2756
        %v2758 = vpop.xlane.xlu0 %2757
        %v2759 = vrot.slane %v2758, 4
        %v2760 = vadd.f32 %v2758, %v2759
        %v2761 = vrot.slane %v2760, 2
        %v2762 = vadd.f32 %v2760, %v2761
        %v2763 = vrot.slane %v2762, 1
        %v2764 = vadd.f32 %v2762, %v2763
        %s2765 = vtos %v2764
        %v2766 = vstv %s2765
        %v2767 = vmul.f32 %v2766, 0.001953125
        %v2768 = vadd.f32 %v2767, 1e-05
        %v2769 = vrsqrt.pop %v2768
        %v2770 = vmul.f32 %v2738, %v2769
        %v2771 = vmul.f32 %v2739, %v2769
        %v2772 = vmul.f32 %v2740, %v2769
        %v2773 = vmul.f32 %v2741, %v2769
        %2774 = vset.pattern.permute.xlu0 1
        %2775 = vperm.xlu0 %2774, %v2551
        %v2776 = vpop.permute.xlu0 %2775
        %2778 = vset.pattern.permute.xlu0 1
        %2779 = vperm.xlu0 %2778, %v2552
        %v2780 = vpop.permute.xlu0 %2779
        %2782 = vset.pattern.permute.xlu0 1
        %2783 = vperm.xlu0 %2782, %v2553
        %v2784 = vpop.permute.xlu0 %2783
        %2786 = vset.pattern.permute.xlu0 1
        %2787 = vperm.xlu0 %2786, %v2554
        %v2788 = vpop.permute.xlu0 %2787
        %v2790 = vmul.f32 %v2770, %v2776
        %v2791 = vmul.f32 %v2771, %v2780
        %v2792 = vmul.f32 %v2772, %v2784
        %v2793 = vmul.f32 %v2773, %v2788
        %2794 = vset.pattern.permute.xlu0 2
        %2795 = vperm.xlu0 %2794, %v2551
        %v2796 = vpop.permute.xlu0 %2795
        %2798 = vset.pattern.permute.xlu0 2
        %2799 = vperm.xlu0 %2798, %v2552
        %v2800 = vpop.permute.xlu0 %2799
        %2802 = vset.pattern.permute.xlu0 2
        %2803 = vperm.xlu0 %2802, %v2553
        %v2804 = vpop.permute.xlu0 %2803
        %2806 = vset.pattern.permute.xlu0 2
        %2807 = vperm.xlu0 %2806, %v2554
        %v2808 = vpop.permute.xlu0 %2807
        %v2810 = vadd.f32 %v2790, %v2796
        %v2811 = vadd.f32 %v2791, %v2800
        %v2812 = vadd.f32 %v2792, %v2804
        %v2813 = vadd.f32 %v2793, %v2808
        %vm2814 = vcmp.ge.f32.partialorder %v2810, 0.0
        %vm2815 = vcmp.ge.f32.partialorder %v2811, 0.0
        %vm2816 = vcmp.ge.f32.partialorder %v2812, 0.0
        %vm2817 = vcmp.ge.f32.partialorder %v2813, 0.0
        %v2818 = vmul.f32 %v2810, 0.01
        %v2819 = vmul.f32 %v2811, 0.01
        %v2820 = vmul.f32 %v2812, 0.01
        %v2821 = vmul.f32 %v2813, 0.01
        %v2822 = vsel %vm2814, %v2810, %v2818
        %v2823 = vsel %vm2815, %v2811, %v2819
        %v2824 = vsel %vm2816, %v2812, %v2820
        %v2825 = vsel %vm2817, %v2813, %v2821
        %v2826 = vld [vmem:[%s43] sm:$0xff]
        %v2827 = vld [vmem:[%s43 + $0x8] sm:$0xff]
        %v2828 = vld [vmem:[%s43 + $0x10] sm:$0xff]
        %v2829 = vld [vmem:[%s43 + $0x18] sm:$0xff]
        %v2830 = vld [vmem:[%s43 + $0x20] sm:$0xff]
        %v2831 = vld [vmem:[%s43 + $0x28] sm:$0xff]
        %v2832 = vld [vmem:[%s43 + $0x30] sm:$0xff]
        %v2833 = vld [vmem:[%s43 + $0x38] sm:$0xff]
        %v2834 = vld [vmem:[%s43 + $0x40] sm:$0xff]
        %v2835 = vld [vmem:[%s43 + $0x48] sm:$0x3f]
        %v2837 = vsel %vm2719, %v2822, 0
        %v2840 = vsel %vm2719, %v2823, 0
        %v2843 = vsel %vm2719, %v2824, 0
        %v2846 = vsel %vm2719, %v2825, 0
        %v2849 = vsel %vm1708, %v2835, 0
        %2851 = vmatprep.subr.mxu0 0.0
        %2852 = vmatpush1.msra.mxu0 %v2826
        %2853 = vmatprep.subr.mxu0 0.0
        %2854 = vmatpush1.msra.mxu0 %v2827
        %2855 = vmatprep.subr.mxu0 0.0
        %2856 = vmatpush1.msra.mxu0 %v2828
        %2857 = vmatprep.subr.mxu0 0.0
        %2858 = vmatpush1.msra.mxu0 %v2829
        %2859 = vmatprep.subr.mxu0 0.0
        %2860 = vmatpush1.msra.mxu0 %v2830
        %2861 = vmatprep.subr.mxu0 0.0
        %2862 = vmatpush1.msra.mxu0 %v2831
        %2863 = vmatprep.subr.mxu0 0.0
        %2864 = vmatpush1.msra.mxu0 %v2832
        %2865 = vmatprep.subr.mxu0 0.0
        %2866 = vmatpush1.msra.mxu0 %v2833
        %2867 = vmatprep.subr.mxu0 0.0
        %2868 = vmatpush1.msra.mxu0 %v2834
        %2869 = vmatprep.subr.mxu0 0.0
        %2870 = vmatpush1.msra.mxu0 %v2849
        %2871 = vmatprep.subr.mxu0 0.0
        %2872 = vmatpush1.msra.mxu0 0.0
        %2873 = vmatprep.subr.mxu0 0.0
        %2874 = vmatpush1.msra.mxu0 0.0
        %2875 = vmatprep.subr.mxu0 0.0
        %2876 = vmatpush1.msra.mxu0 0.0
        %2877 = vmatprep.subr.mxu0 0.0
        %2878 = vmatpush1.msra.mxu0 0.0
        %2879 = vmatprep.subr.mxu0 0.0
        %2880 = vmatpush1.msra.mxu0 0.0
        %2881 = vmatprep.subr.mxu0 0.0
        %2882 = vmatpush1.msra.mxu0 0.0
        %2883 = vmatprep.subr.mxu0 0.0
        %2884 = vmatpush1.msra.mxu0 0.0
        %2885 = vmatprep.subr.mxu0 0.0
        %2886 = vmatpush1.msra.mxu0 0.0
        %2887 = vmatprep.subr.mxu0 0.0
        %2888 = vmatpush1.msra.mxu0 0.0
        %2889 = vmatprep.subr.mxu0 0.0
        %2890 = vmatpush1.msra.mxu0 0.0
        %2891 = vmatprep.subr.mxu0 0.0
        %2892 = vmatpush1.msra.mxu0 0.0
        %2893 = vmatprep.subr.mxu0 0.0
        %2894 = vmatpush1.msra.mxu0 0.0
        %2895 = vmatprep.subr.mxu0 0.0
        %2896 = vmatpush1.msra.mxu0 0.0
        %2897 = vmatprep.subr.mxu0 0.0
        %2898 = vmatpush1.msra.mxu0 0.0
        %2899 = vmatprep.subr.mxu0 0.0
        %2900 = vmatpush1.msra.mxu0 0.0
        %2901 = vmatprep.subr.mxu0 0.0
        %2902 = vmatpush1.msra.mxu0 0.0
        %2903 = vmatprep.subr.mxu0 0.0
        %2904 = vmatpush1.msra.mxu0 0.0
        %2905 = vmatprep.subr.mxu0 0.0
        %2906 = vmatpush1.msra.mxu0 0.0
        %2907 = vmatprep.subr.mxu0 0.0
        %2908 = vmatpush1.msra.mxu0 0.0
        %2909 = vmatprep.subr.mxu0 0.0
        %2910 = vmatpush1.msra.mxu0 0.0
        %2911 = vmatprep.subr.mxu0 0.0
        %2912 = vmatpush1.msra.mxu0 0.0
        %2913 = vmatprep.subr.mxu0 0.0
        %2914 = vmatpush1.msra.mxu0 0.0
        %2915 = vmatprep.mubr.f32.mxu0 0.0
        %2916 = vmatmul.mubr.f32.gmra.mrb[0].mxu0 %v2837
        %v2917 = vpop.f32.mrb[0].mxu0
        %v2918 = vadd.f32 0.0, %v2917
        %v2919 = vpop.f32.mrb[0].mxu0
        %2920 = vmatprep.mubr.f32.mxu0 0.0
        %2921 = vmatmul.mubr.f32.gmra.mrb[0].mxu0 %v2840
        %v2922 = vpop.f32.mrb[0].mxu0
        %v2923 = vadd.f32 0.0, %v2922
        %v2924 = vpop.f32.mrb[0].mxu0
        %2925 = vmatprep.mubr.f32.mxu0 0.0
        %2926 = vmatmul.mubr.f32.gmra.mrb[0].mxu0 %v2843
        %v2927 = vpop.f32.mrb[0].mxu0
        %v2928 = vadd.f32 0.0, %v2927
        %v2929 = vpop.f32.mrb[0].mxu0
        %2930 = vmatprep.mubr.f32.mxu0 0.0
        %2931 = vmatmul.mubr.f32.gmra.mrb[0].mxu0 %v2846
        %v2932 = vpop.f32.mrb[0].mxu0
        %v2933 = vadd.f32 0.0, %v2932
        %v2934 = vpop.f32.mrb[0].mxu0
        %2935 = vdwg.mxu0
        %v2936 = vld [vmem:[#allocation6] sm:$0xff]
        %v2937 = vld [vmem:[#allocation6 + $0x8] sm:$0xf]
        %v2938 = vld [vmem:[#allocation6 + $0xc] sm:$0xff]
        %v2939 = vld [vmem:[#allocation6 + $0x14] sm:$0xf]
        %v2940 = vld [vmem:[#allocation6 + $0x18] sm:$0xff]
        %v2941 = vld [vmem:[#allocation6 + $0x20] sm:$0xf]
        %v2942 = vld [vmem:[#allocation6 + $0x24] sm:$0xff]
        %v2943 = vld [vmem:[#allocation6 + $0x2c] sm:$0xf]
        %v2944 = vld [vmem:[%s17] sm:$0xff]
        %v2945 = vld [vmem:[%s17 + $0x8] sm:$0xff]
        %v2946 = vld [vmem:[%s17 + $0x10] sm:$0xff]
        %v2947 = vld [vmem:[%s17 + $0x18] sm:$0xff]
        %v2948 = vld [vmem:[%s51] sm:$0x1]
        %2953 = vrot.lane.b32.xlu0 %v2918, 127
        %v2954 = vpop.permute.xlu0 %2953
        %2955 = vrot.lane.b32.xlu0 %v2923, 127
        %v2956 = vpop.permute.xlu0 %2955
        %2957 = vrot.lane.b32.xlu0 %v2928, 127
        %v2958 = vpop.permute.xlu0 %2957
        %2959 = vrot.lane.b32.xlu0 %v2933, 127
        %v2960 = vpop.permute.xlu0 %2959
        %2965 = vrot.lane.b32.xlu0 %v2918, 126
        %v2966 = vpop.permute.xlu0 %2965
        %2967 = vrot.lane.b32.xlu0 %v2923, 126
        %v2968 = vpop.permute.xlu0 %2967
        %2969 = vrot.lane.b32.xlu0 %v2928, 126
        %v2970 = vpop.permute.xlu0 %2969
        %2971 = vrot.lane.b32.xlu0 %v2933, 126
        %v2972 = vpop.permute.xlu0 %2971
        %2977 = vrot.lane.b32.xlu0 %v2918, 122
        %v2978 = vpop.permute.xlu0 %2977
        %2979 = vrot.lane.b32.xlu0 %v2923, 122
        %v2980 = vpop.permute.xlu0 %2979
        %2981 = vrot.lane.b32.xlu0 %v2928, 122
        %v2982 = vpop.permute.xlu0 %2981
        %2983 = vrot.lane.b32.xlu0 %v2933, 122
        %v2984 = vpop.permute.xlu0 %2983
        %2989 = vrot.lane.b32.xlu0 %v2918, 121
        %v2990 = vpop.permute.xlu0 %2989
        %2991 = vrot.lane.b32.xlu0 %v2923, 121
        %v2992 = vpop.permute.xlu0 %2991
        %2993 = vrot.lane.b32.xlu0 %v2928, 121
        %v2994 = vpop.permute.xlu0 %2993
        %2995 = vrot.lane.b32.xlu0 %v2933, 121
        %v2996 = vpop.permute.xlu0 %2995
        %3001 = vrot.lane.b32.xlu0 %v2918, 120
        %v3002 = vpop.permute.xlu0 %3001
        %3003 = vrot.lane.b32.xlu0 %v2923, 120
        %v3004 = vpop.permute.xlu0 %3003
        %3005 = vrot.lane.b32.xlu0 %v2928, 120
        %v3006 = vpop.permute.xlu0 %3005
        %3007 = vrot.lane.b32.xlu0 %v2933, 120
        %v3008 = vpop.permute.xlu0 %3007
        %3013 = vrot.lane.b32.xlu0 %v2918, 116
        %v3014 = vpop.permute.xlu0 %3013
        %3015 = vrot.lane.b32.xlu0 %v2923, 116
        %v3016 = vpop.permute.xlu0 %3015
        %3017 = vrot.lane.b32.xlu0 %v2928, 116
        %v3018 = vpop.permute.xlu0 %3017
        %3019 = vrot.lane.b32.xlu0 %v2933, 116
        %v3020 = vpop.permute.xlu0 %3019
        %3025 = vrot.lane.b32.xlu0 %v2918, 115
        %v3026 = vpop.permute.xlu0 %3025
        %3027 = vrot.lane.b32.xlu0 %v2923, 115
        %v3028 = vpop.permute.xlu0 %3027
        %3029 = vrot.lane.b32.xlu0 %v2928, 115
        %v3030 = vpop.permute.xlu0 %3029
        %3031 = vrot.lane.b32.xlu0 %v2933, 115
        %v3032 = vpop.permute.xlu0 %3031
        %3037 = vrot.lane.b32.xlu0 %v2918, 114
        %v3038 = vpop.permute.xlu0 %3037
        %3039 = vrot.lane.b32.xlu0 %v2923, 114
        %v3040 = vpop.permute.xlu0 %3039
        %3041 = vrot.lane.b32.xlu0 %v2928, 114
        %v3042 = vpop.permute.xlu0 %3041
        %3043 = vrot.lane.b32.xlu0 %v2933, 114
        %v3044 = vpop.permute.xlu0 %3043
        %v3049 = vpack.c.bf16 %v2923, %v2918
        %v3050 = vpack.c.bf16 %v2933, %v2928
        %v3051 = vpack.c.bf16 %v2956, %v2954
        %v3052 = vpack.c.bf16 %v2960, %v2958
        %v3053 = vpack.c.bf16 %v2968, %v2966
        %v3054 = vpack.c.bf16 %v2972, %v2970
        %v3055 = vpack.c.bf16 %v2980, %v2978
        %v3056 = vpack.c.bf16 %v2984, %v2982
        %v3057 = vpack.c.bf16 %v2992, %v2990
        %v3058 = vpack.c.bf16 %v2996, %v2994
        %v3059 = vpack.c.bf16 %v3004, %v3002
        %v3060 = vpack.c.bf16 %v3008, %v3006
        %v3061 = vpack.c.bf16 %v3016, %v3014
        %v3062 = vpack.c.bf16 %v3020, %v3018
        %v3063 = vpack.c.bf16 %v3028, %v3026
        %v3064 = vpack.c.bf16 %v3032, %v3030
        %v3065 = vpack.c.bf16 %v3040, %v3038
        %v3066 = vpack.c.bf16 %v3044, %v3042
        %3068 = vset.pattern.permute.xlu0 0
        %3069 = vperm.xlu0 %3068, %v2944
        %v3070 = vpop.permute.xlu0 %3069
        %3073 = vset.pattern.permute.xlu0 0
        %3074 = vperm.xlu0 %3073, %v2945
        %v3075 = vpop.permute.xlu0 %3074
        %3078 = vset.pattern.permute.xlu0 0
        %3079 = vperm.xlu0 %3078, %v2946
        %v3080 = vpop.permute.xlu0 %3079
        %3083 = vset.pattern.permute.xlu0 0
        %3084 = vperm.xlu0 %3083, %v2947
        %v3085 = vpop.permute.xlu0 %3084
        %v3095 = vunpack.c.l.b16 %v2936
        %v3096 = vunpack.c.h.b16 %v2936
        %v3097 = vunpack.c.l.b16 %v2937
        %v3098 = vunpack.c.l.b16 %v2938
        %v3099 = vunpack.c.h.b16 %v2938
        %v3100 = vunpack.c.l.b16 %v2939
        %v3101 = vunpack.c.l.b16 %v2940
        %v3102 = vunpack.c.h.b16 %v2940
        %v3103 = vunpack.c.l.b16 %v2941
        %v3104 = vunpack.c.l.b16 %v2942
        %v3105 = vunpack.c.h.b16 %v2942
        %v3106 = vunpack.c.l.b16 %v2943
        %v3107 = vpack.c.b16 %v3098, %v3095
        %v3108 = vpack.c.b16 %v3099, %v3096
        %v3109 = vpack.c.b16 %v3100, %v3097
        %v3110 = vpack.c.b16 %v3104, %v3101
        %v3111 = vpack.c.b16 %v3105, %v3102
        %v3112 = vpack.c.b16 %v3106, %v3103
        %vm3117 = vcmask 261120
        %v3119 = vsel %vm3117, %v3109, 0
        %v3122 = vsel %vm3117, %v3112, 0
        %3124 = vmatprep.subr.bf16.mxu0 0
        %3125 = vmatpush1.bf16.msra.mxu0 %v3049
        %3126 = vmatprep.subr.bf16.mxu0 0
        %3127 = vmatpush1.bf16.msra.mxu0 %v3050
        %3128 = vmatprep.subr.bf16.mxu0 0
        %3129 = vmatpush1.bf16.msra.mxu0 %v3051
        %3130 = vmatprep.subr.bf16.mxu0 0
        %3131 = vmatpush1.bf16.msra.mxu0 %v3052
        %3132 = vmatprep.subr.bf16.mxu0 0
        %3133 = vmatpush1.bf16.msra.mxu0 %v3053
        %3134 = vmatprep.subr.bf16.mxu0 0
        %3135 = vmatpush1.bf16.msra.mxu0 %v3054
        %3136 = vmatprep.subr.bf16.mxu0 0
        %3137 = vmatpush1.bf16.msra.mxu0 %v3055
        %3138 = vmatprep.subr.bf16.mxu0 0
        %3139 = vmatpush1.bf16.msra.mxu0 %v3056
        %3140 = vmatprep.subr.bf16.mxu0 0
        %3141 = vmatpush1.bf16.msra.mxu0 %v3057
        %3142 = vmatprep.subr.bf16.mxu0 0
        %3143 = vmatpush1.bf16.msra.mxu0 %v3058
        %3144 = vmatprep.subr.bf16.mxu0 0
        %3145 = vmatpush1.bf16.msra.mxu0 %v3059
        %3146 = vmatprep.subr.bf16.mxu0 0
        %3147 = vmatpush1.bf16.msra.mxu0 %v3060
        %3148 = vmatprep.subr.bf16.mxu0 0
        %3149 = vmatpush1.bf16.msra.mxu0 %v3061
        %3150 = vmatprep.subr.bf16.mxu0 0
        %3151 = vmatpush1.bf16.msra.mxu0 %v3062
        %3152 = vmatprep.subr.bf16.mxu0 0
        %3153 = vmatpush1.bf16.msra.mxu0 %v3063
        %3154 = vmatprep.subr.bf16.mxu0 0
        %3155 = vmatpush1.bf16.msra.mxu0 %v3064
        %3156 = vmatprep.mubr.bf16.mxu0 %v3108
        %3157 = vmatmul.mubr.bf16.gmra.mrb[0].mxu0 %v3107
        %v3158 = vpop.f32.mrb[0].mxu0
        %v3159 = vadd.f32 %v3070, %v3158
        %v3160 = vpop.f32.mrb[0].mxu0
        %v3161 = vpop.f32.mrb[0].mxu0
        %v3162 = vadd.f32 %v3075, %v3161
        %v3163 = vpop.f32.mrb[0].mxu0
        %3164 = vmatprep.mubr.bf16.mxu0 %v3111
        %3165 = vmatmul.mubr.bf16.gmra.mrb[0].mxu0 %v3110
        %v3166 = vpop.f32.mrb[0].mxu0
        %v3167 = vadd.f32 %v3080, %v3166
        %v3168 = vpop.f32.mrb[0].mxu0
        %v3169 = vpop.f32.mrb[0].mxu0
        %v3170 = vadd.f32 %v3085, %v3169
        %v3171 = vpop.f32.mrb[0].mxu0
        %3172 = vdwg.mxu0
        %3173 = vmatprep.subr.bf16.mxu0 0
        %3174 = vmatpush1.bf16.msra.mxu0 %v3065
        %3175 = vmatprep.subr.bf16.mxu0 0
        %3176 = vmatpush1.bf16.msra.mxu0 %v3066
        %3177 = vmatprep.subr.bf16.mxu0 0
        %3178 = vmatpush1.bf16.msra.mxu0 0
        %3179 = vmatprep.subr.bf16.mxu0 0
        %3180 = vmatpush1.bf16.msra.mxu0 0
        %3181 = vmatprep.subr.bf16.mxu0 0
        %3182 = vmatpush1.bf16.msra.mxu0 0
        %3183 = vmatprep.subr.bf16.mxu0 0
        %3184 = vmatpush1.bf16.msra.mxu0 0
        %3185 = vmatprep.subr.bf16.mxu0 0
        %3186 = vmatpush1.bf16.msra.mxu0 0
        %3187 = vmatprep.subr.bf16.mxu0 0
        %3188 = vmatpush1.bf16.msra.mxu0 0
        %3189 = vmatprep.subr.bf16.mxu0 0
        %3190 = vmatpush1.bf16.msra.mxu0 0
        %3191 = vmatprep.subr.bf16.mxu0 0
        %3192 = vmatpush1.bf16.msra.mxu0 0
        %3193 = vmatprep.subr.bf16.mxu0 0
        %3194 = vmatpush1.bf16.msra.mxu0 0
        %3195 = vmatprep.subr.bf16.mxu0 0
        %3196 = vmatpush1.bf16.msra.mxu0 0
        %3197 = vmatprep.subr.bf16.mxu0 0
        %3198 = vmatpush1.bf16.msra.mxu0 0
        %3199 = vmatprep.subr.bf16.mxu0 0
        %3200 = vmatpush1.bf16.msra.mxu0 0
        %3201 = vmatprep.subr.bf16.mxu0 0
        %3202 = vmatpush1.bf16.msra.mxu0 0
        %3203 = vmatprep.subr.bf16.mxu0 0
        %3204 = vmatpush1.bf16.msra.mxu0 0
        %3205 = vmatprep.mubr.bf16.mxu0 0
        %3206 = vmatmul.mubr.bf16.gmra.mrb[0].mxu0 %v3119
        %v3207 = vpop.f32.mrb[0].mxu0
        %v3208 = vadd.f32 %v3159, %v3207
        %v3209 = vpop.f32.mrb[0].mxu0
        %v3210 = vpop.f32.mrb[0].mxu0
        %v3211 = vadd.f32 %v3162, %v3210
        %v3212 = vpop.f32.mrb[0].mxu0
        %3213 = vmatprep.mubr.bf16.mxu0 0
        %3214 = vmatmul.mubr.bf16.gmra.mrb[0].mxu0 %v3122
        %v3215 = vpop.f32.mrb[0].mxu0
        %v3216 = vadd.f32 %v3167, %v3215
        %v3217 = vpop.f32.mrb[0].mxu0
        %v3218 = vpop.f32.mrb[0].mxu0
        %v3219 = vadd.f32 %v3170, %v3218
        %v3220 = vpop.f32.mrb[0].mxu0
        %3221 = vdwg.mxu0
        %v3223 = vlaneseq
        %v3224 = vshrl.u32 %v3223, 7
        %v3225 = vsub.s32 0, %v3224
        %v3226 = vrot.slane %v2948, %v3225
        %v3228 = vmul.f32 %v3208, %v3226
        %v3229 = vmul.f32 %v3211, %v3226
        %v3230 = vmul.f32 %v3216, %v3226
        %v3231 = vmul.f32 %v3219, %v3226
        %vm3232 = vcmask 179200
        %v3233 = vsel %vm3232, %v3228, 0.0
        %v3234 = vsel %vm3232, %v3229, 0.0
        %v3235 = vadd.f32 %v3233, %v3234
        %v3236 = vsel %vm3232, %v3230, 0.0
        %v3237 = vadd.f32 %v3235, %v3236
        %v3238 = vsel %vm3232, %v3231, 0.0
        %v3239 = vadd.f32 %v3237, %v3238
        %3240 = vadd.xlane.f32.xlu0 %v3239
        %v3241 = vpop.xlane.xlu0 %3240
        %v3242 = vrot.slane %v3241, 4
        %v3243 = vadd.f32 %v3241, %v3242
        %v3244 = vrot.slane %v3243, 2
        %v3245 = vadd.f32 %v3243, %v3244
        %v3246 = vrot.slane %v3245, 1
        %v3247 = vadd.f32 %v3245, %v3246
        %s3248 = vtos %v3247
        %v3249 = vstv %s3248
        %v3250 = vmul.f32 %v3249, 0.001953125
        %v3251 = vsub.f32 %v3208, %v3250
        %v3252 = vsub.f32 %v3211, %v3250
        %v3253 = vsub.f32 %v3216, %v3250
        %v3254 = vsub.f32 %v3219, %v3250
        %v3255 = vmul.f32 %v3251, %v3226
        %v3256 = vmul.f32 %v3252, %v3226
        %v3257 = vmul.f32 %v3253, %v3226
        %v3258 = vmul.f32 %v3254, %v3226
        %v3259 = vmul.f32 %v3255, %v3255
        %v3260 = vmul.f32 %v3256, %v3256
        %v3261 = vmul.f32 %v3257, %v3257
        %v3262 = vmul.f32 %v3258, %v3258
        %v3263 = vsel %vm3232, %v3259, 0.0
        %v3264 = vsel %vm3232, %v3260, 0.0
        %v3265 = vadd.f32 %v3263, %v3264
        %v3266 = vsel %vm3232, %v3261, 0.0
        %v3267 = vadd.f32 %v3265, %v3266
        %v3268 = vsel %vm3232, %v3262, 0.0
        %v3269 = vadd.f32 %v3267, %v3268
        %3270 = vadd.xlane.f32.xlu0 %v3269
        %v3271 = vpop.xlane.xlu0 %3270
        %v3272 = vrot.slane %v3271, 4
        %v3273 = vadd.f32 %v3271, %v3272
        %v3274 = vrot.slane %v3273, 2
        %v3275 = vadd.f32 %v3273, %v3274
        %v3276 = vrot.slane %v3275, 1
        %v3277 = vadd.f32 %v3275, %v3276
        %s3278 = vtos %v3277
        %v3279 = vstv %s3278
        %v3280 = vmul.f32 %v3279, 0.001953125
        %v3281 = vadd.f32 %v3280, 1e-05
        %v3282 = vrsqrt.pop %v3281
        %v3283 = vmul.f32 %v3251, %v3282
        %v3284 = vmul.f32 %v3252, %v3282
        %v3285 = vmul.f32 %v3253, %v3282
        %v3286 = vmul.f32 %v3254, %v3282
        %3287 = vset.pattern.permute.xlu0 1
        %3288 = vperm.xlu0 %3287, %v2944
        %v3289 = vpop.permute.xlu0 %3288
        %3291 = vset.pattern.permute.xlu0 1
        %3292 = vperm.xlu0 %3291, %v2945
        %v3293 = vpop.permute.xlu0 %3292
        %3295 = vset.pattern.permute.xlu0 1
        %3296 = vperm.xlu0 %3295, %v2946
        %v3297 = vpop.permute.xlu0 %3296
        %3299 = vset.pattern.permute.xlu0 1
        %3300 = vperm.xlu0 %3299, %v2947
        %v3301 = vpop.permute.xlu0 %3300
        %v3303 = vmul.f32 %v3283, %v3289
        %v3304 = vmul.f32 %v3284, %v3293
        %v3305 = vmul.f32 %v3285, %v3297
        %v3306 = vmul.f32 %v3286, %v3301
        %3307 = vset.pattern.permute.xlu0 2
        %3308 = vperm.xlu0 %3307, %v2944
        %v3309 = vpop.permute.xlu0 %3308
        %3311 = vset.pattern.permute.xlu0 2
        %3312 = vperm.xlu0 %3311, %v2945
        %v3313 = vpop.permute.xlu0 %3312
        %3315 = vset.pattern.permute.xlu0 2
        %3316 = vperm.xlu0 %3315, %v2946
        %v3317 = vpop.permute.xlu0 %3316
        %3319 = vset.pattern.permute.xlu0 2
        %3320 = vperm.xlu0 %3319, %v2947
        %v3321 = vpop.permute.xlu0 %3320
        %v3323 = vadd.f32 %v3303, %v3309
        %v3324 = vadd.f32 %v3304, %v3313
        %v3325 = vadd.f32 %v3305, %v3317
        %v3326 = vadd.f32 %v3306, %v3321
        %vm3327 = vcmp.ge.f32.partialorder %v3323, 0.0
        %vm3328 = vcmp.ge.f32.partialorder %v3324, 0.0
        %vm3329 = vcmp.ge.f32.partialorder %v3325, 0.0
        %vm3330 = vcmp.ge.f32.partialorder %v3326, 0.0
        %v3331 = vmul.f32 %v3323, 0.01
        %v3332 = vmul.f32 %v3324, 0.01
        %v3333 = vmul.f32 %v3325, 0.01
        %v3334 = vmul.f32 %v3326, 0.01
        %v3335 = vsel %vm3327, %v3323, %v3331
        %v3336 = vsel %vm3328, %v3324, %v3332
        %v3337 = vsel %vm3329, %v3325, %v3333
        %v3338 = vsel %vm3330, %v3326, %v3334
        %v3339 = vld [vmem:[#allocation19] sm:$0xff]
        %v3340 = vld [vmem:[#allocation19 + $0x8] sm:$0xff]
        %v3341 = vld [vmem:[#allocation19 + $0x10] sm:$0x3f]
        %v3343 = vsel %vm3232, %v3335, 0
        %v3346 = vsel %vm3232, %v3336, 0
        %v3349 = vsel %vm3232, %v3337, 0
        %v3352 = vsel %vm3232, %v3338, 0
        %v3355 = vsel %vm1708, %v3341, 0
        %3357 = vmatprep.subr.mxu0 0.0
        %3358 = vmatpush1.msra.mxu0 %v3339
        %3359 = vmatprep.subr.mxu0 0.0
        %3360 = vmatpush1.msra.mxu0 %v3340
        %3361 = vmatprep.subr.mxu0 0.0
        %3362 = vmatpush1.msra.mxu0 %v3355
        %3363 = vmatprep.subr.mxu0 0.0
        %3364 = vmatpush1.msra.mxu0 0.0
        %3365 = vmatprep.subr.mxu0 0.0
        %3366 = vmatpush1.msra.mxu0 0.0
        %3367 = vmatprep.subr.mxu0 0.0
        %3368 = vmatpush1.msra.mxu0 0.0
        %3369 = vmatprep.subr.mxu0 0.0
        %3370 = vmatpush1.msra.mxu0 0.0
        %3371 = vmatprep.subr.mxu0 0.0
        %3372 = vmatpush1.msra.mxu0 0.0
        %3373 = vmatprep.subr.mxu0 0.0
        %3374 = vmatpush1.msra.mxu0 0.0
        %3375 = vmatprep.subr.mxu0 0.0
        %3376 = vmatpush1.msra.mxu0 0.0
        %3377 = vmatprep.subr.mxu0 0.0
        %3378 = vmatpush1.msra.mxu0 0.0
        %3379 = vmatprep.subr.mxu0 0.0
        %3380 = vmatpush1.msra.mxu0 0.0
        %3381 = vmatprep.subr.mxu0 0.0
        %3382 = vmatpush1.msra.mxu0 0.0
        %3383 = vmatprep.subr.mxu0 0.0
        %3384 = vmatpush1.msra.mxu0 0.0
        %3385 = vmatprep.subr.mxu0 0.0
        %3386 = vmatpush1.msra.mxu0 0.0
        %3387 = vmatprep.subr.mxu0 0.0
        %3388 = vmatpush1.msra.mxu0 0.0
        %3389 = vmatprep.subr.mxu0 0.0
        %3390 = vmatpush1.msra.mxu0 0.0
        %3391 = vmatprep.subr.mxu0 0.0
        %3392 = vmatpush1.msra.mxu0 0.0
        %3393 = vmatprep.subr.mxu0 0.0
        %3394 = vmatpush1.msra.mxu0 0.0
        %3395 = vmatprep.subr.mxu0 0.0
        %3396 = vmatpush1.msra.mxu0 0.0
        %3397 = vmatprep.subr.mxu0 0.0
        %3398 = vmatpush1.msra.mxu0 0.0
        %3399 = vmatprep.subr.mxu0 0.0
        %3400 = vmatpush1.msra.mxu0 0.0
        %3401 = vmatprep.subr.mxu0 0.0
        %3402 = vmatpush1.msra.mxu0 0.0
        %3403 = vmatprep.subr.mxu0 0.0
        %3404 = vmatpush1.msra.mxu0 0.0
        %3405 = vmatprep.subr.mxu0 0.0
        %3406 = vmatpush1.msra.mxu0 0.0
        %3407 = vmatprep.subr.mxu0 0.0
        %3408 = vmatpush1.msra.mxu0 0.0
        %3409 = vmatprep.subr.mxu0 0.0
        %3410 = vmatpush1.msra.mxu0 0.0
        %3411 = vmatprep.subr.mxu0 0.0
        %3412 = vmatpush1.msra.mxu0 0.0
        %3413 = vmatprep.subr.mxu0 0.0
        %3414 = vmatpush1.msra.mxu0 0.0
        %3415 = vmatprep.subr.mxu0 0.0
        %3416 = vmatpush1.msra.mxu0 0.0
        %3417 = vmatprep.subr.mxu0 0.0
        %3418 = vmatpush1.msra.mxu0 0.0
        %3419 = vmatprep.subr.mxu0 0.0
        %3420 = vmatpush1.msra.mxu0 0.0
        %3421 = vmatprep.mubr.f32.mxu0 0.0
        %3422 = vmatmul.mubr.f32.gmra.mrb[0].mxu0 %v3343
        %v3423 = vpop.f32.mrb[0].mxu0
        %v3424 = vadd.f32 0.0, %v3423
        %v3425 = vpop.f32.mrb[0].mxu0
        %3426 = vmatprep.mubr.f32.mxu0 0.0
        %3427 = vmatmul.mubr.f32.gmra.mrb[0].mxu0 %v3346
        %v3428 = vpop.f32.mrb[0].mxu0
        %v3429 = vadd.f32 0.0, %v3428
        %v3430 = vpop.f32.mrb[0].mxu0
        %3431 = vmatprep.mubr.f32.mxu0 0.0
        %3432 = vmatmul.mubr.f32.gmra.mrb[0].mxu0 %v3349
        %v3433 = vpop.f32.mrb[0].mxu0
        %v3434 = vadd.f32 0.0, %v3433
        %v3435 = vpop.f32.mrb[0].mxu0
        %3436 = vmatprep.mubr.f32.mxu0 0.0
        %3437 = vmatmul.mubr.f32.gmra.mrb[0].mxu0 %v3352
        %v3438 = vpop.f32.mrb[0].mxu0
        %v3439 = vadd.f32 0.0, %v3438
        %v3440 = vpop.f32.mrb[0].mxu0
        %3441 = vdwg.mxu0
        %3442 = vst [vmem:[%s1288] sm:$0xff] %v3424
        %3443 = vst [vmem:[%s1288 + $0x8] sm:$0xff] %v3429
        %3444 = vst [vmem:[%s1288 + $0x10] sm:$0xff] %v3434
        %3445 = vst [vmem:[%s1288 + $0x18] sm:$0xff] %v3439
        %v3446 = vld [vmem:[#allocation21] sm:$0xff]
        %v3447 = vld [vmem:[#allocation21 + $0x8] sm:$0xff]
        %v3448 = vld [vmem:[#allocation21 + $0x10] sm:$0x3f]
        %v3450 = vsel %vm1708, %v3448, 0
        %3452 = vmatprep.subr.mxu0 0.0
        %3453 = vmatpush1.msra.mxu0 %v3446
        %3454 = vmatprep.subr.mxu0 0.0
        %3455 = vmatpush1.msra.mxu0 %v3447
        %3456 = vmatprep.subr.mxu0 0.0
        %3457 = vmatpush1.msra.mxu0 %v3450
        %3458 = vmatprep.subr.mxu0 0.0
        %3459 = vmatpush1.msra.mxu0 0.0
        %3460 = vmatprep.subr.mxu0 0.0
        %3461 = vmatpush1.msra.mxu0 0.0
        %3462 = vmatprep.subr.mxu0 0.0
        %3463 = vmatpush1.msra.mxu0 0.0
        %3464 = vmatprep.subr.mxu0 0.0
        %3465 = vmatpush1.msra.mxu0 0.0
        %3466 = vmatprep.subr.mxu0 0.0
        %3467 = vmatpush1.msra.mxu0 0.0
        %3468 = vmatprep.subr.mxu0 0.0
        %3469 = vmatpush1.msra.mxu0 0.0
        %3470 = vmatprep.subr.mxu0 0.0
        %3471 = vmatpush1.msra.mxu0 0.0
        %3472 = vmatprep.subr.mxu0 0.0
        %3473 = vmatpush1.msra.mxu0 0.0
        %3474 = vmatprep.subr.mxu0 0.0
        %3475 = vmatpush1.msra.mxu0 0.0
        %3476 = vmatprep.subr.mxu0 0.0
        %3477 = vmatpush1.msra.mxu0 0.0
        %3478 = vmatprep.subr.mxu0 0.0
        %3479 = vmatpush1.msra.mxu0 0.0
        %3480 = vmatprep.subr.mxu0 0.0
        %3481 = vmatpush1.msra.mxu0 0.0
        %3482 = vmatprep.subr.mxu0 0.0
        %3483 = vmatpush1.msra.mxu0 0.0
        %3484 = vmatprep.subr.mxu0 0.0
        %3485 = vmatpush1.msra.mxu0 0.0
        %3486 = vmatprep.subr.mxu0 0.0
        %3487 = vmatpush1.msra.mxu0 0.0
        %3488 = vmatprep.subr.mxu0 0.0
        %3489 = vmatpush1.msra.mxu0 0.0
        %3490 = vmatprep.subr.mxu0 0.0
        %3491 = vmatpush1.msra.mxu0 0.0
        %3492 = vmatprep.subr.mxu0 0.0
        %3493 = vmatpush1.msra.mxu0 0.0
        %3494 = vmatprep.subr.mxu0 0.0
        %3495 = vmatpush1.msra.mxu0 0.0
        %3496 = vmatprep.subr.mxu0 0.0
        %3497 = vmatpush1.msra.mxu0 0.0
        %3498 = vmatprep.subr.mxu0 0.0
        %3499 = vmatpush1.msra.mxu0 0.0
        %3500 = vmatprep.subr.mxu0 0.0
        %3501 = vmatpush1.msra.mxu0 0.0
        %3502 = vmatprep.subr.mxu0 0.0
        %3503 = vmatpush1.msra.mxu0 0.0
        %3504 = vmatprep.subr.mxu0 0.0
        %3505 = vmatpush1.msra.mxu0 0.0
        %3506 = vmatprep.subr.mxu0 0.0
        %3507 = vmatpush1.msra.mxu0 0.0
        %3508 = vmatprep.subr.mxu0 0.0
        %3509 = vmatpush1.msra.mxu0 0.0
        %3510 = vmatprep.subr.mxu0 0.0
        %3511 = vmatpush1.msra.mxu0 0.0
        %3512 = vmatprep.subr.mxu0 0.0
        %3513 = vmatpush1.msra.mxu0 0.0
        %3514 = vmatprep.subr.mxu0 0.0
        %3515 = vmatpush1.msra.mxu0 0.0
        %3516 = vmatprep.mubr.f32.mxu0 0.0
        %3517 = vmatmul.mubr.f32.gmra.mrb[0].mxu0 %v3343
        %v3518 = vpop.f32.mrb[0].mxu0
        %v3519 = vadd.f32 0.0, %v3518
        %v3520 = vpop.f32.mrb[0].mxu0
        %3521 = vmatprep.mubr.f32.mxu0 0.0
        %3522 = vmatmul.mubr.f32.gmra.mrb[0].mxu0 %v3346
        %v3523 = vpop.f32.mrb[0].mxu0
        %v3524 = vadd.f32 0.0, %v3523
        %v3525 = vpop.f32.mrb[0].mxu0
        %3526 = vmatprep.mubr.f32.mxu0 0.0
        %3527 = vmatmul.mubr.f32.gmra.mrb[0].mxu0 %v3349
        %v3528 = vpop.f32.mrb[0].mxu0
        %v3529 = vadd.f32 0.0, %v3528
        %v3530 = vpop.f32.mrb[0].mxu0
        %3531 = vmatprep.mubr.f32.mxu0 0.0
        %3532 = vmatmul.mubr.f32.gmra.mrb[0].mxu0 %v3352
        %v3533 = vpop.f32.mrb[0].mxu0
        %v3534 = vadd.f32 0.0, %v3533
        %v3535 = vpop.f32.mrb[0].mxu0
        %3536 = vdwg.mxu0
        %v3537 = vld [vmem:[#allocation7] sm:$0xff]
        %v3538 = vld [vmem:[#allocation7 + $0x8] sm:$0xf]
        %v3539 = vld [vmem:[#allocation7 + $0xc] sm:$0xff]
        %v3540 = vld [vmem:[#allocation7 + $0x14] sm:$0xf]
        %v3541 = vld [vmem:[%s21] sm:$0xff]
        %v3542 = vld [vmem:[%s21 + $0x8] sm:$0xff]
        %v3543 = vld [vmem:[%s51] sm:$0x1]
        %3548 = vrot.lane.b32.xlu0 %v3519, 127
        %v3549 = vpop.permute.xlu0 %3548
        %3550 = vrot.lane.b32.xlu0 %v3524, 127
        %v3551 = vpop.permute.xlu0 %3550
        %3552 = vrot.lane.b32.xlu0 %v3529, 127
        %v3553 = vpop.permute.xlu0 %3552
        %3554 = vrot.lane.b32.xlu0 %v3534, 127
        %v3555 = vpop.permute.xlu0 %3554
        %3560 = vrot.lane.b32.xlu0 %v3519, 126
        %v3561 = vpop.permute.xlu0 %3560
        %3562 = vrot.lane.b32.xlu0 %v3524, 126
        %v3563 = vpop.permute.xlu0 %3562
        %3564 = vrot.lane.b32.xlu0 %v3529, 126
        %v3565 = vpop.permute.xlu0 %3564
        %3566 = vrot.lane.b32.xlu0 %v3534, 126
        %v3567 = vpop.permute.xlu0 %3566
        %3572 = vrot.lane.b32.xlu0 %v3519, 122
        %v3573 = vpop.permute.xlu0 %3572
        %3574 = vrot.lane.b32.xlu0 %v3524, 122
        %v3575 = vpop.permute.xlu0 %3574
        %3576 = vrot.lane.b32.xlu0 %v3529, 122
        %v3577 = vpop.permute.xlu0 %3576
        %3578 = vrot.lane.b32.xlu0 %v3534, 122
        %v3579 = vpop.permute.xlu0 %3578
        %3584 = vrot.lane.b32.xlu0 %v3519, 121
        %v3585 = vpop.permute.xlu0 %3584
        %3586 = vrot.lane.b32.xlu0 %v3524, 121
        %v3587 = vpop.permute.xlu0 %3586
        %3588 = vrot.lane.b32.xlu0 %v3529, 121
        %v3589 = vpop.permute.xlu0 %3588
        %3590 = vrot.lane.b32.xlu0 %v3534, 121
        %v3591 = vpop.permute.xlu0 %3590
        %3596 = vrot.lane.b32.xlu0 %v3519, 120
        %v3597 = vpop.permute.xlu0 %3596
        %3598 = vrot.lane.b32.xlu0 %v3524, 120
        %v3599 = vpop.permute.xlu0 %3598
        %3600 = vrot.lane.b32.xlu0 %v3529, 120
        %v3601 = vpop.permute.xlu0 %3600
        %3602 = vrot.lane.b32.xlu0 %v3534, 120
        %v3603 = vpop.permute.xlu0 %3602
        %3608 = vrot.lane.b32.xlu0 %v3519, 116
        %v3609 = vpop.permute.xlu0 %3608
        %3610 = vrot.lane.b32.xlu0 %v3524, 116
        %v3611 = vpop.permute.xlu0 %3610
        %3612 = vrot.lane.b32.xlu0 %v3529, 116
        %v3613 = vpop.permute.xlu0 %3612
        %3614 = vrot.lane.b32.xlu0 %v3534, 116
        %v3615 = vpop.permute.xlu0 %3614
        %3620 = vrot.lane.b32.xlu0 %v3519, 115
        %v3621 = vpop.permute.xlu0 %3620
        %3622 = vrot.lane.b32.xlu0 %v3524, 115
        %v3623 = vpop.permute.xlu0 %3622
        %3624 = vrot.lane.b32.xlu0 %v3529, 115
        %v3625 = vpop.permute.xlu0 %3624
        %3626 = vrot.lane.b32.xlu0 %v3534, 115
        %v3627 = vpop.permute.xlu0 %3626
        %3632 = vrot.lane.b32.xlu0 %v3519, 114
        %v3633 = vpop.permute.xlu0 %3632
        %3634 = vrot.lane.b32.xlu0 %v3524, 114
        %v3635 = vpop.permute.xlu0 %3634
        %3636 = vrot.lane.b32.xlu0 %v3529, 114
        %v3637 = vpop.permute.xlu0 %3636
        %3638 = vrot.lane.b32.xlu0 %v3534, 114
        %v3639 = vpop.permute.xlu0 %3638
        %v3644 = vpack.c.bf16 %v3524, %v3519
        %v3645 = vpack.c.bf16 %v3534, %v3529
        %v3646 = vpack.c.bf16 %v3551, %v3549
        %v3647 = vpack.c.bf16 %v3555, %v3553
        %v3648 = vpack.c.bf16 %v3563, %v3561
        %v3649 = vpack.c.bf16 %v3567, %v3565
        %v3650 = vpack.c.bf16 %v3575, %v3573
        %v3651 = vpack.c.bf16 %v3579, %v3577
        %v3652 = vpack.c.bf16 %v3587, %v3585
        %v3653 = vpack.c.bf16 %v3591, %v3589
        %v3654 = vpack.c.bf16 %v3599, %v3597
        %v3655 = vpack.c.bf16 %v3603, %v3601
        %v3656 = vpack.c.bf16 %v3611, %v3609
        %v3657 = vpack.c.bf16 %v3615, %v3613
        %v3658 = vpack.c.bf16 %v3623, %v3621
        %v3659 = vpack.c.bf16 %v3627, %v3625
        %v3660 = vpack.c.bf16 %v3635, %v3633
        %v3661 = vpack.c.bf16 %v3639, %v3637
        %3663 = vset.pattern.permute.xlu0 0
        %3664 = vperm.xlu0 %3663, %v3541
        %v3665 = vpop.permute.xlu0 %3664
        %3668 = vset.pattern.permute.xlu0 0
        %3669 = vperm.xlu0 %3668, %v3542
        %v3670 = vpop.permute.xlu0 %3669
        %v3676 = vunpack.c.l.b16 %v3537
        %v3677 = vunpack.c.h.b16 %v3537
        %v3678 = vunpack.c.l.b16 %v3538
        %v3679 = vunpack.c.l.b16 %v3539
        %v3680 = vunpack.c.h.b16 %v3539
        %v3681 = vunpack.c.l.b16 %v3540
        %v3682 = vpack.c.b16 %v3679, %v3676
        %v3683 = vpack.c.b16 %v3680, %v3677
        %v3684 = vpack.c.b16 %v3681, %v3678
        %v3688 = vsel %vm3117, %v3684, 0
        %3690 = vmatprep.subr.bf16.mxu0 0
        %3691 = vmatpush1.bf16.msra.mxu0 %v3644
        %3692 = vmatprep.subr.bf16.mxu0 0
        %3693 = vmatpush1.bf16.msra.mxu0 %v3645
        %3694 = vmatprep.subr.bf16.mxu0 0
        %3695 = vmatpush1.bf16.msra.mxu0 %v3646
        %3696 = vmatprep.subr.bf16.mxu0 0
        %3697 = vmatpush1.bf16.msra.mxu0 %v3647
        %3698 = vmatprep.subr.bf16.mxu0 0
        %3699 = vmatpush1.bf16.msra.mxu0 %v3648
        %3700 = vmatprep.subr.bf16.mxu0 0
        %3701 = vmatpush1.bf16.msra.mxu0 %v3649
        %3702 = vmatprep.subr.bf16.mxu0 0
        %3703 = vmatpush1.bf16.msra.mxu0 %v3650
        %3704 = vmatprep.subr.bf16.mxu0 0
        %3705 = vmatpush1.bf16.msra.mxu0 %v3651
        %3706 = vmatprep.subr.bf16.mxu0 0
        %3707 = vmatpush1.bf16.msra.mxu0 %v3652
        %3708 = vmatprep.subr.bf16.mxu0 0
        %3709 = vmatpush1.bf16.msra.mxu0 %v3653
        %3710 = vmatprep.subr.bf16.mxu0 0
        %3711 = vmatpush1.bf16.msra.mxu0 %v3654
        %3712 = vmatprep.subr.bf16.mxu0 0
        %3713 = vmatpush1.bf16.msra.mxu0 %v3655
        %3714 = vmatprep.subr.bf16.mxu0 0
        %3715 = vmatpush1.bf16.msra.mxu0 %v3656
        %3716 = vmatprep.subr.bf16.mxu0 0
        %3717 = vmatpush1.bf16.msra.mxu0 %v3657
        %3718 = vmatprep.subr.bf16.mxu0 0
        %3719 = vmatpush1.bf16.msra.mxu0 %v3658
        %3720 = vmatprep.subr.bf16.mxu0 0
        %3721 = vmatpush1.bf16.msra.mxu0 %v3659
        %3722 = vmatprep.mubr.bf16.mxu0 %v3683
        %3723 = vmatmul.mubr.bf16.gmra.mrb[0].mxu0 %v3682
        %v3724 = vpop.f32.mrb[0].mxu0
        %v3725 = vadd.f32 %v3665, %v3724
        %v3726 = vpop.f32.mrb[0].mxu0
        %v3727 = vpop.f32.mrb[0].mxu0
        %v3728 = vadd.f32 %v3670, %v3727
        %v3729 = vpop.f32.mrb[0].mxu0
        %3730 = vdwg.mxu0
        %3731 = vmatprep.subr.bf16.mxu0 0
        %3732 = vmatpush1.bf16.msra.mxu0 %v3660
        %3733 = vmatprep.subr.bf16.mxu0 0
        %3734 = vmatpush1.bf16.msra.mxu0 %v3661
        %3735 = vmatprep.subr.bf16.mxu0 0
        %3736 = vmatpush1.bf16.msra.mxu0 0
        %3737 = vmatprep.subr.bf16.mxu0 0
        %3738 = vmatpush1.bf16.msra.mxu0 0
        %3739 = vmatprep.subr.bf16.mxu0 0
        %3740 = vmatpush1.bf16.msra.mxu0 0
        %3741 = vmatprep.subr.bf16.mxu0 0
        %3742 = vmatpush1.bf16.msra.mxu0 0
        %3743 = vmatprep.subr.bf16.mxu0 0
        %3744 = vmatpush1.bf16.msra.mxu0 0
        %3745 = vmatprep.subr.bf16.mxu0 0
        %3746 = vmatpush1.bf16.msra.mxu0 0
        %3747 = vmatprep.subr.bf16.mxu0 0
        %3748 = vmatpush1.bf16.msra.mxu0 0
        %3749 = vmatprep.subr.bf16.mxu0 0
        %3750 = vmatpush1.bf16.msra.mxu0 0
        %3751 = vmatprep.subr.bf16.mxu0 0
        %3752 = vmatpush1.bf16.msra.mxu0 0
        %3753 = vmatprep.subr.bf16.mxu0 0
        %3754 = vmatpush1.bf16.msra.mxu0 0
        %3755 = vmatprep.subr.bf16.mxu0 0
        %3756 = vmatpush1.bf16.msra.mxu0 0
        %3757 = vmatprep.subr.bf16.mxu0 0
        %3758 = vmatpush1.bf16.msra.mxu0 0
        %3759 = vmatprep.subr.bf16.mxu0 0
        %3760 = vmatpush1.bf16.msra.mxu0 0
        %3761 = vmatprep.subr.bf16.mxu0 0
        %3762 = vmatpush1.bf16.msra.mxu0 0
        %3763 = vmatprep.mubr.bf16.mxu0 0
        %3764 = vmatmul.mubr.bf16.gmra.mrb[0].mxu0 %v3688
        %v3765 = vpop.f32.mrb[0].mxu0
        %v3766 = vadd.f32 %v3725, %v3765
        %v3767 = vpop.f32.mrb[0].mxu0
        %v3768 = vpop.f32.mrb[0].mxu0
        %v3769 = vadd.f32 %v3728, %v3768
        %v3770 = vpop.f32.mrb[0].mxu0
        %3771 = vdwg.mxu0
        %v3773 = vlaneseq
        %v3774 = vshrl.u32 %v3773, 7
        %v3775 = vsub.s32 0, %v3774
        %v3776 = vrot.slane %v3543, %v3775
        %v3778 = vmul.f32 %v3766, %v3776
        %v3779 = vmul.f32 %v3769, %v3776
        %v3780 = vsel %vm3232, %v3778, 0.0
        %v3781 = vsel %vm3232, %v3779, 0.0
        %v3782 = vadd.f32 %v3780, %v3781
        %3783 = vadd.xlane.f32.xlu0 %v3782
        %v3784 = vpop.xlane.xlu0 %3783
        %v3785 = vrot.slane %v3784, 4
        %v3786 = vadd.f32 %v3784, %v3785
        %v3787 = vrot.slane %v3786, 2
        %v3788 = vadd.f32 %v3786, %v3787
        %v3789 = vrot.slane %v3788, 1
        %v3790 = vadd.f32 %v3788, %v3789
        %s3791 = vtos %v3790
        %v3792 = vstv %s3791
        %v3793 = vmul.f32 %v3792, 0.00390625
        %v3794 = vsub.f32 %v3766, %v3793
        %v3795 = vsub.f32 %v3769, %v3793
        %v3796 = vmul.f32 %v3794, %v3776
        %v3797 = vmul.f32 %v3795, %v3776
        %v3798 = vmul.f32 %v3796, %v3796
        %v3799 = vmul.f32 %v3797, %v3797
        %v3800 = vsel %vm3232, %v3798, 0.0
        %v3801 = vsel %vm3232, %v3799, 0.0
        %v3802 = vadd.f32 %v3800, %v3801
        %3803 = vadd.xlane.f32.xlu0 %v3802
        %v3804 = vpop.xlane.xlu0 %3803
        %v3805 = vrot.slane %v3804, 4
        %v3806 = vadd.f32 %v3804, %v3805
        %v3807 = vrot.slane %v3806, 2
        %v3808 = vadd.f32 %v3806, %v3807
        %v3809 = vrot.slane %v3808, 1
        %v3810 = vadd.f32 %v3808, %v3809
        %s3811 = vtos %v3810
        %v3812 = vstv %s3811
        %v3813 = vmul.f32 %v3812, 0.00390625
        %v3814 = vadd.f32 %v3813, 1e-05
        %v3815 = vrsqrt.pop %v3814
        %v3816 = vmul.f32 %v3794, %v3815
        %v3817 = vmul.f32 %v3795, %v3815
        %3818 = vset.pattern.permute.xlu0 1
        %3819 = vperm.xlu0 %3818, %v3541
        %v3820 = vpop.permute.xlu0 %3819
        %3822 = vset.pattern.permute.xlu0 1
        %3823 = vperm.xlu0 %3822, %v3542
        %v3824 = vpop.permute.xlu0 %3823
        %v3826 = vmul.f32 %v3816, %v3820
        %v3827 = vmul.f32 %v3817, %v3824
        %3828 = vset.pattern.permute.xlu0 2
        %3829 = vperm.xlu0 %3828, %v3541
        %v3830 = vpop.permute.xlu0 %3829
        %3832 = vset.pattern.permute.xlu0 2
        %3833 = vperm.xlu0 %3832, %v3542
        %v3834 = vpop.permute.xlu0 %3833
        %v3836 = vadd.f32 %v3826, %v3830
        %v3837 = vadd.f32 %v3827, %v3834
        %vm3838 = vcmp.ge.f32.partialorder %v3836, 0.0
        %vm3839 = vcmp.ge.f32.partialorder %v3837, 0.0
        %v3840 = vmul.f32 %v3836, 0.01
        %v3841 = vmul.f32 %v3837, 0.01
        %v3842 = vsel %vm3838, %v3836, %v3840
        %v3843 = vsel %vm3839, %v3837, %v3841
        %v3844 = vld [vmem:[#allocation22] sm:$0xff]
        %v3845 = vld [vmem:[#allocation22 + $0x8] sm:$0xff]
        %v3846 = vld [vmem:[#allocation22 + $0x10] sm:$0x3f]
        %v3848 = vsel %vm3232, %v3842, 0
        %v3851 = vsel %vm3232, %v3843, 0
        %v3854 = vsel %vm1708, %v3846, 0
        %3856 = vmatprep.subr.mxu0 0.0
        %3857 = vmatpush1.msra.mxu0 %v3844
        %3858 = vmatprep.subr.mxu0 0.0
        %3859 = vmatpush1.msra.mxu0 %v3845
        %3860 = vmatprep.subr.mxu0 0.0
        %3861 = vmatpush1.msra.mxu0 %v3854
        %3862 = vmatprep.subr.mxu0 0.0
        %3863 = vmatpush1.msra.mxu0 0.0
        %3864 = vmatprep.subr.mxu0 0.0
        %3865 = vmatpush1.msra.mxu0 0.0
        %3866 = vmatprep.subr.mxu0 0.0
        %3867 = vmatpush1.msra.mxu0 0.0
        %3868 = vmatprep.subr.mxu0 0.0
        %3869 = vmatpush1.msra.mxu0 0.0
        %3870 = vmatprep.subr.mxu0 0.0
        %3871 = vmatpush1.msra.mxu0 0.0
        %3872 = vmatprep.subr.mxu0 0.0
        %3873 = vmatpush1.msra.mxu0 0.0
        %3874 = vmatprep.subr.mxu0 0.0
        %3875 = vmatpush1.msra.mxu0 0.0
        %3876 = vmatprep.subr.mxu0 0.0
        %3877 = vmatpush1.msra.mxu0 0.0
        %3878 = vmatprep.subr.mxu0 0.0
        %3879 = vmatpush1.msra.mxu0 0.0
        %3880 = vmatprep.subr.mxu0 0.0
        %3881 = vmatpush1.msra.mxu0 0.0
        %3882 = vmatprep.subr.mxu0 0.0
        %3883 = vmatpush1.msra.mxu0 0.0
        %3884 = vmatprep.subr.mxu0 0.0
        %3885 = vmatpush1.msra.mxu0 0.0
        %3886 = vmatprep.subr.mxu0 0.0
        %3887 = vmatpush1.msra.mxu0 0.0
        %3888 = vmatprep.subr.mxu0 0.0
        %3889 = vmatpush1.msra.mxu0 0.0
        %3890 = vmatprep.subr.mxu0 0.0
        %3891 = vmatpush1.msra.mxu0 0.0
        %3892 = vmatprep.subr.mxu0 0.0
        %3893 = vmatpush1.msra.mxu0 0.0
        %3894 = vmatprep.subr.mxu0 0.0
        %3895 = vmatpush1.msra.mxu0 0.0
        %3896 = vmatprep.subr.mxu0 0.0
        %3897 = vmatpush1.msra.mxu0 0.0
        %3898 = vmatprep.subr.mxu0 0.0
        %3899 = vmatpush1.msra.mxu0 0.0
        %3900 = vmatprep.subr.mxu0 0.0
        %3901 = vmatpush1.msra.mxu0 0.0
        %3902 = vmatprep.subr.mxu0 0.0
        %3903 = vmatpush1.msra.mxu0 0.0
        %3904 = vmatprep.subr.mxu0 0.0
        %3905 = vmatpush1.msra.mxu0 0.0
        %3906 = vmatprep.subr.mxu0 0.0
        %3907 = vmatpush1.msra.mxu0 0.0
        %3908 = vmatprep.subr.mxu0 0.0
        %3909 = vmatpush1.msra.mxu0 0.0
        %3910 = vmatprep.subr.mxu0 0.0
        %3911 = vmatpush1.msra.mxu0 0.0
        %3912 = vmatprep.subr.mxu0 0.0
        %3913 = vmatpush1.msra.mxu0 0.0
        %3914 = vmatprep.subr.mxu0 0.0
        %3915 = vmatpush1.msra.mxu0 0.0
        %3916 = vmatprep.subr.mxu0 0.0
        %3917 = vmatpush1.msra.mxu0 0.0
        %3918 = vmatprep.subr.mxu0 0.0
        %3919 = vmatpush1.msra.mxu0 0.0
        %3920 = vmatprep.mubr.f32.mxu0 0.0
        %3921 = vmatmul.mubr.f32.gmra.mrb[0].mxu0 %v3848
        %v3922 = vpop.f32.mrb[0].mxu0
        %v3923 = vadd.f32 0.0, %v3922
        %v3924 = vpop.f32.mrb[0].mxu0
        %3925 = vmatprep.mubr.f32.mxu0 0.0
        %3926 = vmatmul.mubr.f32.gmra.mrb[0].mxu0 %v3851
        %v3927 = vpop.f32.mrb[0].mxu0
        %v3928 = vadd.f32 0.0, %v3927
        %v3929 = vpop.f32.mrb[0].mxu0
        %3930 = vdwg.mxu0
        %v3931 = vld [vmem:[#allocation9] sm:$0xff]
        %v3932 = vld [vmem:[#allocation9 + $0x8] sm:$0xff]
        %v3933 = vld [vmem:[%s25] sm:$0xff]
        %v3934 = vld [vmem:[%s25 + $0x8] sm:$0xff]
        %v3935 = vld [vmem:[%s59] sm:$0x1]
        %v3936 = vadd.f32 %v2539, %v3923
        %v3937 = vadd.f32 %v2544, %v3928
        %3940 = vrot.lane.b32.xlu0 %v3936, 127
        %v3941 = vpop.permute.xlu0 %3940
        %3942 = vrot.lane.b32.xlu0 %v3937, 127
        %v3943 = vpop.permute.xlu0 %3942
        %3946 = vrot.lane.b32.xlu0 %v3936, 126
        %v3947 = vpop.permute.xlu0 %3946
        %3948 = vrot.lane.b32.xlu0 %v3937, 126
        %v3949 = vpop.permute.xlu0 %3948
        %3952 = vrot.lane.b32.xlu0 %v3936, 118
        %v3953 = vpop.permute.xlu0 %3952
        %3954 = vrot.lane.b32.xlu0 %v3937, 118
        %v3955 = vpop.permute.xlu0 %3954
        %3958 = vrot.lane.b32.xlu0 %v3936, 117
        %v3959 = vpop.permute.xlu0 %3958
        %3960 = vrot.lane.b32.xlu0 %v3937, 117
        %v3961 = vpop.permute.xlu0 %3960
        %3964 = vrot.lane.b32.xlu0 %v3936, 116
        %v3965 = vpop.permute.xlu0 %3964
        %3966 = vrot.lane.b32.xlu0 %v3937, 116
        %v3967 = vpop.permute.xlu0 %3966
        %3970 = vrot.lane.b32.xlu0 %v3936, 108
        %v3971 = vpop.permute.xlu0 %3970
        %3972 = vrot.lane.b32.xlu0 %v3937, 108
        %v3973 = vpop.permute.xlu0 %3972
        %3976 = vrot.lane.b32.xlu0 %v3936, 107
        %v3977 = vpop.permute.xlu0 %3976
        %3978 = vrot.lane.b32.xlu0 %v3937, 107
        %v3979 = vpop.permute.xlu0 %3978
        %3982 = vrot.lane.b32.xlu0 %v3936, 106
        %v3983 = vpop.permute.xlu0 %3982
        %3984 = vrot.lane.b32.xlu0 %v3937, 106
        %v3985 = vpop.permute.xlu0 %3984
        %v3988 = vpack.c.bf16 %v3937, %v3936
        %v3989 = vpack.c.bf16 %v3943, %v3941
        %v3990 = vpack.c.bf16 %v3949, %v3947
        %v3991 = vpack.c.bf16 %v3955, %v3953
        %v3992 = vpack.c.bf16 %v3961, %v3959
        %v3993 = vpack.c.bf16 %v3967, %v3965
        %v3994 = vpack.c.bf16 %v3973, %v3971
        %v3995 = vpack.c.bf16 %v3979, %v3977
        %v3996 = vpack.c.bf16 %v3985, %v3983
        %3998 = vset.pattern.permute.xlu0 0
        %3999 = vperm.xlu0 %3998, %v3933
        %v4000 = vpop.permute.xlu0 %3999
        %4003 = vset.pattern.permute.xlu0 0
        %4004 = vperm.xlu0 %4003, %v3934
        %v4005 = vpop.permute.xlu0 %4004
        %v4009 = vunpack.c.l.b16 %v3931
        %v4010 = vunpack.c.h.b16 %v3931
        %v4011 = vunpack.c.l.b16 %v3932
        %v4012 = vunpack.c.h.b16 %v3932
        %v4013 = vpack.c.b16 %v4011, %v4009
        %v4014 = vpack.c.b16 %v4012, %v4010
        %v4017 = vsel %vm2653, %v4014, 0
        %4019 = vmatprep.subr.bf16.mxu0 0
        %4020 = vmatpush1.bf16.msra.mxu0 %v3988
        %4021 = vmatprep.subr.bf16.mxu0 0
        %4022 = vmatpush1.bf16.msra.mxu0 %v3989
        %4023 = vmatprep.subr.bf16.mxu0 0
        %4024 = vmatpush1.bf16.msra.mxu0 %v3990
        %4025 = vmatprep.subr.bf16.mxu0 0
        %4026 = vmatpush1.bf16.msra.mxu0 %v3991
        %4027 = vmatprep.subr.bf16.mxu0 0
        %4028 = vmatpush1.bf16.msra.mxu0 %v3992
        %4029 = vmatprep.subr.bf16.mxu0 0
        %4030 = vmatpush1.bf16.msra.mxu0 %v3993
        %4031 = vmatprep.subr.bf16.mxu0 0
        %4032 = vmatpush1.bf16.msra.mxu0 %v3994
        %4033 = vmatprep.subr.bf16.mxu0 0
        %4034 = vmatpush1.bf16.msra.mxu0 %v3995
        %4035 = vmatprep.subr.bf16.mxu0 0
        %4036 = vmatpush1.bf16.msra.mxu0 %v3996
        %4037 = vmatprep.subr.bf16.mxu0 0
        %4038 = vmatpush1.bf16.msra.mxu0 0
        %4039 = vmatprep.subr.bf16.mxu0 0
        %4040 = vmatpush1.bf16.msra.mxu0 0
        %4041 = vmatprep.subr.bf16.mxu0 0
        %4042 = vmatpush1.bf16.msra.mxu0 0
        %4043 = vmatprep.subr.bf16.mxu0 0
        %4044 = vmatpush1.bf16.msra.mxu0 0
        %4045 = vmatprep.subr.bf16.mxu0 0
        %4046 = vmatpush1.bf16.msra.mxu0 0
        %4047 = vmatprep.subr.bf16.mxu0 0
        %4048 = vmatpush1.bf16.msra.mxu0 0
        %4049 = vmatprep.subr.bf16.mxu0 0
        %4050 = vmatpush1.bf16.msra.mxu0 0
        %4051 = vmatprep.mubr.bf16.mxu0 %v4017
        %4052 = vmatmul.mubr.bf16.gmra.mrb[0].mxu0 %v4013
        %v4053 = vpop.f32.mrb[0].mxu0
        %v4054 = vadd.f32 %v4000, %v4053
        %v4055 = vpop.f32.mrb[0].mxu0
        %v4056 = vpop.f32.mrb[0].mxu0
        %v4057 = vadd.f32 %v4005, %v4056
        %v4058 = vpop.f32.mrb[0].mxu0
        %4059 = vdwg.mxu0
        %v4061 = vlaneseq
        %v4062 = vshrl.u32 %v4061, 7
        %v4063 = vsub.s32 0, %v4062
        %v4064 = vrot.slane %v3935, %v4063
        %v4066 = vmul.f32 %v4054, %v4064
        %v4067 = vmul.f32 %v4057, %v4064
        %v4068 = vsel %vm2719, %v4066, 0.0
        %v4069 = vsel %vm2719, %v4067, 0.0
        %v4070 = vadd.f32 %v4068, %v4069
        %4071 = vadd.xlane.f32.xlu0 %v4070
        %v4072 = vpop.xlane.xlu0 %4071
        %v4073 = vrot.slane %v4072, 4
        %v4074 = vadd.f32 %v4072, %v4073
        %v4075 = vrot.slane %v4074, 2
        %v4076 = vadd.f32 %v4074, %v4075
        %v4077 = vrot.slane %v4076, 1
        %v4078 = vadd.f32 %v4076, %v4077
        %s4079 = vtos %v4078
        %v4080 = vstv %s4079
        %v4081 = vmul.f32 %v4080, 0.0009765625
        %v4082 = vsub.f32 %v4054, %v4081
        %v4083 = vsub.f32 %v4057, %v4081
        %v4084 = vmul.f32 %v4082, %v4064
        %v4085 = vmul.f32 %v4083, %v4064
        %v4086 = vmul.f32 %v4084, %v4084
        %v4087 = vmul.f32 %v4085, %v4085
        %v4088 = vsel %vm2719, %v4086, 0.0
        %v4089 = vsel %vm2719, %v4087, 0.0
        %v4090 = vadd.f32 %v4088, %v4089
        %4091 = vadd.xlane.f32.xlu0 %v4090
        %v4092 = vpop.xlane.xlu0 %4091
        %v4093 = vrot.slane %v4092, 4
        %v4094 = vadd.f32 %v4092, %v4093
        %v4095 = vrot.slane %v4094, 2
        %v4096 = vadd.f32 %v4094, %v4095
        %v4097 = vrot.slane %v4096, 1
        %v4098 = vadd.f32 %v4096, %v4097
        %s4099 = vtos %v4098
        %v4100 = vstv %s4099
        %v4101 = vmul.f32 %v4100, 0.0009765625
        %v4102 = vadd.f32 %v4101, 1e-05
        %v4103 = vrsqrt.pop %v4102
        %v4104 = vmul.f32 %v4082, %v4103
        %v4105 = vmul.f32 %v4083, %v4103
        %4106 = vset.pattern.permute.xlu0 1
        %4107 = vperm.xlu0 %4106, %v3933
        %v4108 = vpop.permute.xlu0 %4107
        %4110 = vset.pattern.permute.xlu0 1
        %4111 = vperm.xlu0 %4110, %v3934
        %v4112 = vpop.permute.xlu0 %4111
        %v4114 = vmul.f32 %v4104, %v4108
        %v4115 = vmul.f32 %v4105, %v4112
        %4116 = vset.pattern.permute.xlu0 2
        %4117 = vperm.xlu0 %4116, %v3933
        %v4118 = vpop.permute.xlu0 %4117
        %4120 = vset.pattern.permute.xlu0 2
        %4121 = vperm.xlu0 %4120, %v3934
        %v4122 = vpop.permute.xlu0 %4121
        %v4124 = vadd.f32 %v4114, %v4118
        %v4125 = vadd.f32 %v4115, %v4122
        %vm4126 = vcmp.ge.f32.partialorder %v4124, 0.0
        %vm4127 = vcmp.ge.f32.partialorder %v4125, 0.0
        %v4128 = vmul.f32 %v4124, 0.01
        %v4129 = vmul.f32 %v4125, 0.01
        %v4130 = vsel %vm4126, %v4124, %v4128
        %v4131 = vsel %vm4127, %v4125, %v4129
        %v4132 = vld [vmem:[%s55] sm:$0xff]
        %v4133 = vld [vmem:[%s55 + $0x8] sm:$0xff]
        %v4134 = vld [vmem:[%s55 + $0x10] sm:$0xff]
        %v4135 = vld [vmem:[%s55 + $0x18] sm:$0xff]
        %v4136 = vld [vmem:[%s55 + $0x20] sm:$0xff]
        %v4137 = vld [vmem:[%s55 + $0x28] sm:$0xff]
        %v4138 = vld [vmem:[%s55 + $0x30] sm:$0xff]
        %v4139 = vld [vmem:[%s55 + $0x38] sm:$0xff]
        %v4140 = vld [vmem:[%s55 + $0x40] sm:$0xff]
        %v4141 = vld [vmem:[%s55 + $0x48] sm:$0x3f]
        %v4143 = vsel %vm2719, %v4130, 0
        %v4146 = vsel %vm2719, %v4131, 0
        %v4149 = vsel %vm1708, %v4141, 0
        %4151 = vmatprep.subr.mxu0 0.0
        %4152 = vmatpush1.msra.mxu0 %v4132
        %4153 = vmatprep.subr.mxu0 0.0
        %4154 = vmatpush1.msra.mxu0 %v4133
        %4155 = vmatprep.subr.mxu0 0.0
        %4156 = vmatpush1.msra.mxu0 %v4134
        %4157 = vmatprep.subr.mxu0 0.0
        %4158 = vmatpush1.msra.mxu0 %v4135
        %4159 = vmatprep.subr.mxu0 0.0
        %4160 = vmatpush1.msra.mxu0 %v4136
        %4161 = vmatprep.subr.mxu0 0.0
        %4162 = vmatpush1.msra.mxu0 %v4137
        %4163 = vmatprep.subr.mxu0 0.0
        %4164 = vmatpush1.msra.mxu0 %v4138
        %4165 = vmatprep.subr.mxu0 0.0
        %4166 = vmatpush1.msra.mxu0 %v4139
        %4167 = vmatprep.subr.mxu0 0.0
        %4168 = vmatpush1.msra.mxu0 %v4140
        %4169 = vmatprep.subr.mxu0 0.0
        %4170 = vmatpush1.msra.mxu0 %v4149
        %4171 = vmatprep.subr.mxu0 0.0
        %4172 = vmatpush1.msra.mxu0 0.0
        %4173 = vmatprep.subr.mxu0 0.0
        %4174 = vmatpush1.msra.mxu0 0.0
        %4175 = vmatprep.subr.mxu0 0.0
        %4176 = vmatpush1.msra.mxu0 0.0
        %4177 = vmatprep.subr.mxu0 0.0
        %4178 = vmatpush1.msra.mxu0 0.0
        %4179 = vmatprep.subr.mxu0 0.0
        %4180 = vmatpush1.msra.mxu0 0.0
        %4181 = vmatprep.subr.mxu0 0.0
        %4182 = vmatpush1.msra.mxu0 0.0
        %4183 = vmatprep.subr.mxu0 0.0
        %4184 = vmatpush1.msra.mxu0 0.0
        %4185 = vmatprep.subr.mxu0 0.0
        %4186 = vmatpush1.msra.mxu0 0.0
        %4187 = vmatprep.subr.mxu0 0.0
        %4188 = vmatpush1.msra.mxu0 0.0
        %4189 = vmatprep.subr.mxu0 0.0
        %4190 = vmatpush1.msra.mxu0 0.0
        %4191 = vmatprep.subr.mxu0 0.0
        %4192 = vmatpush1.msra.mxu0 0.0
        %4193 = vmatprep.subr.mxu0 0.0
        %4194 = vmatpush1.msra.mxu0 0.0
        %4195 = vmatprep.subr.mxu0 0.0
        %4196 = vmatpush1.msra.mxu0 0.0
        %4197 = vmatprep.subr.mxu0 0.0
        %4198 = vmatpush1.msra.mxu0 0.0
        %4199 = vmatprep.subr.mxu0 0.0
        %4200 = vmatpush1.msra.mxu0 0.0
        %4201 = vmatprep.subr.mxu0 0.0
        %4202 = vmatpush1.msra.mxu0 0.0
        %4203 = vmatprep.subr.mxu0 0.0
        %4204 = vmatpush1.msra.mxu0 0.0
        %4205 = vmatprep.subr.mxu0 0.0
        %4206 = vmatpush1.msra.mxu0 0.0
        %4207 = vmatprep.subr.mxu0 0.0
        %4208 = vmatpush1.msra.mxu0 0.0
        %4209 = vmatprep.subr.mxu0 0.0
        %4210 = vmatpush1.msra.mxu0 0.0
        %4211 = vmatprep.subr.mxu0 0.0
        %4212 = vmatpush1.msra.mxu0 0.0
        %4213 = vmatprep.subr.mxu0 0.0
        %4214 = vmatpush1.msra.mxu0 0.0
        %4215 = vmatprep.mubr.f32.mxu0 0.0
        %4216 = vmatmul.mubr.f32.gmra.mrb[0].mxu0 %v4143
        %v4217 = vpop.f32.mrb[0].mxu0
        %v4218 = vadd.f32 0.0, %v4217
        %v4219 = vpop.f32.mrb[0].mxu0
        %4220 = vmatprep.mubr.f32.mxu0 0.0
        %4221 = vmatmul.mubr.f32.gmra.mrb[0].mxu0 %v4146
        %v4222 = vpop.f32.mrb[0].mxu0
        %v4223 = vadd.f32 0.0, %v4222
        %v4224 = vpop.f32.mrb[0].mxu0
        %4225 = vdwg.mxu0
        %4226 = vst [vmem:[%s1283] sm:$0xff] %v4218
        %4227 = vst [vmem:[%s1283 + $0x8] sm:$0xff] %v4223
        %v4228 = vld [vmem:[%s57] sm:$0xff]
        %v4229 = vld [vmem:[%s57 + $0x8] sm:$0xff]
        %v4230 = vld [vmem:[%s57 + $0x10] sm:$0xff]
        %v4231 = vld [vmem:[%s57 + $0x18] sm:$0xff]
        %v4232 = vld [vmem:[%s57 + $0x20] sm:$0xff]
        %v4233 = vld [vmem:[%s57 + $0x28] sm:$0xff]
        %v4234 = vld [vmem:[%s57 + $0x30] sm:$0xff]
        %v4235 = vld [vmem:[%s57 + $0x38] sm:$0xff]
        %v4236 = vld [vmem:[%s57 + $0x40] sm:$0xff]
        %v4237 = vld [vmem:[%s57 + $0x48] sm:$0x3f]
        %v4239 = vsel %vm1708, %v4237, 0
        %4241 = vmatprep.subr.mxu0 0.0
        %4242 = vmatpush1.msra.mxu0 %v4228
        %4243 = vmatprep.subr.mxu0 0.0
        %4244 = vmatpush1.msra.mxu0 %v4229
        %4245 = vmatprep.subr.mxu0 0.0
        %4246 = vmatpush1.msra.mxu0 %v4230
        %4247 = vmatprep.subr.mxu0 0.0
        %4248 = vmatpush1.msra.mxu0 %v4231
        %4249 = vmatprep.subr.mxu0 0.0
        %4250 = vmatpush1.msra.mxu0 %v4232
        %4251 = vmatprep.subr.mxu0 0.0
        %4252 = vmatpush1.msra.mxu0 %v4233
        %4253 = vmatprep.subr.mxu0 0.0
        %4254 = vmatpush1.msra.mxu0 %v4234
        %4255 = vmatprep.subr.mxu0 0.0
        %4256 = vmatpush1.msra.mxu0 %v4235
        %4257 = vmatprep.subr.mxu0 0.0
        %4258 = vmatpush1.msra.mxu0 %v4236
        %4259 = vmatprep.subr.mxu0 0.0
        %4260 = vmatpush1.msra.mxu0 %v4239
        %4261 = vmatprep.subr.mxu0 0.0
        %4262 = vmatpush1.msra.mxu0 0.0
        %4263 = vmatprep.subr.mxu0 0.0
        %4264 = vmatpush1.msra.mxu0 0.0
        %4265 = vmatprep.subr.mxu0 0.0
        %4266 = vmatpush1.msra.mxu0 0.0
        %4267 = vmatprep.subr.mxu0 0.0
        %4268 = vmatpush1.msra.mxu0 0.0
        %4269 = vmatprep.subr.mxu0 0.0
        %4270 = vmatpush1.msra.mxu0 0.0
        %4271 = vmatprep.subr.mxu0 0.0
        %4272 = vmatpush1.msra.mxu0 0.0
        %4273 = vmatprep.subr.mxu0 0.0
        %4274 = vmatpush1.msra.mxu0 0.0
        %4275 = vmatprep.subr.mxu0 0.0
        %4276 = vmatpush1.msra.mxu0 0.0
        %4277 = vmatprep.subr.mxu0 0.0
        %4278 = vmatpush1.msra.mxu0 0.0
        %4279 = vmatprep.subr.mxu0 0.0
        %4280 = vmatpush1.msra.mxu0 0.0
        %4281 = vmatprep.subr.mxu0 0.0
        %4282 = vmatpush1.msra.mxu0 0.0
        %4283 = vmatprep.subr.mxu0 0.0
        %4284 = vmatpush1.msra.mxu0 0.0
        %4285 = vmatprep.subr.mxu0 0.0
        %4286 = vmatpush1.msra.mxu0 0.0
        %4287 = vmatprep.subr.mxu0 0.0
        %4288 = vmatpush1.msra.mxu0 0.0
        %4289 = vmatprep.subr.mxu0 0.0
        %4290 = vmatpush1.msra.mxu0 0.0
        %4291 = vmatprep.subr.mxu0 0.0
        %4292 = vmatpush1.msra.mxu0 0.0
        %4293 = vmatprep.subr.mxu0 0.0
        %4294 = vmatpush1.msra.mxu0 0.0
        %4295 = vmatprep.subr.mxu0 0.0
        %4296 = vmatpush1.msra.mxu0 0.0
        %4297 = vmatprep.subr.mxu0 0.0
        %4298 = vmatpush1.msra.mxu0 0.0
        %4299 = vmatprep.subr.mxu0 0.0
        %4300 = vmatpush1.msra.mxu0 0.0
        %4301 = vmatprep.subr.mxu0 0.0
        %4302 = vmatpush1.msra.mxu0 0.0
        %4303 = vmatprep.subr.mxu0 0.0
        %4304 = vmatpush1.msra.mxu0 0.0
        %4305 = vmatprep.mubr.f32.mxu0 0.0
        %4306 = vmatmul.mubr.f32.gmra.mrb[0].mxu0 %v4143
        %v4307 = vpop.f32.mrb[0].mxu0
        %v4308 = vadd.f32 0.0, %v4307
        %v4309 = vpop.f32.mrb[0].mxu0
        %4310 = vmatprep.mubr.f32.mxu0 0.0
        %4311 = vmatmul.mubr.f32.gmra.mrb[0].mxu0 %v4146
        %v4312 = vpop.f32.mrb[0].mxu0
        %v4313 = vadd.f32 0.0, %v4312
        %v4314 = vpop.f32.mrb[0].mxu0
        %4315 = vdwg.mxu0
        %v4316 = vld [vmem:[#allocation10] sm:$0xff]
        %v4317 = vld [vmem:[%s29] sm:$0xff]
        %v4318 = vld [vmem:[%s59] sm:$0x1]
        %4321 = vrot.lane.b32.xlu0 %v4308, 127
        %v4322 = vpop.permute.xlu0 %4321
        %4323 = vrot.lane.b32.xlu0 %v4313, 127
        %v4324 = vpop.permute.xlu0 %4323
        %4327 = vrot.lane.b32.xlu0 %v4308, 126
        %v4328 = vpop.permute.xlu0 %4327
        %4329 = vrot.lane.b32.xlu0 %v4313, 126
        %v4330 = vpop.permute.xlu0 %4329
        %4333 = vrot.lane.b32.xlu0 %v4308, 118
        %v4334 = vpop.permute.xlu0 %4333
        %4335 = vrot.lane.b32.xlu0 %v4313, 118
        %v4336 = vpop.permute.xlu0 %4335
        %4339 = vrot.lane.b32.xlu0 %v4308, 117
        %v4340 = vpop.permute.xlu0 %4339
        %4341 = vrot.lane.b32.xlu0 %v4313, 117
        %v4342 = vpop.permute.xlu0 %4341
        %4345 = vrot.lane.b32.xlu0 %v4308, 116
        %v4346 = vpop.permute.xlu0 %4345
        %4347 = vrot.lane.b32.xlu0 %v4313, 116
        %v4348 = vpop.permute.xlu0 %4347
        %4351 = vrot.lane.b32.xlu0 %v4308, 108
        %v4352 = vpop.permute.xlu0 %4351
        %4353 = vrot.lane.b32.xlu0 %v4313, 108
        %v4354 = vpop.permute.xlu0 %4353
        %4357 = vrot.lane.b32.xlu0 %v4308, 107
        %v4358 = vpop.permute.xlu0 %4357
        %4359 = vrot.lane.b32.xlu0 %v4313, 107
        %v4360 = vpop.permute.xlu0 %4359
        %4363 = vrot.lane.b32.xlu0 %v4308, 106
        %v4364 = vpop.permute.xlu0 %4363
        %4365 = vrot.lane.b32.xlu0 %v4313, 106
        %v4366 = vpop.permute.xlu0 %4365
        %v4369 = vpack.c.bf16 %v4313, %v4308
        %v4370 = vpack.c.bf16 %v4324, %v4322
        %v4371 = vpack.c.bf16 %v4330, %v4328
        %v4372 = vpack.c.bf16 %v4336, %v4334
        %v4373 = vpack.c.bf16 %v4342, %v4340
        %v4374 = vpack.c.bf16 %v4348, %v4346
        %v4375 = vpack.c.bf16 %v4354, %v4352
        %v4376 = vpack.c.bf16 %v4360, %v4358
        %v4377 = vpack.c.bf16 %v4366, %v4364
        %4379 = vset.pattern.permute.xlu0 0
        %4380 = vperm.xlu0 %4379, %v4317
        %v4381 = vpop.permute.xlu0 %4380
        %v4384 = vunpack.c.l.b16 %v4316
        %v4385 = vunpack.c.h.b16 %v4316
        %v4386 = vpack.c.b16 %v4384, %v4384
        %v4387 = vpack.c.b16 %v4385, %v4385
        %v4390 = vsel %vm2653, %v4387, 0
        %4392 = vmatprep.subr.bf16.mxu0 0
        %4393 = vmatpush1.bf16.msra.mxu0 %v4369
        %4394 = vmatprep.subr.bf16.mxu0 0
        %4395 = vmatpush1.bf16.msra.mxu0 %v4370
        %4396 = vmatprep.subr.bf16.mxu0 0
        %4397 = vmatpush1.bf16.msra.mxu0 %v4371
        %4398 = vmatprep.subr.bf16.mxu0 0
        %4399 = vmatpush1.bf16.msra.mxu0 %v4372
        %4400 = vmatprep.subr.bf16.mxu0 0
        %4401 = vmatpush1.bf16.msra.mxu0 %v4373
        %4402 = vmatprep.subr.bf16.mxu0 0
        %4403 = vmatpush1.bf16.msra.mxu0 %v4374
        %4404 = vmatprep.subr.bf16.mxu0 0
        %4405 = vmatpush1.bf16.msra.mxu0 %v4375
        %4406 = vmatprep.subr.bf16.mxu0 0
        %4407 = vmatpush1.bf16.msra.mxu0 %v4376
        %4408 = vmatprep.subr.bf16.mxu0 0
        %4409 = vmatpush1.bf16.msra.mxu0 %v4377
        %4410 = vmatprep.subr.bf16.mxu0 0
        %4411 = vmatpush1.bf16.msra.mxu0 0
        %4412 = vmatprep.subr.bf16.mxu0 0
        %4413 = vmatpush1.bf16.msra.mxu0 0
        %4414 = vmatprep.subr.bf16.mxu0 0
        %4415 = vmatpush1.bf16.msra.mxu0 0
        %4416 = vmatprep.subr.bf16.mxu0 0
        %4417 = vmatpush1.bf16.msra.mxu0 0
        %4418 = vmatprep.subr.bf16.mxu0 0
        %4419 = vmatpush1.bf16.msra.mxu0 0
        %4420 = vmatprep.subr.bf16.mxu0 0
        %4421 = vmatpush1.bf16.msra.mxu0 0
        %4422 = vmatprep.subr.bf16.mxu0 0
        %4423 = vmatpush1.bf16.msra.mxu0 0
        %4424 = vmatprep.mubr.bf16.mxu0 %v4390
        %4425 = vmatmul.mubr.bf16.gmra.mrb[0].mxu0 %v4386
        %v4426 = vpop.f32.mrb[0].mxu0
        %v4427 = vadd.f32 %v4381, %v4426
        %v4428 = vpop.f32.mrb[0].mxu0
        %v4429 = vpop.f32.mrb[0].mxu0
        %v4430 = vpop.f32.mrb[0].mxu0
        %4431 = vdwg.mxu0
        %v4433 = vlaneseq
        %v4434 = vshrl.u32 %v4433, 7
        %v4435 = vsub.s32 0, %v4434
        %v4436 = vrot.slane %v4318, %v4435
        %v4438 = vmul.f32 %v4427, %v4436
        %v4439 = vsel %vm2719, %v4438, 0.0
        %4440 = vadd.xlane.f32.xlu0 %v4439
        %v4441 = vpop.xlane.xlu0 %4440
        %v4442 = vrot.slane %v4441, 4
        %v4443 = vadd.f32 %v4441, %v4442
        %v4444 = vrot.slane %v4443, 2
        %v4445 = vadd.f32 %v4443, %v4444
        %v4446 = vrot.slane %v4445, 1
        %v4447 = vadd.f32 %v4445, %v4446
        %s4448 = vtos %v4447
        %v4449 = vstv %s4448
        %v4450 = vmul.f32 %v4449, 0.001953125
        %v4451 = vsub.f32 %v4427, %v4450
        %v4452 = vmul.f32 %v4451, %v4436
        %v4453 = vmul.f32 %v4452, %v4452
        %v4454 = vsel %vm2719, %v4453, 0.0
        %4455 = vadd.xlane.f32.xlu0 %v4454
        %v4456 = vpop.xlane.xlu0 %4455
        %v4457 = vrot.slane %v4456, 4
        %v4458 = vadd.f32 %v4456, %v4457
        %v4459 = vrot.slane %v4458, 2
        %v4460 = vadd.f32 %v4458, %v4459
        %v4461 = vrot.slane %v4460, 1
        %v4462 = vadd.f32 %v4460, %v4461
        %s4463 = vtos %v4462
        %v4464 = vstv %s4463
        %v4465 = vmul.f32 %v4464, 0.001953125
        %v4466 = vadd.f32 %v4465, 1e-05
        %v4467 = vrsqrt.pop %v4466
        %v4468 = vmul.f32 %v4451, %v4467
        %4469 = vset.pattern.permute.xlu0 1
        %4470 = vperm.xlu0 %4469, %v4317
        %v4471 = vpop.permute.xlu0 %4470
        %v4473 = vmul.f32 %v4468, %v4471
        %4474 = vset.pattern.permute.xlu0 2
        %4475 = vperm.xlu0 %4474, %v4317
        %v4476 = vpop.permute.xlu0 %4475
        %v4478 = vadd.f32 %v4473, %v4476
        %vm4479 = vcmp.ge.f32.partialorder %v4478, 0.0
        %v4480 = vmul.f32 %v4478, 0.01
        %v4481 = vsel %vm4479, %v4478, %v4480
        %v4482 = vld [vmem:[#allocation24] sm:$0xff]
        %v4483 = vld [vmem:[#allocation24 + $0x8] sm:$0xff]
        %v4484 = vld [vmem:[#allocation24 + $0x10] sm:$0xff]
        %v4485 = vld [vmem:[#allocation24 + $0x18] sm:$0xff]
        %v4486 = vld [vmem:[#allocation24 + $0x20] sm:$0xff]
        %v4487 = vld [vmem:[#allocation24 + $0x28] sm:$0xff]
        %v4488 = vld [vmem:[#allocation24 + $0x30] sm:$0xff]
        %v4489 = vld [vmem:[#allocation24 + $0x38] sm:$0xff]
        %v4490 = vld [vmem:[#allocation24 + $0x40] sm:$0xff]
        %v4491 = vld [vmem:[#allocation24 + $0x48] sm:$0xff]
        %v4492 = vld [vmem:[#allocation24 + $0x50] sm:$0xff]
        %v4493 = vld [vmem:[#allocation24 + $0x58] sm:$0xff]
        %v4494 = vld [vmem:[#allocation24 + $0x60] sm:$0xff]
        %v4495 = vld [vmem:[#allocation24 + $0x68] sm:$0xff]
        %v4496 = vld [vmem:[#allocation24 + $0x70] sm:$0xff]
        %v4497 = vld [vmem:[#allocation24 + $0x78] sm:$0xff]
        %v4498 = vld [vmem:[#allocation24 + $0x80] sm:$0xff]
        %v4499 = vld [vmem:[#allocation24 + $0x88] sm:$0xff]
        %v4500 = vld [vmem:[#allocation24 + $0x90] sm:$0xff]
        %v4501 = vld [vmem:[#allocation24 + $0x98] sm:$0xff]
        %v4502 = vld [vmem:[#allocation24 + $0xa0] sm:$0xff]
        %v4503 = vld [vmem:[#allocation24 + $0xa8] sm:$0xff]
        %v4504 = vld [vmem:[#allocation24 + $0xb0] sm:$0xff]
        %v4505 = vld [vmem:[#allocation24 + $0xb8] sm:$0xff]
        %v4506 = vld [vmem:[#allocation24 + $0xc0] sm:$0xff]
        %v4507 = vld [vmem:[#allocation24 + $0xc8] sm:$0xff]
        %v4508 = vld [vmem:[#allocation24 + $0xd0] sm:$0xff]
        %v4509 = vld [vmem:[#allocation24 + $0xd8] sm:$0x3f]
        %v4510 = vld [vmem:[#allocation24 + $0xe0] sm:$0x3f]
        %v4511 = vld [vmem:[#allocation24 + $0xe8] sm:$0x3f]
        %v4513 = vsel %vm2719, %v4481, 0
        %v4516 = vsel %vm1708, %v4509, 0
        %v4519 = vsel %vm1708, %v4510, 0
        %v4522 = vsel %vm1708, %v4511, 0
        %4524 = vmatprep.subr.mxu0 %v4483
        %4525 = vmatpush1.msra.mxu0 %v4482
        %4526 = vmatprep.subr.mxu0 %v4486
        %4527 = vmatpush1.msra.mxu0 %v4485
        %4528 = vmatprep.subr.mxu0 %v4489
        %4529 = vmatpush1.msra.mxu0 %v4488
        %4530 = vmatprep.subr.mxu0 %v4492
        %4531 = vmatpush1.msra.mxu0 %v4491
        %4532 = vmatprep.subr.mxu0 %v4495
        %4533 = vmatpush1.msra.mxu0 %v4494
        %4534 = vmatprep.subr.mxu0 %v4498
        %4535 = vmatpush1.msra.mxu0 %v4497
        %4536 = vmatprep.subr.mxu0 %v4501
        %4537 = vmatpush1.msra.mxu0 %v4500
        %4538 = vmatprep.subr.mxu0 %v4504
        %4539 = vmatpush1.msra.mxu0 %v4503
        %4540 = vmatprep.subr.mxu0 %v4507
        %4541 = vmatpush1.msra.mxu0 %v4506
        %4542 = vmatprep.subr.mxu0 %v4519
        %4543 = vmatpush1.msra.mxu0 %v4516
        %4544 = vmatprep.subr.mxu0 0.0
        %4545 = vmatpush1.msra.mxu0 0.0
        %4546 = vmatprep.subr.mxu0 0.0
        %4547 = vmatpush1.msra.mxu0 0.0
        %4548 = vmatprep.subr.mxu0 0.0
        %4549 = vmatpush1.msra.mxu0 0.0
        %4550 = vmatprep.subr.mxu0 0.0
        %4551 = vmatpush1.msra.mxu0 0.0
        %4552 = vmatprep.subr.mxu0 0.0
        %4553 = vmatpush1.msra.mxu0 0.0
        %4554 = vmatprep.subr.mxu0 0.0
        %4555 = vmatpush1.msra.mxu0 0.0
        %4556 = vmatprep.subr.mxu0 0.0
        %4557 = vmatpush1.msra.mxu0 0.0
        %4558 = vmatprep.subr.mxu0 0.0
        %4559 = vmatpush1.msra.mxu0 0.0
        %4560 = vmatprep.subr.mxu0 0.0
        %4561 = vmatpush1.msra.mxu0 0.0
        %4562 = vmatprep.subr.mxu0 0.0
        %4563 = vmatpush1.msra.mxu0 0.0
        %4564 = vmatprep.subr.mxu0 0.0
        %4565 = vmatpush1.msra.mxu0 0.0
        %4566 = vmatprep.subr.mxu0 0.0
        %4567 = vmatpush1.msra.mxu0 0.0
        %4568 = vmatprep.subr.mxu0 0.0
        %4569 = vmatpush1.msra.mxu0 0.0
        %4570 = vmatprep.subr.mxu0 0.0
        %4571 = vmatpush1.msra.mxu0 0.0
        %4572 = vmatprep.subr.mxu0 0.0
        %4573 = vmatpush1.msra.mxu0 0.0
        %4574 = vmatprep.subr.mxu0 0.0
        %4575 = vmatpush1.msra.mxu0 0.0
        %4576 = vmatprep.subr.mxu0 0.0
        %4577 = vmatpush1.msra.mxu0 0.0
        %4578 = vmatprep.subr.mxu0 0.0
        %4579 = vmatpush1.msra.mxu0 0.0
        %4580 = vmatprep.subr.mxu0 0.0
        %4581 = vmatpush1.msra.mxu0 0.0
        %4582 = vmatprep.subr.mxu0 0.0
        %4583 = vmatpush1.msra.mxu0 0.0
        %4584 = vmatprep.subr.mxu0 0.0
        %4585 = vmatpush1.msra.mxu0 0.0
        %4586 = vmatprep.subr.mxu0 0.0
        %4587 = vmatpush1.msra.mxu0 0.0
        %4588 = vmatprep.mubr.f32.mxu0 0.0
        %4589 = vmatmul.mubr.f32.gmra.mrb[0].mxu0 %v4513
        %v4590 = vpop.f32.mrb[0].mxu0
        %v4591 = vadd.f32 0.0, %v4590
        %v4592 = vpop.f32.mrb[0].mxu0
        %v4593 = vadd.f32 0.0, %v4592
        %4594 = vdwg.mxu0
        %4595 = vmatprep.subr.mxu0 0.0
        %4596 = vmatpush1.msra.mxu0 %v4484
        %4597 = vmatprep.subr.mxu0 0.0
        %4598 = vmatpush1.msra.mxu0 %v4487
        %4599 = vmatprep.subr.mxu0 0.0
        %4600 = vmatpush1.msra.mxu0 %v4490
        %4601 = vmatprep.subr.mxu0 0.0
        %4602 = vmatpush1.msra.mxu0 %v4493
        %4603 = vmatprep.subr.mxu0 0.0
        %4604 = vmatpush1.msra.mxu0 %v4496
        %4605 = vmatprep.subr.mxu0 0.0
        %4606 = vmatpush1.msra.mxu0 %v4499
        %4607 = vmatprep.subr.mxu0 0.0
        %4608 = vmatpush1.msra.mxu0 %v4502
        %4609 = vmatprep.subr.mxu0 0.0
        %4610 = vmatpush1.msra.mxu0 %v4505
        %4611 = vmatprep.subr.mxu0 0.0
        %4612 = vmatpush1.msra.mxu0 %v4508
        %4613 = vmatprep.subr.mxu0 0.0
        %4614 = vmatpush1.msra.mxu0 %v4522
        %4615 = vmatprep.subr.mxu0 0.0
        %4616 = vmatpush1.msra.mxu0 0.0
        %4617 = vmatprep.subr.mxu0 0.0
        %4618 = vmatpush1.msra.mxu0 0.0
        %4619 = vmatprep.subr.mxu0 0.0
        %4620 = vmatpush1.msra.mxu0 0.0
        %4621 = vmatprep.subr.mxu0 0.0
        %4622 = vmatpush1.msra.mxu0 0.0
        %4623 = vmatprep.subr.mxu0 0.0
        %4624 = vmatpush1.msra.mxu0 0.0
        %4625 = vmatprep.subr.mxu0 0.0
        %4626 = vmatpush1.msra.mxu0 0.0
        %4627 = vmatprep.subr.mxu0 0.0
        %4628 = vmatpush1.msra.mxu0 0.0
        %4629 = vmatprep.subr.mxu0 0.0
        %4630 = vmatpush1.msra.mxu0 0.0
        %4631 = vmatprep.subr.mxu0 0.0
        %4632 = vmatpush1.msra.mxu0 0.0
        %4633 = vmatprep.subr.mxu0 0.0
        %4634 = vmatpush1.msra.mxu0 0.0
        %4635 = vmatprep.subr.mxu0 0.0
        %4636 = vmatpush1.msra.mxu0 0.0
        %4637 = vmatprep.subr.mxu0 0.0
        %4638 = vmatpush1.msra.mxu0 0.0
        %4639 = vmatprep.subr.mxu0 0.0
        %4640 = vmatpush1.msra.mxu0 0.0
        %4641 = vmatprep.subr.mxu0 0.0
        %4642 = vmatpush1.msra.mxu0 0.0
        %4643 = vmatprep.subr.mxu0 0.0
        %4644 = vmatpush1.msra.mxu0 0.0
        %4645 = vmatprep.subr.mxu0 0.0
        %4646 = vmatpush1.msra.mxu0 0.0
        %4647 = vmatprep.subr.mxu0 0.0
        %4648 = vmatpush1.msra.mxu0 0.0
        %4649 = vmatprep.subr.mxu0 0.0
        %4650 = vmatpush1.msra.mxu0 0.0
        %4651 = vmatprep.subr.mxu0 0.0
        %4652 = vmatpush1.msra.mxu0 0.0
        %4653 = vmatprep.subr.mxu0 0.0
        %4654 = vmatpush1.msra.mxu0 0.0
        %4655 = vmatprep.subr.mxu0 0.0
        %4656 = vmatpush1.msra.mxu0 0.0
        %4657 = vmatprep.subr.mxu0 0.0
        %4658 = vmatpush1.msra.mxu0 0.0
        %4659 = vmatprep.mubr.f32.mxu0 0.0
        %4660 = vmatmul.mubr.f32.gmra.mrb[0].mxu0 %v4513
        %v4661 = vpop.f32.mrb[0].mxu0
        %v4662 = vadd.f32 0.0, %v4661
        %v4663 = vpop.f32.mrb[0].mxu0
        %4664 = vdwg.mxu0
        %v4665 = vld [vmem:[#allocation12] sm:$0xf]
        %v4666 = vld [vmem:[%s33] sm:$0xff]
        %v4667 = vld [vmem:[#allocation13] sm:$0x7]
        %v4668 = vadd.f32 %v1856, %v4591
        %v4669 = vadd.f32 %v1858, %v4593
        %v4670 = vadd.f32 %v1997, %v4662
        %4674 = vrot.lane.b32.xlu0 %v4668, 127
        %v4675 = vpop.permute.xlu0 %4674
        %4676 = vrot.lane.b32.xlu0 %v4669, 127
        %v4677 = vpop.permute.xlu0 %4676
        %4678 = vrot.lane.b32.xlu0 %v4670, 127
        %v4679 = vpop.permute.xlu0 %4678
        %v4680 = vsel %vm1307, %v4675, %v4677
        %v4681 = vsel %vm1307, %v4677, %v4679
        %4685 = vrot.lane.b32.xlu0 %v4668, 126
        %v4686 = vpop.permute.xlu0 %4685
        %4687 = vrot.lane.b32.xlu0 %v4669, 126
        %v4688 = vpop.permute.xlu0 %4687
        %4689 = vrot.lane.b32.xlu0 %v4670, 126
        %v4690 = vpop.permute.xlu0 %4689
        %v4691 = vsel %vm1319, %v4686, %v4688
        %v4692 = vsel %vm1319, %v4688, %v4690
        %4696 = vrot.lane.b32.xlu0 %v4668, 110
        %v4697 = vpop.permute.xlu0 %4696
        %4698 = vrot.lane.b32.xlu0 %v4669, 110
        %v4699 = vpop.permute.xlu0 %4698
        %4700 = vrot.lane.b32.xlu0 %v4670, 110
        %v4701 = vpop.permute.xlu0 %4700
        %v4702 = vsel %vm1331, %v4697, %v4699
        %v4703 = vsel %vm1331, %v4699, %v4701
        %4707 = vrot.lane.b32.xlu0 %v4668, 109
        %v4708 = vpop.permute.xlu0 %4707
        %4709 = vrot.lane.b32.xlu0 %v4669, 109
        %v4710 = vpop.permute.xlu0 %4709
        %4711 = vrot.lane.b32.xlu0 %v4670, 109
        %v4712 = vpop.permute.xlu0 %4711
        %v4713 = vsel %vm1343, %v4708, %v4710
        %v4714 = vsel %vm1343, %v4710, %v4712
        %4718 = vrot.lane.b32.xlu0 %v4668, 108
        %v4719 = vpop.permute.xlu0 %4718
        %4720 = vrot.lane.b32.xlu0 %v4669, 108
        %v4721 = vpop.permute.xlu0 %4720
        %4722 = vrot.lane.b32.xlu0 %v4670, 108
        %v4723 = vpop.permute.xlu0 %4722
        %v4724 = vsel %vm1355, %v4719, %v4721
        %v4725 = vsel %vm1355, %v4721, %v4723
        %4729 = vrot.lane.b32.xlu0 %v4668, 92
        %v4730 = vpop.permute.xlu0 %4729
        %4731 = vrot.lane.b32.xlu0 %v4669, 92
        %v4732 = vpop.permute.xlu0 %4731
        %4733 = vrot.lane.b32.xlu0 %v4670, 92
        %v4734 = vpop.permute.xlu0 %4733
        %v4735 = vsel %vm1367, %v4730, %v4732
        %v4736 = vsel %vm1367, %v4732, %v4734
        %4740 = vrot.lane.b32.xlu0 %v4668, 91
        %v4741 = vpop.permute.xlu0 %4740
        %4742 = vrot.lane.b32.xlu0 %v4669, 91
        %v4743 = vpop.permute.xlu0 %4742
        %4744 = vrot.lane.b32.xlu0 %v4670, 91
        %v4745 = vpop.permute.xlu0 %4744
        %v4746 = vsel %vm1379, %v4741, %v4743
        %v4747 = vsel %vm1379, %v4743, %v4745
        %4751 = vrot.lane.b32.xlu0 %v4668, 90
        %v4752 = vpop.permute.xlu0 %4751
        %4753 = vrot.lane.b32.xlu0 %v4669, 90
        %v4754 = vpop.permute.xlu0 %4753
        %4755 = vrot.lane.b32.xlu0 %v4670, 90
        %v4756 = vpop.permute.xlu0 %4755
        %v4757 = vsel %vm1391, %v4752, %v4754
        %v4758 = vsel %vm1391, %v4754, %v4756
        %v4762 = vpack.c.bf16 %v4680, %v4668
        %v4763 = vpack.c.bf16 %v4681, %v4669
        %v4764 = vpack.c.bf16 %v4679, %v4670
        %v4765 = vpack.c.bf16 %v4702, %v4691
        %v4766 = vpack.c.bf16 %v4703, %v4692
        %v4767 = vpack.c.bf16 %v4701, %v4690
        %v4768 = vpack.c.bf16 %v4724, %v4713
        %v4769 = vpack.c.bf16 %v4725, %v4714
        %v4770 = vpack.c.bf16 %v4723, %v4712
        %v4771 = vpack.c.bf16 %v4746, %v4735
        %v4772 = vpack.c.bf16 %v4747, %v4736
        %v4773 = vpack.c.bf16 %v4745, %v4734
        %v4774 = vpack.c.bf16 %v4757, %v4757
        %v4775 = vpack.c.bf16 %v4758, %v4758
        %v4776 = vpack.c.bf16 %v4756, %v4756
        %4778 = vset.pattern.permute.xlu0 0
        %4779 = vperm.xlu0 %4778, %v4666
        %v4780 = vpop.permute.xlu0 %4779
        %v4783 = vsel %vm1417, %v4665, 0
        %v4786 = vsel %vm1421, %v4774, 0
        %v4789 = vsel %vm1421, %v4775, 0
        %v4792 = vsel %vm1421, %v4776, 0
        %4794 = vmatprep.subr.bf16.mxu0 %v4763
        %4795 = vmatpush1.bf16.msra.mxu0 %v4762
        %4796 = vmatprep.subr.bf16.mxu0 %v4766
        %4797 = vmatpush1.bf16.msra.mxu0 %v4765
        %4798 = vmatprep.subr.bf16.mxu0 %v4769
        %4799 = vmatpush1.bf16.msra.mxu0 %v4768
        %4800 = vmatprep.subr.bf16.mxu0 %v4772
        %4801 = vmatpush1.bf16.msra.mxu0 %v4771
        %4802 = vmatprep.subr.bf16.mxu0 %v4789
        %4803 = vmatpush1.bf16.msra.mxu0 %v4786
        %4804 = vmatprep.subr.bf16.mxu0 0
        %4805 = vmatpush1.bf16.msra.mxu0 0
        %4806 = vmatprep.subr.bf16.mxu0 0
        %4807 = vmatpush1.bf16.msra.mxu0 0
        %4808 = vmatprep.subr.bf16.mxu0 0
        %4809 = vmatpush1.bf16.msra.mxu0 0
        %4810 = vmatprep.subr.bf16.mxu0 0
        %4811 = vmatpush1.bf16.msra.mxu0 0
        %4812 = vmatprep.subr.bf16.mxu0 0
        %4813 = vmatpush1.bf16.msra.mxu0 0
        %4814 = vmatprep.subr.bf16.mxu0 0
        %4815 = vmatpush1.bf16.msra.mxu0 0
        %4816 = vmatprep.subr.bf16.mxu0 0
        %4817 = vmatpush1.bf16.msra.mxu0 0
        %4818 = vmatprep.subr.bf16.mxu0 0
        %4819 = vmatpush1.bf16.msra.mxu0 0
        %4820 = vmatprep.subr.bf16.mxu0 0
        %4821 = vmatpush1.bf16.msra.mxu0 0
        %4822 = vmatprep.subr.bf16.mxu0 0
        %4823 = vmatpush1.bf16.msra.mxu0 0
        %4824 = vmatprep.subr.bf16.mxu0 0
        %4825 = vmatpush1.bf16.msra.mxu0 0
        %4826 = vmatprep.mubr.bf16.mxu0 0
        %4827 = vmatmul.mubr.bf16.gmra.mrb[0].mxu0 %v4783
        %v4828 = vpop.f32.mrb[0].mxu0
        %v4829 = vadd.f32 %v4780, %v4828
        %v4830 = vpop.f32.mrb[0].mxu0
        %v4831 = vadd.f32 %v4780, %v4830
        %v4832 = vpop.f32.mrb[0].mxu0
        %v4833 = vpop.f32.mrb[0].mxu0
        %4834 = vdwg.mxu0
        %4835 = vmatprep.subr.bf16.mxu0 0
        %4836 = vmatpush1.bf16.msra.mxu0 %v4764
        %4837 = vmatprep.subr.bf16.mxu0 0
        %4838 = vmatpush1.bf16.msra.mxu0 %v4767
        %4839 = vmatprep.subr.bf16.mxu0 0
        %4840 = vmatpush1.bf16.msra.mxu0 %v4770
        %4841 = vmatprep.subr.bf16.mxu0 0
        %4842 = vmatpush1.bf16.msra.mxu0 %v4773
        %4843 = vmatprep.subr.bf16.mxu0 0
        %4844 = vmatpush1.bf16.msra.mxu0 %v4792
        %4845 = vmatprep.subr.bf16.mxu0 0
        %4846 = vmatpush1.bf16.msra.mxu0 0
        %4847 = vmatprep.subr.bf16.mxu0 0
        %4848 = vmatpush1.bf16.msra.mxu0 0
        %4849 = vmatprep.subr.bf16.mxu0 0
        %4850 = vmatpush1.bf16.msra.mxu0 0
        %4851 = vmatprep.subr.bf16.mxu0 0
        %4852 = vmatpush1.bf16.msra.mxu0 0
        %4853 = vmatprep.subr.bf16.mxu0 0
        %4854 = vmatpush1.bf16.msra.mxu0 0
        %4855 = vmatprep.subr.bf16.mxu0 0
        %4856 = vmatpush1.bf16.msra.mxu0 0
        %4857 = vmatprep.subr.bf16.mxu0 0
        %4858 = vmatpush1.bf16.msra.mxu0 0
        %4859 = vmatprep.subr.bf16.mxu0 0
        %4860 = vmatpush1.bf16.msra.mxu0 0
        %4861 = vmatprep.subr.bf16.mxu0 0
        %4862 = vmatpush1.bf16.msra.mxu0 0
        %4863 = vmatprep.subr.bf16.mxu0 0
        %4864 = vmatpush1.bf16.msra.mxu0 0
        %4865 = vmatprep.subr.bf16.mxu0 0
        %4866 = vmatpush1.bf16.msra.mxu0 0
        %4867 = vmatprep.mubr.bf16.mxu0 0
        %4868 = vmatmul.mubr.bf16.gmra.mrb[0].mxu0 %v4783
        %v4869 = vpop.f32.mrb[0].mxu0
        %v4870 = vadd.f32 %v4780, %v4869
        %v4871 = vpop.f32.mrb[0].mxu0
        %v4872 = vpop.f32.mrb[0].mxu0
        %v4873 = vpop.f32.mrb[0].mxu0
        %4874 = vdwg.mxu0
        %v4876 = vlaneseq
        %v4877 = vshrl.u32 %v4876, 7
        %v4878 = vsub.s32 0, %v4877
        %v4879 = vrot.slane %v4667, %v4878
        %v4880 = vlaneseq
        %v4881 = vshrl.u32 %v4880, 7
        %v4882 = vsub.s32 1, %v4881
        %v4883 = vrot.slane %v4667, %v4882
        %v4884 = vlaneseq
        %v4885 = vshrl.u32 %v4884, 7
        %v4886 = vsub.s32 2, %v4885
        %v4887 = vrot.slane %v4667, %v4886
        %v4891 = vmul.f32 %v4829, %v4879
        %v4892 = vmul.f32 %v4831, %v4883
        %v4893 = vmul.f32 %v4870, %v4887
        %v4894 = vadd.f32 %v4891, %v4892
        %v4895 = vsel %vm1532, %v4893, 0.0
        %v4896 = vadd.f32 %v4894, %v4895
        %4897 = vadd.xlane.f32.xlu0 %v4896
        %v4898 = vpop.xlane.xlu0 %4897
        %v4899 = vrot.slane %v4898, 4
        %v4900 = vadd.f32 %v4898, %v4899
        %v4901 = vrot.slane %v4900, 2
        %v4902 = vadd.f32 %v4900, %v4901
        %v4903 = vrot.slane %v4902, 1
        %v4904 = vadd.f32 %v4902, %v4903
        %s4905 = vtos %v4904
        %v4906 = vstv %s4905
        %v4907 = vmul.f32 %v4906, 0.00048828125
        %v4908 = vsub.f32 %v4829, %v4907
        %v4909 = vsub.f32 %v4831, %v4907
        %v4910 = vsub.f32 %v4870, %v4907
        %v4911 = vmul.f32 %v4908, %v4879
        %v4912 = vmul.f32 %v4909, %v4883
        %v4913 = vmul.f32 %v4910, %v4887
        %v4914 = vmul.f32 %v4911, %v4911
        %v4915 = vmul.f32 %v4912, %v4912
        %v4916 = vmul.f32 %v4913, %v4913
        %v4917 = vadd.f32 %v4914, %v4915
        %v4918 = vsel %vm1532, %v4916, 0.0
        %v4919 = vadd.f32 %v4917, %v4918
        %4920 = vadd.xlane.f32.xlu0 %v4919
        %v4921 = vpop.xlane.xlu0 %4920
        %v4922 = vrot.slane %v4921, 4
        %v4923 = vadd.f32 %v4921, %v4922
        %v4924 = vrot.slane %v4923, 2
        %v4925 = vadd.f32 %v4923, %v4924
        %v4926 = vrot.slane %v4925, 1
        %v4927 = vadd.f32 %v4925, %v4926
        %s4928 = vtos %v4927
        %v4929 = vstv %s4928
        %v4930 = vmul.f32 %v4929, 0.00048828125
        %v4931 = vadd.f32 %v4930, 1e-05
        %v4932 = vrsqrt.pop %v4931
        %v4933 = vmul.f32 %v4908, %v4932
        %v4934 = vmul.f32 %v4909, %v4932
        %v4935 = vmul.f32 %v4910, %v4932
        %4936 = vset.pattern.permute.xlu0 1
        %4937 = vperm.xlu0 %4936, %v4666
        %v4938 = vpop.permute.xlu0 %4937
        %v4940 = vmul.f32 %v4933, %v4938
        %v4941 = vmul.f32 %v4934, %v4938
        %v4942 = vmul.f32 %v4935, %v4938
        %4943 = vset.pattern.permute.xlu0 2
        %4944 = vperm.xlu0 %4943, %v4666
        %v4945 = vpop.permute.xlu0 %4944
        %v4947 = vadd.f32 %v4940, %v4945
        %v4948 = vadd.f32 %v4941, %v4945
        %v4949 = vadd.f32 %v4942, %v4945
        %vm4950 = vcmp.ge.f32.partialorder %v4947, 0.0
        %vm4951 = vcmp.ge.f32.partialorder %v4948, 0.0
        %vm4952 = vcmp.ge.f32.partialorder %v4949, 0.0
        %v4953 = vmul.f32 %v4947, 0.01
        %v4954 = vmul.f32 %v4948, 0.01
        %v4955 = vmul.f32 %v4949, 0.01
        %v4956 = vsel %vm4950, %v4947, %v4953
        %v4957 = vsel %vm4951, %v4948, %v4954
        %v4958 = vsel %vm4952, %v4949, %v4955
        %v4959 = vld [vmem:[#allocation25] sm:$0xff]
        %v4960 = vld [vmem:[#allocation25 + $0x8] sm:$0xff]
        %v4961 = vld [vmem:[#allocation25 + $0x10] sm:$0xff]
        %v4962 = vld [vmem:[#allocation25 + $0x18] sm:$0xff]
        %v4963 = vld [vmem:[#allocation25 + $0x20] sm:$0xff]
        %v4964 = vld [vmem:[#allocation25 + $0x28] sm:$0xff]
        %v4965 = vld [vmem:[#allocation25 + $0x30] sm:$0xff]
        %v4966 = vld [vmem:[#allocation25 + $0x38] sm:$0xff]
        %v4967 = vld [vmem:[#allocation25 + $0x40] sm:$0xff]
        %v4968 = vld [vmem:[#allocation25 + $0x48] sm:$0xff]
        %v4969 = vld [vmem:[#allocation25 + $0x50] sm:$0xff]
        %v4970 = vld [vmem:[#allocation25 + $0x58] sm:$0xff]
        %v4971 = vld [vmem:[#allocation25 + $0x60] sm:$0xff]
        %v4972 = vld [vmem:[#allocation25 + $0x68] sm:$0xff]
        %v4973 = vld [vmem:[#allocation25 + $0x70] sm:$0xff]
        %v4974 = vld [vmem:[#allocation25 + $0x78] sm:$0xff]
        %v4975 = vld [vmem:[#allocation25 + $0x80] sm:$0xff]
        %v4976 = vld [vmem:[#allocation25 + $0x88] sm:$0xff]
        %v4977 = vld [vmem:[#allocation25 + $0x90] sm:$0xff]
        %v4978 = vld [vmem:[#allocation25 + $0x98] sm:$0xff]
        %v4979 = vld [vmem:[#allocation25 + $0xa0] sm:$0xff]
        %v4980 = vld [vmem:[#allocation25 + $0xa8] sm:$0xff]
        %v4981 = vld [vmem:[#allocation25 + $0xb0] sm:$0xff]
        %v4982 = vld [vmem:[#allocation25 + $0xb8] sm:$0xff]
        %v4983 = vld [vmem:[#allocation25 + $0xc0] sm:$0xff]
        %v4984 = vld [vmem:[#allocation25 + $0xc8] sm:$0xff]
        %v4985 = vld [vmem:[#allocation25 + $0xd0] sm:$0xff]
        %v4986 = vld [vmem:[#allocation25 + $0xd8] sm:$0xff]
        %v4987 = vld [vmem:[#allocation25 + $0xe0] sm:$0xff]
        %v4988 = vld [vmem:[#allocation25 + $0xe8] sm:$0xff]
        %v4989 = vld [vmem:[#allocation25 + $0xf0] sm:$0xff]
        %v4990 = vld [vmem:[#allocation25 + $0xf8] sm:$0xff]
        %v4991 = vld [vmem:[#allocation25 + $0x100] sm:$0xff]
        %v4992 = vld [vmem:[#allocation25 + $0x108] sm:$0xff]
        %v4993 = vld [vmem:[#allocation25 + $0x110] sm:$0xff]
        %v4994 = vld [vmem:[#allocation25 + $0x118] sm:$0xff]
        %v4995 = vld [vmem:[#allocation25 + $0x120] sm:$0xff]
        %v4996 = vld [vmem:[#allocation25 + $0x128] sm:$0xff]
        %v4997 = vld [vmem:[#allocation25 + $0x130] sm:$0xff]
        %v4998 = vld [vmem:[#allocation25 + $0x138] sm:$0xff]
        %v4999 = vld [vmem:[#allocation25 + $0x140] sm:$0xff]
        %v5000 = vld [vmem:[#allocation25 + $0x148] sm:$0xff]
        %v5001 = vld [vmem:[#allocation25 + $0x150] sm:$0xff]
        %v5002 = vld [vmem:[#allocation25 + $0x158] sm:$0xff]
        %v5003 = vld [vmem:[#allocation25 + $0x160] sm:$0xff]
        %v5004 = vld [vmem:[#allocation25 + $0x168] sm:$0xff]
        %v5005 = vld [vmem:[#allocation25 + $0x170] sm:$0xff]
        %v5006 = vld [vmem:[#allocation25 + $0x178] sm:$0xff]
        %v5007 = vld [vmem:[#allocation25 + $0x180] sm:$0xff]
        %v5008 = vld [vmem:[#allocation25 + $0x188] sm:$0xff]
        %v5009 = vld [vmem:[#allocation25 + $0x190] sm:$0xff]
        %v5010 = vld [vmem:[#allocation25 + $0x198] sm:$0xff]
        %v5011 = vld [vmem:[#allocation25 + $0x1a0] sm:$0xff]
        %v5012 = vld [vmem:[#allocation25 + $0x1a8] sm:$0xff]
        %v5013 = vld [vmem:[#allocation25 + $0x1b0] sm:$0xff]
        %v5014 = vld [vmem:[#allocation25 + $0x1b8] sm:$0xff]
        %v5015 = vld [vmem:[#allocation25 + $0x1c0] sm:$0xff]
        %v5016 = vld [vmem:[#allocation25 + $0x1c8] sm:$0xff]
        %v5017 = vld [vmem:[#allocation25 + $0x1d0] sm:$0xff]
        %v5018 = vld [vmem:[#allocation25 + $0x1d8] sm:$0xff]
        %v5019 = vld [vmem:[#allocation25 + $0x1e0] sm:$0xff]
        %v5020 = vld [vmem:[#allocation25 + $0x1e8] sm:$0xff]
        %v5021 = vld [vmem:[#allocation25 + $0x1f0] sm:$0xff]
        %v5022 = vld [vmem:[#allocation25 + $0x1f8] sm:$0xff]
        %v5023 = vld [vmem:[#allocation25 + $0x200] sm:$0xff]
        %v5024 = vld [vmem:[#allocation25 + $0x208] sm:$0xff]
        %v5025 = vld [vmem:[#allocation25 + $0x210] sm:$0xff]
        %v5026 = vld [vmem:[#allocation25 + $0x218] sm:$0xff]
        %v5027 = vld [vmem:[#allocation25 + $0x220] sm:$0xff]
        %v5028 = vld [vmem:[#allocation25 + $0x228] sm:$0xff]
        %v5029 = vld [vmem:[#allocation25 + $0x230] sm:$0x3f]
        %v5030 = vld [vmem:[#allocation25 + $0x238] sm:$0x3f]
        %v5032 = vsel %vm1532, %v4958, 0
        %v5035 = vsel %vm1708, %v5029, 0
        %v5038 = vsel %vm1708, %v5030, 0
        %5040 = vmatprep.subr.mxu0 %v4960
        %5041 = vmatpush1.msra.mxu0 %v4959
        %5042 = vmatprep.subr.mxu0 %v4962
        %5043 = vmatpush1.msra.mxu0 %v4961
        %5044 = vmatprep.subr.mxu0 %v4964
        %5045 = vmatpush1.msra.mxu0 %v4963
        %5046 = vmatprep.subr.mxu0 %v4966
        %5047 = vmatpush1.msra.mxu0 %v4965
        %5048 = vmatprep.subr.mxu0 %v4968
        %5049 = vmatpush1.msra.mxu0 %v4967
        %5050 = vmatprep.subr.mxu0 %v4970
        %5051 = vmatpush1.msra.mxu0 %v4969
        %5052 = vmatprep.subr.mxu0 %v4972
        %5053 = vmatpush1.msra.mxu0 %v4971
        %5054 = vmatprep.subr.mxu0 %v4974
        %5055 = vmatpush1.msra.mxu0 %v4973
        %5056 = vmatprep.subr.mxu0 %v4976
        %5057 = vmatpush1.msra.mxu0 %v4975
        %5058 = vmatprep.subr.mxu0 %v4978
        %5059 = vmatpush1.msra.mxu0 %v4977
        %5060 = vmatprep.subr.mxu0 %v4980
        %5061 = vmatpush1.msra.mxu0 %v4979
        %5062 = vmatprep.subr.mxu0 %v4982
        %5063 = vmatpush1.msra.mxu0 %v4981
        %5064 = vmatprep.subr.mxu0 %v4984
        %5065 = vmatpush1.msra.mxu0 %v4983
        %5066 = vmatprep.subr.mxu0 %v4986
        %5067 = vmatpush1.msra.mxu0 %v4985
        %5068 = vmatprep.subr.mxu0 %v4988
        %5069 = vmatpush1.msra.mxu0 %v4987
        %5070 = vmatprep.subr.mxu0 %v4990
        %5071 = vmatpush1.msra.mxu0 %v4989
        %5072 = vmatprep.subr.mxu0 %v4992
        %5073 = vmatpush1.msra.mxu0 %v4991
        %5074 = vmatprep.subr.mxu0 %v4994
        %5075 = vmatpush1.msra.mxu0 %v4993
        %5076 = vmatprep.subr.mxu0 %v4996
        %5077 = vmatpush1.msra.mxu0 %v4995
        %5078 = vmatprep.subr.mxu0 %v4998
        %5079 = vmatpush1.msra.mxu0 %v4997
        %5080 = vmatprep.subr.mxu0 %v5000
        %5081 = vmatpush1.msra.mxu0 %v4999
        %5082 = vmatprep.subr.mxu0 %v5002
        %5083 = vmatpush1.msra.mxu0 %v5001
        %5084 = vmatprep.subr.mxu0 %v5004
        %5085 = vmatpush1.msra.mxu0 %v5003
        %5086 = vmatprep.subr.mxu0 %v5006
        %5087 = vmatpush1.msra.mxu0 %v5005
        %5088 = vmatprep.subr.mxu0 %v5008
        %5089 = vmatpush1.msra.mxu0 %v5007
        %5090 = vmatprep.subr.mxu0 %v5010
        %5091 = vmatpush1.msra.mxu0 %v5009
        %5092 = vmatprep.subr.mxu0 %v5012
        %5093 = vmatpush1.msra.mxu0 %v5011
        %5094 = vmatprep.subr.mxu0 %v5014
        %5095 = vmatpush1.msra.mxu0 %v5013
        %5096 = vmatprep.subr.mxu0 %v5016
        %5097 = vmatpush1.msra.mxu0 %v5015
        %5098 = vmatprep.subr.mxu0 %v5018
        %5099 = vmatpush1.msra.mxu0 %v5017
        %5100 = vmatprep.subr.mxu0 %v5020
        %5101 = vmatpush1.msra.mxu0 %v5019
        %5102 = vmatprep.subr.mxu0 %v5022
        %5103 = vmatpush1.msra.mxu0 %v5021
        %5104 = vmatprep.mubr.f32.mxu0 %v4957
        %5105 = vmatmul.mubr.f32.gmra.mrb[0].mxu0 %v4956
        %v5106 = vpop.f32.mrb[0].mxu0
        %v5107 = vadd.f32 0.0, %v5106
        %v5108 = vpop.f32.mrb[0].mxu0
        %v5109 = vadd.f32 0.0, %v5108
        %5110 = vdwg.mxu0
        %5111 = vmatprep.subr.mxu0 %v5024
        %5112 = vmatpush1.msra.mxu0 %v5023
        %5113 = vmatprep.subr.mxu0 %v5026
        %5114 = vmatpush1.msra.mxu0 %v5025
        %5115 = vmatprep.subr.mxu0 %v5028
        %5116 = vmatpush1.msra.mxu0 %v5027
        %5117 = vmatprep.subr.mxu0 %v5038
        %5118 = vmatpush1.msra.mxu0 %v5035
        %5119 = vmatprep.subr.mxu0 0.0
        %5120 = vmatpush1.msra.mxu0 0.0
        %5121 = vmatprep.subr.mxu0 0.0
        %5122 = vmatpush1.msra.mxu0 0.0
        %5123 = vmatprep.subr.mxu0 0.0
        %5124 = vmatpush1.msra.mxu0 0.0
        %5125 = vmatprep.subr.mxu0 0.0
        %5126 = vmatpush1.msra.mxu0 0.0
        %5127 = vmatprep.subr.mxu0 0.0
        %5128 = vmatpush1.msra.mxu0 0.0
        %5129 = vmatprep.subr.mxu0 0.0
        %5130 = vmatpush1.msra.mxu0 0.0
        %5131 = vmatprep.subr.mxu0 0.0
        %5132 = vmatpush1.msra.mxu0 0.0
        %5133 = vmatprep.subr.mxu0 0.0
        %5134 = vmatpush1.msra.mxu0 0.0
        %5135 = vmatprep.subr.mxu0 0.0
        %5136 = vmatpush1.msra.mxu0 0.0
        %5137 = vmatprep.subr.mxu0 0.0
        %5138 = vmatpush1.msra.mxu0 0.0
        %5139 = vmatprep.subr.mxu0 0.0
        %5140 = vmatpush1.msra.mxu0 0.0
        %5141 = vmatprep.subr.mxu0 0.0
        %5142 = vmatpush1.msra.mxu0 0.0
        %5143 = vmatprep.subr.mxu0 0.0
        %5144 = vmatpush1.msra.mxu0 0.0
        %5145 = vmatprep.subr.mxu0 0.0
        %5146 = vmatpush1.msra.mxu0 0.0
        %5147 = vmatprep.subr.mxu0 0.0
        %5148 = vmatpush1.msra.mxu0 0.0
        %5149 = vmatprep.subr.mxu0 0.0
        %5150 = vmatpush1.msra.mxu0 0.0
        %5151 = vmatprep.subr.mxu0 0.0
        %5152 = vmatpush1.msra.mxu0 0.0
        %5153 = vmatprep.subr.mxu0 0.0
        %5154 = vmatpush1.msra.mxu0 0.0
        %5155 = vmatprep.subr.mxu0 0.0
        %5156 = vmatpush1.msra.mxu0 0.0
        %5157 = vmatprep.subr.mxu0 0.0
        %5158 = vmatpush1.msra.mxu0 0.0
        %5159 = vmatprep.subr.mxu0 0.0
        %5160 = vmatpush1.msra.mxu0 0.0
        %5161 = vmatprep.subr.mxu0 0.0
        %5162 = vmatpush1.msra.mxu0 0.0
        %5163 = vmatprep.subr.mxu0 0.0
        %5164 = vmatpush1.msra.mxu0 0.0
        %5165 = vmatprep.subr.mxu0 0.0
        %5166 = vmatpush1.msra.mxu0 0.0
        %5167 = vmatprep.subr.mxu0 0.0
        %5168 = vmatpush1.msra.mxu0 0.0
        %5169 = vmatprep.subr.mxu0 0.0
        %5170 = vmatpush1.msra.mxu0 0.0
        %5171 = vmatprep.subr.mxu0 0.0
        %5172 = vmatpush1.msra.mxu0 0.0
        %5173 = vmatprep.subr.mxu0 0.0
        %5174 = vmatpush1.msra.mxu0 0.0
        %5175 = vmatprep.mubr.f32.mxu0 0.0
        %5176 = vmatmul.mubr.f32.gmra.mrb[0].mxu0 %v5032
        %v5177 = vpop.f32.mrb[0].mxu0
        %v5178 = vadd.f32 %v5107, %v5177
        %v5179 = vpop.f32.mrb[0].mxu0
        %v5180 = vadd.f32 %v5109, %v5179
        %5181 = vdwg.mxu0
        %5182 = vst [vmem:[%s1278] sm:$0xff] %v5178
        %5183 = vst [vmem:[%s1278 + $0x8] sm:$0xff] %v5180
        %p5184 = scmp.lt.s32.totalorder %s90, 1
        %s5185 = scalar_select %p5184, %s90, 1
        %s5186 = smul.addr %s5185, 2
        %s5187 = smul.addr %s5186, 8
        %s5188 = scalar_lea.vmem %s65, %s5187
        %p5189 = scmp.lt.s32.totalorder %s90, 1
        %s5190 = scalar_select %p5189, %s90, 1
        %s5191 = smul.addr %s5190, 2
        %s5192 = smul.addr %s5191, 8
        %s5193 = scalar_lea.vmem %s67, %s5192
        %p5194 = scmp.lt.s32.totalorder %s90, 1
        %s5195 = scalar_select %p5194, %s90, 1
        %s5196 = smul.addr %s5195, 4
        %s5197 = smul.addr %s5196, 8
        %s5198 = scalar_lea.vmem %s69, %s5197
        // Predicated region
        $region213: #{forward.1} parent=147 // pred_check
          %p5199 = pneg %p785
        $region214: #{forward.1} parent=147 // pred_check_branch
          %5201 = sbr.rel (%p5199) target = $region216
        $region215: #{forward.1} parent=147 // pred_region
          _
        $region216: #{forward.1} parent=147 // pred_fallthru
          _
        // Predicated region
        $region217: #{forward.1} parent=147 // pred_check
          %p5202 = pneg %p811
        $region218: #{forward.1} parent=147 // pred_check_branch
          %5204 = sbr.rel (%p5202) target = $region220
        $region219: #{forward.1} parent=147 // pred_region
          _
        $region220: #{forward.1} parent=147 // pred_fallthru
          _
        // Predicated region
        $region221: #{forward.1} parent=147 // pred_check
          %p5205 = pneg %p837
        $region222: #{forward.1} parent=147 // pred_check_branch
          %5207 = sbr.rel (%p5205) target = $region224
        $region223: #{forward.1} parent=147 // pred_region
          _
        $region224: #{forward.1} parent=147 // pred_fallthru
          _
      $region148: #{forward.1} parent=5 // pred_fallthru
        _
      %p5208 = scmp.le.s32.totalorder 2, %s85
      // Predicated region
      $region225: #{forward.1} parent=5 // pred_check
        %p5209 = pneg %p5208
      $region226: #{forward.1} parent=5 // pred_check_branch
        %5211 = sbr.rel (%p5209) target = $region228
      $region227: #{forward.1} parent=5 // pred_region
        %s5212 = ssub.s32 %s85, 2
        // Predicated region
        $region229: #{forward.1} parent=227 // pred_check
          %p5213 = pneg %p791
        $region230: #{forward.1} parent=227 // pred_check_branch
          %5215 = sbr.rel (%p5213) target = $region232
        $region231: #{forward.1} parent=227 // pred_region
          %p5216 = scmp.lt.s32.totalorder %s91, 1
          %s5217 = scalar_select %p5216, %s91, 1
          %s5218 = smul.addr %s5217, 2
          %s5219 = smul.addr %s5218, 8
          %s5220 = scalar_lea.vmem %s65, %s5219
        $region232: #{forward.1} parent=227 // pred_fallthru
          _
        // Predicated region
        $region233: #{forward.1} parent=227 // pred_check
          %p5221 = pneg %p817
        $region234: #{forward.1} parent=227 // pred_check_branch
          %5223 = sbr.rel (%p5221) target = $region236
        $region235: #{forward.1} parent=227 // pred_region
          %p5224 = scmp.lt.s32.totalorder %s91, 1
          %s5225 = scalar_select %p5224, %s91, 1
          %s5226 = smul.addr %s5225, 2
          %s5227 = smul.addr %s5226, 8
          %s5228 = scalar_lea.vmem %s67, %s5227
        $region236: #{forward.1} parent=227 // pred_fallthru
          _
        // Predicated region
        $region237: #{forward.1} parent=227 // pred_check
          %p5229 = pneg %p843
        $region238: #{forward.1} parent=227 // pred_check_branch
          %5231 = sbr.rel (%p5229) target = $region240
        $region239: #{forward.1} parent=227 // pred_region
          %p5232 = scmp.lt.s32.totalorder %s91, 1
          %s5233 = scalar_select %p5232, %s91, 1
          %s5234 = smul.addr %s5233, 4
          %s5235 = smul.addr %s5234, 8
          %s5236 = scalar_lea.vmem %s69, %s5235
        $region240: #{forward.1} parent=227 // pred_fallthru
          _
      $region228: #{forward.1} parent=5 // pred_fallthru
        _
    $region6: #{forward.1} parent=1 // loop_footer
      %s89 = sadd.s32 1, %s85
    $region7: #{forward.1} parent=1 // loop_footer_branch
      %84 = sbr.rel target = $region3
    $region8: #{forward.1} parent=1 // loop_exit
      _
    %5237 = vsyncpa [#allocation3], 1
    %s5238 = scalar_lea.sflag [#allocation3], 1
    %5239 = vsyncpa %s5238, 1
    %5240 = vsyncpa [#allocation5], 1
    %5241 = vsyncpa [#allocation8], 1
    %5242 = vsyncpa [#allocation11], 1
    %5243 = vsyncpa [#allocation14], 1
    %5244 = vsyncpa [#allocation17], 1
    %5245 = vsyncpa [#allocation20], 1
    %5246 = vsyncpa [#allocation23], 1
    %5247 = vsyncpa [#allocation26], 1

</llo_original>
